<compile_context>
chip_gen: v7x
topology: tpu7x:2x2x1
jax: 0.10.0
libtpu: 0.0.40
codegen_flags: <defaults>
</compile_context>

<pallas_src>
import math
import functools

import jax
import jax.numpy as jnp
from jax import lax
from jax.experimental import pallas as pl
from jax.experimental.pallas import tpu as pltpu

_LN_EPS = 1e-5


def _layer_norm(x, g, b):
    # matches LayerNomr.forward: unbiased var (ddof=1), eps added to the std.
    d = x.shape[-1]
    mu = jnp.mean(x, axis=-1, keepdims=True)
    diff = x - mu
    var = jnp.sum(diff * diff, axis=-1, keepdims=True) * (1.0 / (d - 1))
    return g * (diff / (jnp.sqrt(var) + _LN_EPS)) + b


def _transformer_kernel(x_ref, g1_ref, b1_ref, wq_ref, wo_ref, bo_ref,
                        g2_ref, b2_ref, w1_ref, bf1_ref, w2_ref, bf2_ref,
                        o_ref, *, n_head, d_head, n_tok, b_blk):
    # x_ref:  (b_blk, n_tok, d)   f32
    # wq_ref/wo_ref: (d, d)       bf16, pre-transposed (h @ w == h @ W.T)
    # w1_ref: (d, 4d), w2_ref: (4d, d)  bf16, pre-transposed
    # biases / LN params: (1, n) f32 rows
    d = n_head * d_head
    m_rows = b_blk * n_tok
    bf16 = jnp.bfloat16

    x = x_ref[...].reshape(m_rows, d)                 # (M, d) f32, M = b_blk*n_tok

    # ---------------- norm1 ----------------
    h = _layer_norm(x, g1_ref[...], b1_ref[...])

    # ---------------- attention (Q == K == V, module bug reproduced) ----------------
    qkv = jnp.dot(h.astype(bf16), wq_ref[...],
                  preferred_element_type=jnp.float32)  # (M, d) f32

    # causal mask as an additive bias, built once and reused for every (batch, head)
    row = lax.broadcasted_iota(jnp.int32, (n_tok, n_tok), 0)
    col = lax.broadcasted_iota(jnp.int32, (n_tok, n_tok), 1)
    mask_bias = jnp.where(col <= row, 0.0, -1e30).astype(jnp.float32)

    scale = jnp.float32(1.0 / math.sqrt(d_head))

    att_rows = []
    for bb in range(b_blk):                            # static loops: LLO schedules freely
        r0 = bb * n_tok
        att_b = jnp.zeros((n_tok, d), jnp.float32)
        for hh in range(n_head):
            lo = hh * d_head
            q_bf = qkv[r0:r0 + n_tok, lo:lo + d_head].astype(bf16)  # (n_tok, d_head)
            # Q @ K^T without materializing a transpose (contract dim 1 of both):
            s = lax.dot_general(q_bf, q_bf, (((1,), (1,)), ((), ())),
                                preferred_element_type=jnp.float32) * scale
            s = s + mask_bias                          # masked -> ~ -1e30 (finite)
            m = jnp.max(s, axis=-1, keepdims=True)
            p = jnp.exp(s - m)                         # masked entries underflow to 0
            denom = jnp.sum(p, axis=-1, keepdims=True)
            attn = p * pl.reciprocal(denom, approx=True)
            ctx = jnp.dot(attn.astype(bf16), q_bf,
                          preferred_element_type=jnp.float32)        # (n_tok, d_head)
            # fold this head's slice of the output projection here: no (n_tok,32)
            # masked lane stores, no ctx scratch round-trip.
            att_b = att_b + jnp.dot(ctx.astype(bf16),
                                    wo_ref[lo:lo + d_head, :],
                                    preferred_element_type=jnp.float32)
        att_rows.append(att_b)

    att_out = att_rows[0] if b_blk == 1 else jnp.concatenate(att_rows, axis=0)
    x1 = x + att_out + bo_ref[...]                     # dropout == identity (eval)

    # ---------------- norm2 + feed-forward ----------------
    h2 = _layer_norm(x1, g2_ref[...], b2_ref[...])
    u = jnp.dot(h2.astype(bf16), w1_ref[...],
                preferred_element_type=jnp.float32) + bf1_ref[...]
    a = jnp.float32(math.sqrt(2.0 / math.pi))
    gelu = 0.5 * u * (1.0 + jnp.tanh(a * (u + u * u * u)))   # custom GELU (x + x^3)
    ff = jnp.dot(gelu.astype(bf16), w2_ref[...],
                 preferred_element_type=jnp.float32) + bf2_ref[...]

    # single lane-dense store
    o_ref[...] = (x1 + ff).reshape(b_blk, n_tok, d).astype(o_ref.dtype)


def _pick_batch_block(b):
    """Largest divisor of b that keeps >= 2 grid steps (feed both v7x TensorCores)."""
    if b < 2:
        return b
    for cand in range(b // 2, 0, -1):
        if b % cand == 0:
            return cand
    return 1


def prepare_params(params, mxu_dtype=jnp.bfloat16):
    """One-time parameter prep (outside the per-call path): pre-transpose the PyTorch
    (out, in) weights and cast the MXU operands to bf16; biases / LN params stay f32."""
    row = lambda v: jnp.asarray(v, jnp.float32).reshape(1, -1)
    return {
        "ln1_g": row(params["ln1_g"]), "ln1_b": row(params["ln1_b"]),
        "wq_t": jnp.asarray(params["w_q"]).T.astype(mxu_dtype),     # (d_in, d_out)
        "wo_t": jnp.asarray(params["w_out"]).T.astype(mxu_dtype),   # (d_out, d_out)
        "b_out": row(params["b_out"]),
        "ln2_g": row(params["ln2_g"]), "ln2_b": row(params["ln2_b"]),
        "w1_t": jnp.asarray(params["w1"]).T.astype(mxu_dtype),      # (d, 4d)
        "b1": row(params["b1"]),
        "w2_t": jnp.asarray(params["w2"]).T.astype(mxu_dtype),      # (4d, d)
        "b2": row(params["b2"]),
    }


def transformer_block(x, prep, *, n_head, b_blk=None):
    b, n_tok, d = x.shape
    d_ff = prep["w1_t"].shape[1]
    d_head = d // n_head
    if b_blk is None:
        b_blk = _pick_batch_block(b)
    assert b % b_blk == 0, (b, b_blk)
    grid = (b // b_blk,)

    def full(shape):
        # whole-array block, constant index map (weights / biases stay resident)
        # TODO(synk): at real model dims, add pipeline_mode=pl.Buffered(1) here and a
        #             d_ff grid axis so single-buffered bf16 weights fit v7x's 64 MiB VMEM.
        return pl.BlockSpec(shape, lambda i: (0,) * len(shape))

    kernel = functools.partial(_transformer_kernel, n_head=n_head, d_head=d_head,
                               n_tok=n_tok, b_blk=b_blk)

    grid_spec = pltpu.PrefetchScalarGridSpec(
        num_scalar_prefetch=0,
        grid=grid,
        in_specs=[
            pl.BlockSpec((b_blk, n_tok, d), lambda i: (i, 0, 0)),   # x
            full((1, d)), full((1, d)),                             # ln1 g, b
            full((d, d)), full((d, d)), full((1, d)),               # wq_t, wo_t, b_out
            full((1, d)), full((1, d)),                             # ln2 g, b
            full((d, d_ff)), full((1, d_ff)),                       # w1_t, b1
            full((d_ff, d)), full((1, d)),                          # w2_t, b2
        ],
        out_specs=pl.BlockSpec((b_blk, n_tok, d), lambda i: (i, 0, 0)),
    )

    return pl.pallas_call(
        kernel,
        out_shape=jax.ShapeDtypeStruct((b, n_tok, d), x.dtype),
        grid_spec=grid_spec,
        compiler_params=pltpu.CompilerParams(
            dimension_semantics=("parallel",)),
    )(x,
      prep["ln1_g"], prep["ln1_b"],
      prep["wq_t"], prep["wo_t"], prep["b_out"],
      prep["ln2_g"], prep["ln2_b"],
      prep["w1_t"], prep["b1"],
      prep["w2_t"], prep["b2"])


def _reference(x, params, *, n_head, mxu_dtype=jnp.float32):
    # pure-JAX reference mirroring the PyTorch Transformer.forward (eval mode).
    # mxu_dtype=bf16 mirrors the kernel's cast-at-the-matmul-boundary policy exactly.
    b, n_tok, d = x.shape
    d_head = d // n_head
    c = lambda v: v.astype(mxu_dtype)

    def ln(v, g, bb):
        mu = jnp.mean(v, axis=-1, keepdims=True)
        var = jnp.var(v, axis=-1, keepdims=True, ddof=1)
        return g * ((v - mu) / (jnp.sqrt(var) + _LN_EPS)) + bb

    h = ln(x, params["ln1_g"], params["ln1_b"])
    qkv = jnp.einsum("btd,od->bto", c(h), c(params["w_q"]),
                     preferred_element_type=jnp.float32)
    q = qkv.reshape(b, n_tok, n_head, d_head).transpose(0, 2, 1, 3)
    scores = jnp.einsum("bhqd,bhkd->bhqk", c(q), c(q),
                        preferred_element_type=jnp.float32)
    mask = jnp.triu(jnp.ones((n_tok, n_tok), bool), k=1)
    scores = jnp.where(mask[None, None], -jnp.inf, scores)
    attn = jax.nn.softmax(scores / math.sqrt(d_head), axis=-1)
    ctx = jnp.einsum("bhqk,bhkd->bhqd", c(attn), c(q),
                     preferred_element_type=jnp.float32)
    ctx = ctx.transpose(0, 2, 1, 3).reshape(b, n_tok, d)
    att_out = jnp.einsum("bto,po->btp", c(ctx), c(params["w_out"]),
                         preferred_element_type=jnp.float32) + params["b_out"]
    x1 = x + att_out
    h2 = ln(x1, params["ln2_g"], params["ln2_b"])
    u = jnp.einsum("btd,fd->btf", c(h2), c(params["w1"]),
                   preferred_element_type=jnp.float32) + params["b1"]
    a = math.sqrt(2.0 / math.pi)
    gelu = 0.5 * u * (1.0 + jnp.tanh(a * (u + u ** 3)))
    ff = jnp.einsum("btf,df->btd", c(gelu), c(params["w2"]),
                    preferred_element_type=jnp.float32) + params["b2"]
    return x1 + ff


if __name__ == "__main__":
    # small shapes consistent with the module (d divisible by n_head, lane-dense d=128);
    # batch=4 so the kernel blocks 2 batch elements per grid step and keeps 2 grid steps.
    batch, n_tok, d, n_head = 4, 16, 128, 4
    d_ff = 4 * d

    key = jax.random.PRNGKey(0)
    ks = jax.random.split(key, 12)
    x = jax.random.normal(ks[0], (batch, n_tok, d), jnp.float32)
    params = {
        "ln1_g": 1.0 + 0.1 * jax.random.normal(ks[1], (d,), jnp.float32),
        "ln1_b": 0.02 * jax.random.normal(ks[2], (d,), jnp.float32),
        "w_q":   jax.random.normal(ks[3], (d, d), jnp.float32) / math.sqrt(d),
        "w_out": jax.random.normal(ks[4], (d, d), jnp.float32) / math.sqrt(d),
        "b_out": 0.02 * jax.random.normal(ks[5], (d,), jnp.float32),
        "ln2_g": 1.0 + 0.1 * jax.random.normal(ks[6], (d,), jnp.float32),
        "ln2_b": 0.02 * jax.random.normal(ks[7], (d,), jnp.float32),
        "w1":    jax.random.normal(ks[8], (d_ff, d), jnp.float32) / math.sqrt(d),
        "b1":    0.02 * jax.random.normal(ks[9], (d_ff,), jnp.float32),
        "w2":    jax.random.normal(ks[10], (d, d_ff), jnp.float32) / math.sqrt(d_ff),
        "b2":    0.02 * jax.random.normal(ks[11], (d,), jnp.float32),
    }

    prep = prepare_params(params)                 # one-time transpose + bf16 cast
    out = transformer_block(x, prep, n_head=n_head)
    out = jax.block_until_ready(out)
    assert out.shape == (batch, n_tok, d)

    # Structural check: reference with the SAME bf16-at-MXU-boundary policy (tight).
    ref_bf = _reference(x, params, n_head=n_head, mxu_dtype=jnp.bfloat16)
    err_bf = jnp.max(jnp.abs(out - ref_bf))
    assert jnp.allclose(out, ref_bf, atol=2e-2, rtol=2e-2), (
        f"mismatch vs bf16-boundary reference (max abs err {err_bf})")

    # Semantics sanity check vs the full-f32 PyTorch-equivalent reference (bf16 drift bound).
    ref_f32 = _reference(x, params, n_head=n_head, mxu_dtype=jnp.float32)
    err_f32 = jnp.max(jnp.abs(out - ref_f32))
    assert err_f32 < 0.25, f"excessive drift vs f32 reference (max abs err {err_f32})"

    print("KERNEL_OK")
</pallas_src>

<mosaic_0001>
module attributes {stable_mosaic.version = 11 : i64} {
  func.func @_transformer_kernel(%arg0: i32, %arg1: memref<2x16x128xf32, #tpu.memory_space<vmem>>, %arg2: memref<1x128xf32, #tpu.memory_space<vmem>>, %arg3: memref<1x128xf32, #tpu.memory_space<vmem>>, %arg4: memref<128x128xbf16, #tpu.memory_space<vmem>>, %arg5: memref<128x128xbf16, #tpu.memory_space<vmem>>, %arg6: memref<1x128xf32, #tpu.memory_space<vmem>>, %arg7: memref<1x128xf32, #tpu.memory_space<vmem>>, %arg8: memref<1x128xf32, #tpu.memory_space<vmem>>, %arg9: memref<128x512xbf16, #tpu.memory_space<vmem>>, %arg10: memref<1x512xf32, #tpu.memory_space<vmem>>, %arg11: memref<512x128xbf16, #tpu.memory_space<vmem>>, %arg12: memref<1x128xf32, #tpu.memory_space<vmem>>, %arg13: memref<2x16x128xf32, #tpu.memory_space<vmem>>) attributes {dimension_semantics = [#tpu.dimension_semantics<parallel>], iteration_bounds = array<i64: 2>, scalar_prefetch = 0 : i64, scratch_operands = 0 : i64, tpu.core_type = #tpu.core_type<tc>, window_params = [{transform_indices = @transform_0, window_bounds = array<i64: 2, 16, 128>}, {pipeline_mode = #tpu.pipeline_mode<synchronous>, transform_indices = @transform_1, window_bounds = array<i64: 1, 128>}, {pipeline_mode = #tpu.pipeline_mode<synchronous>, transform_indices = @transform_2, window_bounds = array<i64: 1, 128>}, {pipeline_mode = #tpu.pipeline_mode<synchronous>, transform_indices = @transform_3, window_bounds = array<i64: 128, 128>}, {pipeline_mode = #tpu.pipeline_mode<synchronous>, transform_indices = @transform_4, window_bounds = array<i64: 128, 128>}, {pipeline_mode = #tpu.pipeline_mode<synchronous>, transform_indices = @transform_5, window_bounds = array<i64: 1, 128>}, {pipeline_mode = #tpu.pipeline_mode<synchronous>, transform_indices = @transform_6, window_bounds = array<i64: 1, 128>}, {pipeline_mode = #tpu.pipeline_mode<synchronous>, transform_indices = @transform_7, window_bounds = array<i64: 1, 128>}, {pipeline_mode = #tpu.pipeline_mode<synchronous>, transform_indices = @transform_8, window_bounds = array<i64: 128, 512>}, {pipeline_mode = #tpu.pipeline_mode<synchronous>, transform_indices = @transform_9, window_bounds = array<i64: 1, 512>}, {pipeline_mode = #tpu.pipeline_mode<synchronous>, transform_indices = @transform_10, window_bounds = array<i64: 512, 128>}, {pipeline_mode = #tpu.pipeline_mode<synchronous>, transform_indices = @transform_11, window_bounds = array<i64: 1, 128>}, {transform_indices = @transform_12, window_bounds = array<i64: 2, 16, 128>}]} {
    %c0 = arith.constant 0 : index
    %c0_0 = arith.constant 0 : index
    %c0_1 = arith.constant 0 : index
    %0 = vector.load %arg1[%c0, %c0_0, %c0_1] : memref<2x16x128xf32, #tpu.memory_space<vmem>>, vector<2x16x128xf32>
    %1 = vector.shape_cast %0 : vector<2x16x128xf32> to vector<32x128xf32>
    %c0_2 = arith.constant 0 : index
    %c0_3 = arith.constant 0 : index
    %2 = vector.load %arg2[%c0_2, %c0_3] : memref<1x128xf32, #tpu.memory_space<vmem>>, vector<1x128xf32>
    %c0_4 = arith.constant 0 : index
    %c0_5 = arith.constant 0 : index
    %3 = vector.load %arg3[%c0_4, %c0_5] : memref<1x128xf32, #tpu.memory_space<vmem>>, vector<1x128xf32>
    %cst = arith.constant dense<0.000000e+00> : vector<32xf32>
    %4 = vector.multi_reduction <add>, %1, %cst [1] : vector<32x128xf32> to vector<32xf32>
    %5 = vector.shape_cast %4 : vector<32xf32> to vector<32x1xf32>
    %cst_6 = arith.constant 1.280000e+02 : f32
    %6 = vector.broadcast %cst_6 : f32 to vector<32x1xf32>
    %7 = arith.divf %5, %6 : vector<32x1xf32>
    %8 = vector.broadcast %7 : vector<32x1xf32> to vector<32x128xf32>
    %9 = arith.subf %1, %8 : vector<32x128xf32>
    %10 = arith.mulf %9, %9 : vector<32x128xf32>
    %cst_7 = arith.constant dense<0.000000e+00> : vector<32xf32>
    %11 = vector.multi_reduction <add>, %10, %cst_7 [1] : vector<32x128xf32> to vector<32xf32>
    %12 = vector.shape_cast %11 : vector<32xf32> to vector<32x1xf32>
    %cst_8 = arith.constant 0.00787401571 : f32
    %13 = vector.broadcast %cst_8 : f32 to vector<32x1xf32>
    %14 = arith.mulf %12, %13 : vector<32x1xf32>
    %15 = math.sqrt %14 : vector<32x1xf32>
    %cst_9 = arith.constant 9.99999974E-6 : f32
    %16 = vector.broadcast %cst_9 : f32 to vector<32x1xf32>
    %17 = arith.addf %15, %16 : vector<32x1xf32>
    %18 = vector.broadcast %17 : vector<32x1xf32> to vector<32x128xf32>
    %19 = arith.divf %9, %18 : vector<32x128xf32>
    %20 = vector.broadcast %2 : vector<1x128xf32> to vector<32x128xf32>
    %21 = arith.mulf %20, %19 : vector<32x128xf32>
    %22 = vector.broadcast %3 : vector<1x128xf32> to vector<32x128xf32>
    %23 = arith.addf %21, %22 : vector<32x128xf32>
    %24 = arith.truncf %23 : vector<32x128xf32> to vector<32x128xbf16>
    %c0_10 = arith.constant 0 : index
    %c0_11 = arith.constant 0 : index
    %25 = vector.load %arg4[%c0_10, %c0_11] : memref<128x128xbf16, #tpu.memory_space<vmem>>, vector<128x128xbf16>
    %cst_12 = arith.constant dense<0.000000e+00> : vector<32x128xf32>
    %26 = tpu.matmul %24, %25, %cst_12 {dimension_numbers = #tpu.dot_dimension_numbers<[1], [0], [0], [1], [0, 0, 1, 1], [], []>} : vector<32x128xbf16>, vector<128x128xbf16>, vector<32x128xf32> -> vector<32x128xf32>
    %27 = tpu.iota {dimensions = array<i32: 0>} : vector<16x16xi32>
    %28 = tpu.iota {dimensions = array<i32: 1>} : vector<16x16xi32>
    %29 = arith.cmpi sle, %28, %27 : vector<16x16xi32>
    %cst_13 = arith.constant 0.000000e+00 : f32
    %cst_14 = arith.constant -1.000000e+30 : f32
    %30 = vector.broadcast %cst_13 : f32 to vector<16x16xf32>
    %31 = vector.broadcast %cst_14 : f32 to vector<16x16xf32>
    %32 = arith.select %29, %30, %31 : vector<16x16xi1>, vector<16x16xf32>
    %cst_15 = arith.constant 0.000000e+00 : f32
    %33 = vector.broadcast %cst_15 : f32 to vector<16x128xf32>
    %34 = vector.extract_strided_slice %26 {offsets = [0, 0], sizes = [16, 32], strides = [1, 1]} : vector<32x128xf32> to vector<16x32xf32>
    %35 = arith.truncf %34 : vector<16x32xf32> to vector<16x32xbf16>
    %cst_16 = arith.constant dense<0.000000e+00> : vector<16x16xf32>
    %36 = tpu.matmul %35, %35, %cst_16 {dimension_numbers = #tpu.dot_dimension_numbers<[1], [1], [0], [0], [0, 0, 1, 0], [], []>} : vector<16x32xbf16>, vector<16x32xbf16>, vector<16x16xf32> -> vector<16x16xf32>
    %cst_17 = arith.constant 0.176776692 : f32
    %37 = vector.broadcast %cst_17 : f32 to vector<16x16xf32>
    %38 = arith.mulf %36, %37 : vector<16x16xf32>
    %39 = arith.addf %38, %32 : vector<16x16xf32>
    %cst_18 = arith.constant dense<0xFF800000> : vector<16xf32>
    %40 = vector.multi_reduction <maximumf>, %39, %cst_18 [1] : vector<16x16xf32> to vector<16xf32>
    %41 = vector.shape_cast %40 : vector<16xf32> to vector<16x1xf32>
    %42 = vector.broadcast %41 : vector<16x1xf32> to vector<16x16xf32>
    %43 = arith.subf %39, %42 : vector<16x16xf32>
    %44 = math.exp %43 : vector<16x16xf32>
    %cst_19 = arith.constant dense<0.000000e+00> : vector<16xf32>
    %45 = vector.multi_reduction <add>, %44, %cst_19 [1] : vector<16x16xf32> to vector<16xf32>
    %46 = vector.shape_cast %45 : vector<16xf32> to vector<16x1xf32>
    %47 = tpu.reciprocal %46 {approx = true} : vector<16x1xf32> -> vector<16x1xf32>
    %48 = vector.broadcast %47 : vector<16x1xf32> to vector<16x16xf32>
    %49 = arith.mulf %44, %48 : vector<16x16xf32>
    %50 = arith.truncf %49 : vector<16x16xf32> to vector<16x16xbf16>
    %cst_20 = arith.constant dense<0.000000e+00> : vector<16x32xf32>
    %51 = tpu.matmul %50, %35, %cst_20 {dimension_numbers = #tpu.dot_dimension_numbers<[1], [0], [0], [1], [0, 0, 1, 1], [], []>} : vector<16x16xbf16>, vector<16x32xbf16>, vector<16x32xf32> -> vector<16x32xf32>
    %52 = arith.truncf %51 : vector<16x32xf32> to vector<16x32xbf16>
    %c0_21 = arith.constant 0 : index
    %c0_22 = arith.constant 0 : index
    %53 = vector.load %arg5[%c0_21, %c0_22] : memref<128x128xbf16, #tpu.memory_space<vmem>>, vector<32x128xbf16>
    %cst_23 = arith.constant dense<0.000000e+00> : vector<16x128xf32>
    %54 = tpu.matmul %52, %53, %cst_23 {dimension_numbers = #tpu.dot_dimension_numbers<[1], [0], [0], [1], [0, 0, 1, 1], [], []>} : vector<16x32xbf16>, vector<32x128xbf16>, vector<16x128xf32> -> vector<16x128xf32>
    %55 = arith.addf %33, %54 : vector<16x128xf32>
    %56 = vector.extract_strided_slice %26 {offsets = [0, 32], sizes = [16, 32], strides = [1, 1]} : vector<32x128xf32> to vector<16x32xf32>
    %57 = arith.truncf %56 : vector<16x32xf32> to vector<16x32xbf16>
    %cst_24 = arith.constant dense<0.000000e+00> : vector<16x16xf32>
    %58 = tpu.matmul %57, %57, %cst_24 {dimension_numbers = #tpu.dot_dimension_numbers<[1], [1], [0], [0], [0, 0, 1, 0], [], []>} : vector<16x32xbf16>, vector<16x32xbf16>, vector<16x16xf32> -> vector<16x16xf32>
    %cst_25 = arith.constant 0.176776692 : f32
    %59 = vector.broadcast %cst_25 : f32 to vector<16x16xf32>
    %60 = arith.mulf %58, %59 : vector<16x16xf32>
    %61 = arith.addf %60, %32 : vector<16x16xf32>
    %cst_26 = arith.constant dense<0xFF800000> : vector<16xf32>
    %62 = vector.multi_reduction <maximumf>, %61, %cst_26 [1] : vector<16x16xf32> to vector<16xf32>
    %63 = vector.shape_cast %62 : vector<16xf32> to vector<16x1xf32>
    %64 = vector.broadcast %63 : vector<16x1xf32> to vector<16x16xf32>
    %65 = arith.subf %61, %64 : vector<16x16xf32>
    %66 = math.exp %65 : vector<16x16xf32>
    %cst_27 = arith.constant dense<0.000000e+00> : vector<16xf32>
    %67 = vector.multi_reduction <add>, %66, %cst_27 [1] : vector<16x16xf32> to vector<16xf32>
    %68 = vector.shape_cast %67 : vector<16xf32> to vector<16x1xf32>
    %69 = tpu.reciprocal %68 {approx = true} : vector<16x1xf32> -> vector<16x1xf32>
    %70 = vector.broadcast %69 : vector<16x1xf32> to vector<16x16xf32>
    %71 = arith.mulf %66, %70 : vector<16x16xf32>
    %72 = arith.truncf %71 : vector<16x16xf32> to vector<16x16xbf16>
    %cst_28 = arith.constant dense<0.000000e+00> : vector<16x32xf32>
    %73 = tpu.matmul %72, %57, %cst_28 {dimension_numbers = #tpu.dot_dimension_numbers<[1], [0], [0], [1], [0, 0, 1, 1], [], []>} : vector<16x16xbf16>, vector<16x32xbf16>, vector<16x32xf32> -> vector<16x32xf32>
    %74 = arith.truncf %73 : vector<16x32xf32> to vector<16x32xbf16>
    %c32 = arith.constant 32 : index
    %c0_29 = arith.constant 0 : index
    %75 = vector.load %arg5[%c32, %c0_29] : memref<128x128xbf16, #tpu.memory_space<vmem>>, vector<32x128xbf16>
    %cst_30 = arith.constant dense<0.000000e+00> : vector<16x128xf32>
    %76 = tpu.matmul %74, %75, %cst_30 {dimension_numbers = #tpu.dot_dimension_numbers<[1], [0], [0], [1], [0, 0, 1, 1], [], []>} : vector<16x32xbf16>, vector<32x128xbf16>, vector<16x128xf32> -> vector<16x128xf32>
    %77 = arith.addf %55, %76 : vector<16x128xf32>
    %78 = vector.extract_strided_slice %26 {offsets = [0, 64], sizes = [16, 32], strides = [1, 1]} : vector<32x128xf32> to vector<16x32xf32>
    %79 = arith.truncf %78 : vector<16x32xf32> to vector<16x32xbf16>
    %cst_31 = arith.constant dense<0.000000e+00> : vector<16x16xf32>
    %80 = tpu.matmul %79, %79, %cst_31 {dimension_numbers = #tpu.dot_dimension_numbers<[1], [1], [0], [0], [0, 0, 1, 0], [], []>} : vector<16x32xbf16>, vector<16x32xbf16>, vector<16x16xf32> -> vector<16x16xf32>
    %cst_32 = arith.constant 0.176776692 : f32
    %81 = vector.broadcast %cst_32 : f32 to vector<16x16xf32>
    %82 = arith.mulf %80, %81 : vector<16x16xf32>
    %83 = arith.addf %82, %32 : vector<16x16xf32>
    %cst_33 = arith.constant dense<0xFF800000> : vector<16xf32>
    %84 = vector.multi_reduction <maximumf>, %83, %cst_33 [1] : vector<16x16xf32> to vector<16xf32>
    %85 = vector.shape_cast %84 : vector<16xf32> to vector<16x1xf32>
    %86 = vector.broadcast %85 : vector<16x1xf32> to vector<16x16xf32>
    %87 = arith.subf %83, %86 : vector<16x16xf32>
    %88 = math.exp %87 : vector<16x16xf32>
    %cst_34 = arith.constant dense<0.000000e+00> : vector<16xf32>
    %89 = vector.multi_reduction <add>, %88, %cst_34 [1] : vector<16x16xf32> to vector<16xf32>
    %90 = vector.shape_cast %89 : vector<16xf32> to vector<16x1xf32>
    %91 = tpu.reciprocal %90 {approx = true} : vector<16x1xf32> -> vector<16x1xf32>
    %92 = vector.broadcast %91 : vector<16x1xf32> to vector<16x16xf32>
    %93 = arith.mulf %88, %92 : vector<16x16xf32>
    %94 = arith.truncf %93 : vector<16x16xf32> to vector<16x16xbf16>
    %cst_35 = arith.constant dense<0.000000e+00> : vector<16x32xf32>
    %95 = tpu.matmul %94, %79, %cst_35 {dimension_numbers = #tpu.dot_dimension_numbers<[1], [0], [0], [1], [0, 0, 1, 1], [], []>} : vector<16x16xbf16>, vector<16x32xbf16>, vector<16x32xf32> -> vector<16x32xf32>
    %96 = arith.truncf %95 : vector<16x32xf32> to vector<16x32xbf16>
    %c64 = arith.constant 64 : index
    %c0_36 = arith.constant 0 : index
    %97 = vector.load %arg5[%c64, %c0_36] : memref<128x128xbf16, #tpu.memory_space<vmem>>, vector<32x128xbf16>
    %cst_37 = arith.constant dense<0.000000e+00> : vector<16x128xf32>
    %98 = tpu.matmul %96, %97, %cst_37 {dimension_numbers = #tpu.dot_dimension_numbers<[1], [0], [0], [1], [0, 0, 1, 1], [], []>} : vector<16x32xbf16>, vector<32x128xbf16>, vector<16x128xf32> -> vector<16x128xf32>
    %99 = arith.addf %77, %98 : vector<16x128xf32>
    %100 = vector.extract_strided_slice %26 {offsets = [0, 96], sizes = [16, 32], strides = [1, 1]} : vector<32x128xf32> to vector<16x32xf32>
    %101 = arith.truncf %100 : vector<16x32xf32> to vector<16x32xbf16>
    %cst_38 = arith.constant dense<0.000000e+00> : vector<16x16xf32>
    %102 = tpu.matmul %101, %101, %cst_38 {dimension_numbers = #tpu.dot_dimension_numbers<[1], [1], [0], [0], [0, 0, 1, 0], [], []>} : vector<16x32xbf16>, vector<16x32xbf16>, vector<16x16xf32> -> vector<16x16xf32>
    %cst_39 = arith.constant 0.176776692 : f32
    %103 = vector.broadcast %cst_39 : f32 to vector<16x16xf32>
    %104 = arith.mulf %102, %103 : vector<16x16xf32>
    %105 = arith.addf %104, %32 : vector<16x16xf32>
    %cst_40 = arith.constant dense<0xFF800000> : vector<16xf32>
    %106 = vector.multi_reduction <maximumf>, %105, %cst_40 [1] : vector<16x16xf32> to vector<16xf32>
    %107 = vector.shape_cast %106 : vector<16xf32> to vector<16x1xf32>
    %108 = vector.broadcast %107 : vector<16x1xf32> to vector<16x16xf32>
    %109 = arith.subf %105, %108 : vector<16x16xf32>
    %110 = math.exp %109 : vector<16x16xf32>
    %cst_41 = arith.constant dense<0.000000e+00> : vector<16xf32>
    %111 = vector.multi_reduction <add>, %110, %cst_41 [1] : vector<16x16xf32> to vector<16xf32>
    %112 = vector.shape_cast %111 : vector<16xf32> to vector<16x1xf32>
    %113 = tpu.reciprocal %112 {approx = true} : vector<16x1xf32> -> vector<16x1xf32>
    %114 = vector.broadcast %113 : vector<16x1xf32> to vector<16x16xf32>
    %115 = arith.mulf %110, %114 : vector<16x16xf32>
    %116 = arith.truncf %115 : vector<16x16xf32> to vector<16x16xbf16>
    %cst_42 = arith.constant dense<0.000000e+00> : vector<16x32xf32>
    %117 = tpu.matmul %116, %101, %cst_42 {dimension_numbers = #tpu.dot_dimension_numbers<[1], [0], [0], [1], [0, 0, 1, 1], [], []>} : vector<16x16xbf16>, vector<16x32xbf16>, vector<16x32xf32> -> vector<16x32xf32>
    %118 = arith.truncf %117 : vector<16x32xf32> to vector<16x32xbf16>
    %c96 = arith.constant 96 : index
    %c0_43 = arith.constant 0 : index
    %119 = vector.load %arg5[%c96, %c0_43] : memref<128x128xbf16, #tpu.memory_space<vmem>>, vector<32x128xbf16>
    %cst_44 = arith.constant dense<0.000000e+00> : vector<16x128xf32>
    %120 = tpu.matmul %118, %119, %cst_44 {dimension_numbers = #tpu.dot_dimension_numbers<[1], [0], [0], [1], [0, 0, 1, 1], [], []>} : vector<16x32xbf16>, vector<32x128xbf16>, vector<16x128xf32> -> vector<16x128xf32>
    %121 = arith.addf %99, %120 : vector<16x128xf32>
    %cst_45 = arith.constant 0.000000e+00 : f32
    %122 = vector.broadcast %cst_45 : f32 to vector<16x128xf32>
    %123 = vector.extract_strided_slice %26 {offsets = [16, 0], sizes = [16, 32], strides = [1, 1]} : vector<32x128xf32> to vector<16x32xf32>
    %124 = arith.truncf %123 : vector<16x32xf32> to vector<16x32xbf16>
    %cst_46 = arith.constant dense<0.000000e+00> : vector<16x16xf32>
    %125 = tpu.matmul %124, %124, %cst_46 {dimension_numbers = #tpu.dot_dimension_numbers<[1], [1], [0], [0], [0, 0, 1, 0], [], []>} : vector<16x32xbf16>, vector<16x32xbf16>, vector<16x16xf32> -> vector<16x16xf32>
    %cst_47 = arith.constant 0.176776692 : f32
    %126 = vector.broadcast %cst_47 : f32 to vector<16x16xf32>
    %127 = arith.mulf %125, %126 : vector<16x16xf32>
    %128 = arith.addf %127, %32 : vector<16x16xf32>
    %cst_48 = arith.constant dense<0xFF800000> : vector<16xf32>
    %129 = vector.multi_reduction <maximumf>, %128, %cst_48 [1] : vector<16x16xf32> to vector<16xf32>
    %130 = vector.shape_cast %129 : vector<16xf32> to vector<16x1xf32>
    %131 = vector.broadcast %130 : vector<16x1xf32> to vector<16x16xf32>
    %132 = arith.subf %128, %131 : vector<16x16xf32>
    %133 = math.exp %132 : vector<16x16xf32>
    %cst_49 = arith.constant dense<0.000000e+00> : vector<16xf32>
    %134 = vector.multi_reduction <add>, %133, %cst_49 [1] : vector<16x16xf32> to vector<16xf32>
    %135 = vector.shape_cast %134 : vector<16xf32> to vector<16x1xf32>
    %136 = tpu.reciprocal %135 {approx = true} : vector<16x1xf32> -> vector<16x1xf32>
    %137 = vector.broadcast %136 : vector<16x1xf32> to vector<16x16xf32>
    %138 = arith.mulf %133, %137 : vector<16x16xf32>
    %139 = arith.truncf %138 : vector<16x16xf32> to vector<16x16xbf16>
    %cst_50 = arith.constant dense<0.000000e+00> : vector<16x32xf32>
    %140 = tpu.matmul %139, %124, %cst_50 {dimension_numbers = #tpu.dot_dimension_numbers<[1], [0], [0], [1], [0, 0, 1, 1], [], []>} : vector<16x16xbf16>, vector<16x32xbf16>, vector<16x32xf32> -> vector<16x32xf32>
    %141 = arith.truncf %140 : vector<16x32xf32> to vector<16x32xbf16>
    %c0_51 = arith.constant 0 : index
    %c0_52 = arith.constant 0 : index
    %142 = vector.load %arg5[%c0_51, %c0_52] : memref<128x128xbf16, #tpu.memory_space<vmem>>, vector<32x128xbf16>
    %cst_53 = arith.constant dense<0.000000e+00> : vector<16x128xf32>
    %143 = tpu.matmul %141, %142, %cst_53 {dimension_numbers = #tpu.dot_dimension_numbers<[1], [0], [0], [1], [0, 0, 1, 1], [], []>} : vector<16x32xbf16>, vector<32x128xbf16>, vector<16x128xf32> -> vector<16x128xf32>
    %144 = arith.addf %122, %143 : vector<16x128xf32>
    %145 = vector.extract_strided_slice %26 {offsets = [16, 32], sizes = [16, 32], strides = [1, 1]} : vector<32x128xf32> to vector<16x32xf32>
    %146 = arith.truncf %145 : vector<16x32xf32> to vector<16x32xbf16>
    %cst_54 = arith.constant dense<0.000000e+00> : vector<16x16xf32>
    %147 = tpu.matmul %146, %146, %cst_54 {dimension_numbers = #tpu.dot_dimension_numbers<[1], [1], [0], [0], [0, 0, 1, 0], [], []>} : vector<16x32xbf16>, vector<16x32xbf16>, vector<16x16xf32> -> vector<16x16xf32>
    %cst_55 = arith.constant 0.176776692 : f32
    %148 = vector.broadcast %cst_55 : f32 to vector<16x16xf32>
    %149 = arith.mulf %147, %148 : vector<16x16xf32>
    %150 = arith.addf %149, %32 : vector<16x16xf32>
    %cst_56 = arith.constant dense<0xFF800000> : vector<16xf32>
    %151 = vector.multi_reduction <maximumf>, %150, %cst_56 [1] : vector<16x16xf32> to vector<16xf32>
    %152 = vector.shape_cast %151 : vector<16xf32> to vector<16x1xf32>
    %153 = vector.broadcast %152 : vector<16x1xf32> to vector<16x16xf32>
    %154 = arith.subf %150, %153 : vector<16x16xf32>
    %155 = math.exp %154 : vector<16x16xf32>
    %cst_57 = arith.constant dense<0.000000e+00> : vector<16xf32>
    %156 = vector.multi_reduction <add>, %155, %cst_57 [1] : vector<16x16xf32> to vector<16xf32>
    %157 = vector.shape_cast %156 : vector<16xf32> to vector<16x1xf32>
    %158 = tpu.reciprocal %157 {approx = true} : vector<16x1xf32> -> vector<16x1xf32>
    %159 = vector.broadcast %158 : vector<16x1xf32> to vector<16x16xf32>
    %160 = arith.mulf %155, %159 : vector<16x16xf32>
    %161 = arith.truncf %160 : vector<16x16xf32> to vector<16x16xbf16>
    %cst_58 = arith.constant dense<0.000000e+00> : vector<16x32xf32>
    %162 = tpu.matmul %161, %146, %cst_58 {dimension_numbers = #tpu.dot_dimension_numbers<[1], [0], [0], [1], [0, 0, 1, 1], [], []>} : vector<16x16xbf16>, vector<16x32xbf16>, vector<16x32xf32> -> vector<16x32xf32>
    %163 = arith.truncf %162 : vector<16x32xf32> to vector<16x32xbf16>
    %c32_59 = arith.constant 32 : index
    %c0_60 = arith.constant 0 : index
    %164 = vector.load %arg5[%c32_59, %c0_60] : memref<128x128xbf16, #tpu.memory_space<vmem>>, vector<32x128xbf16>
    %cst_61 = arith.constant dense<0.000000e+00> : vector<16x128xf32>
    %165 = tpu.matmul %163, %164, %cst_61 {dimension_numbers = #tpu.dot_dimension_numbers<[1], [0], [0], [1], [0, 0, 1, 1], [], []>} : vector<16x32xbf16>, vector<32x128xbf16>, vector<16x128xf32> -> vector<16x128xf32>
    %166 = arith.addf %144, %165 : vector<16x128xf32>
    %167 = vector.extract_strided_slice %26 {offsets = [16, 64], sizes = [16, 32], strides = [1, 1]} : vector<32x128xf32> to vector<16x32xf32>
    %168 = arith.truncf %167 : vector<16x32xf32> to vector<16x32xbf16>
    %cst_62 = arith.constant dense<0.000000e+00> : vector<16x16xf32>
    %169 = tpu.matmul %168, %168, %cst_62 {dimension_numbers = #tpu.dot_dimension_numbers<[1], [1], [0], [0], [0, 0, 1, 0], [], []>} : vector<16x32xbf16>, vector<16x32xbf16>, vector<16x16xf32> -> vector<16x16xf32>
    %cst_63 = arith.constant 0.176776692 : f32
    %170 = vector.broadcast %cst_63 : f32 to vector<16x16xf32>
    %171 = arith.mulf %169, %170 : vector<16x16xf32>
    %172 = arith.addf %171, %32 : vector<16x16xf32>
    %cst_64 = arith.constant dense<0xFF800000> : vector<16xf32>
    %173 = vector.multi_reduction <maximumf>, %172, %cst_64 [1] : vector<16x16xf32> to vector<16xf32>
    %174 = vector.shape_cast %173 : vector<16xf32> to vector<16x1xf32>
    %175 = vector.broadcast %174 : vector<16x1xf32> to vector<16x16xf32>
    %176 = arith.subf %172, %175 : vector<16x16xf32>
    %177 = math.exp %176 : vector<16x16xf32>
    %cst_65 = arith.constant dense<0.000000e+00> : vector<16xf32>
    %178 = vector.multi_reduction <add>, %177, %cst_65 [1] : vector<16x16xf32> to vector<16xf32>
    %179 = vector.shape_cast %178 : vector<16xf32> to vector<16x1xf32>
    %180 = tpu.reciprocal %179 {approx = true} : vector<16x1xf32> -> vector<16x1xf32>
    %181 = vector.broadcast %180 : vector<16x1xf32> to vector<16x16xf32>
    %182 = arith.mulf %177, %181 : vector<16x16xf32>
    %183 = arith.truncf %182 : vector<16x16xf32> to vector<16x16xbf16>
    %cst_66 = arith.constant dense<0.000000e+00> : vector<16x32xf32>
    %184 = tpu.matmul %183, %168, %cst_66 {dimension_numbers = #tpu.dot_dimension_numbers<[1], [0], [0], [1], [0, 0, 1, 1], [], []>} : vector<16x16xbf16>, vector<16x32xbf16>, vector<16x32xf32> -> vector<16x32xf32>
    %185 = arith.truncf %184 : vector<16x32xf32> to vector<16x32xbf16>
    %c64_67 = arith.constant 64 : index
    %c0_68 = arith.constant 0 : index
    %186 = vector.load %arg5[%c64_67, %c0_68] : memref<128x128xbf16, #tpu.memory_space<vmem>>, vector<32x128xbf16>
    %cst_69 = arith.constant dense<0.000000e+00> : vector<16x128xf32>
    %187 = tpu.matmul %185, %186, %cst_69 {dimension_numbers = #tpu.dot_dimension_numbers<[1], [0], [0], [1], [0, 0, 1, 1], [], []>} : vector<16x32xbf16>, vector<32x128xbf16>, vector<16x128xf32> -> vector<16x128xf32>
    %188 = arith.addf %166, %187 : vector<16x128xf32>
    %189 = vector.extract_strided_slice %26 {offsets = [16, 96], sizes = [16, 32], strides = [1, 1]} : vector<32x128xf32> to vector<16x32xf32>
    %190 = arith.truncf %189 : vector<16x32xf32> to vector<16x32xbf16>
    %cst_70 = arith.constant dense<0.000000e+00> : vector<16x16xf32>
    %191 = tpu.matmul %190, %190, %cst_70 {dimension_numbers = #tpu.dot_dimension_numbers<[1], [1], [0], [0], [0, 0, 1, 0], [], []>} : vector<16x32xbf16>, vector<16x32xbf16>, vector<16x16xf32> -> vector<16x16xf32>
    %cst_71 = arith.constant 0.176776692 : f32
    %192 = vector.broadcast %cst_71 : f32 to vector<16x16xf32>
    %193 = arith.mulf %191, %192 : vector<16x16xf32>
    %194 = arith.addf %193, %32 : vector<16x16xf32>
    %cst_72 = arith.constant dense<0xFF800000> : vector<16xf32>
    %195 = vector.multi_reduction <maximumf>, %194, %cst_72 [1] : vector<16x16xf32> to vector<16xf32>
    %196 = vector.shape_cast %195 : vector<16xf32> to vector<16x1xf32>
    %197 = vector.broadcast %196 : vector<16x1xf32> to vector<16x16xf32>
    %198 = arith.subf %194, %197 : vector<16x16xf32>
    %199 = math.exp %198 : vector<16x16xf32>
    %cst_73 = arith.constant dense<0.000000e+00> : vector<16xf32>
    %200 = vector.multi_reduction <add>, %199, %cst_73 [1] : vector<16x16xf32> to vector<16xf32>
    %201 = vector.shape_cast %200 : vector<16xf32> to vector<16x1xf32>
    %202 = tpu.reciprocal %201 {approx = true} : vector<16x1xf32> -> vector<16x1xf32>
    %203 = vector.broadcast %202 : vector<16x1xf32> to vector<16x16xf32>
    %204 = arith.mulf %199, %203 : vector<16x16xf32>
    %205 = arith.truncf %204 : vector<16x16xf32> to vector<16x16xbf16>
    %cst_74 = arith.constant dense<0.000000e+00> : vector<16x32xf32>
    %206 = tpu.matmul %205, %190, %cst_74 {dimension_numbers = #tpu.dot_dimension_numbers<[1], [0], [0], [1], [0, 0, 1, 1], [], []>} : vector<16x16xbf16>, vector<16x32xbf16>, vector<16x32xf32> -> vector<16x32xf32>
    %207 = arith.truncf %206 : vector<16x32xf32> to vector<16x32xbf16>
    %c96_75 = arith.constant 96 : index
    %c0_76 = arith.constant 0 : index
    %208 = vector.load %arg5[%c96_75, %c0_76] : memref<128x128xbf16, #tpu.memory_space<vmem>>, vector<32x128xbf16>
    %cst_77 = arith.constant dense<0.000000e+00> : vector<16x128xf32>
    %209 = tpu.matmul %207, %208, %cst_77 {dimension_numbers = #tpu.dot_dimension_numbers<[1], [0], [0], [1], [0, 0, 1, 1], [], []>} : vector<16x32xbf16>, vector<32x128xbf16>, vector<16x128xf32> -> vector<16x128xf32>
    %210 = arith.addf %188, %209 : vector<16x128xf32>
    %211 = tpu.concatenate %121, %210 in 0 : vector<16x128xf32>, vector<16x128xf32> -> vector<32x128xf32>
    %212 = arith.addf %1, %211 : vector<32x128xf32>
    %c0_78 = arith.constant 0 : index
    %c0_79 = arith.constant 0 : index
    %213 = vector.load %arg6[%c0_78, %c0_79] : memref<1x128xf32, #tpu.memory_space<vmem>>, vector<1x128xf32>
    %214 = vector.broadcast %213 : vector<1x128xf32> to vector<32x128xf32>
    %215 = arith.addf %212, %214 : vector<32x128xf32>
    %c0_80 = arith.constant 0 : index
    %c0_81 = arith.constant 0 : index
    %216 = vector.load %arg7[%c0_80, %c0_81] : memref<1x128xf32, #tpu.memory_space<vmem>>, vector<1x128xf32>
    %c0_82 = arith.constant 0 : index
    %c0_83 = arith.constant 0 : index
    %217 = vector.load %arg8[%c0_82, %c0_83] : memref<1x128xf32, #tpu.memory_space<vmem>>, vector<1x128xf32>
    %cst_84 = arith.constant dense<0.000000e+00> : vector<32xf32>
    %218 = vector.multi_reduction <add>, %215, %cst_84 [1] : vector<32x128xf32> to vector<32xf32>
    %219 = vector.shape_cast %218 : vector<32xf32> to vector<32x1xf32>
    %cst_85 = arith.constant 1.280000e+02 : f32
    %220 = vector.broadcast %cst_85 : f32 to vector<32x1xf32>
    %221 = arith.divf %219, %220 : vector<32x1xf32>
    %222 = vector.broadcast %221 : vector<32x1xf32> to vector<32x128xf32>
    %223 = arith.subf %215, %222 : vector<32x128xf32>
    %224 = arith.mulf %223, %223 : vector<32x128xf32>
    %cst_86 = arith.constant dense<0.000000e+00> : vector<32xf32>
    %225 = vector.multi_reduction <add>, %224, %cst_86 [1] : vector<32x128xf32> to vector<32xf32>
    %226 = vector.shape_cast %225 : vector<32xf32> to vector<32x1xf32>
    %cst_87 = arith.constant 0.00787401571 : f32
    %227 = vector.broadcast %cst_87 : f32 to vector<32x1xf32>
    %228 = arith.mulf %226, %227 : vector<32x1xf32>
    %229 = math.sqrt %228 : vector<32x1xf32>
    %cst_88 = arith.constant 9.99999974E-6 : f32
    %230 = vector.broadcast %cst_88 : f32 to vector<32x1xf32>
    %231 = arith.addf %229, %230 : vector<32x1xf32>
    %232 = vector.broadcast %231 : vector<32x1xf32> to vector<32x128xf32>
    %233 = arith.divf %223, %232 : vector<32x128xf32>
    %234 = vector.broadcast %216 : vector<1x128xf32> to vector<32x128xf32>
    %235 = arith.mulf %234, %233 : vector<32x128xf32>
    %236 = vector.broadcast %217 : vector<1x128xf32> to vector<32x128xf32>
    %237 = arith.addf %235, %236 : vector<32x128xf32>
    %238 = arith.truncf %237 : vector<32x128xf32> to vector<32x128xbf16>
    %c0_89 = arith.constant 0 : index
    %c0_90 = arith.constant 0 : index
    %239 = vector.load %arg9[%c0_89, %c0_90] : memref<128x512xbf16, #tpu.memory_space<vmem>>, vector<128x512xbf16>
    %cst_91 = arith.constant dense<0.000000e+00> : vector<32x512xf32>
    %240 = tpu.matmul %238, %239, %cst_91 {dimension_numbers = #tpu.dot_dimension_numbers<[1], [0], [0], [1], [0, 0, 1, 1], [], []>} : vector<32x128xbf16>, vector<128x512xbf16>, vector<32x512xf32> -> vector<32x512xf32>
    %c0_92 = arith.constant 0 : index
    %c0_93 = arith.constant 0 : index
    %241 = vector.load %arg10[%c0_92, %c0_93] : memref<1x512xf32, #tpu.memory_space<vmem>>, vector<1x512xf32>
    %242 = vector.broadcast %241 : vector<1x512xf32> to vector<32x512xf32>
    %243 = arith.addf %240, %242 : vector<32x512xf32>
    %cst_94 = arith.constant 5.000000e-01 : f32
    %244 = vector.broadcast %cst_94 : f32 to vector<32x512xf32>
    %245 = arith.mulf %244, %243 : vector<32x512xf32>
    %246 = arith.mulf %243, %243 : vector<32x512xf32>
    %247 = arith.mulf %246, %243 : vector<32x512xf32>
    %248 = arith.addf %243, %247 : vector<32x512xf32>
    %cst_95 = arith.constant 0.797884583 : f32
    %249 = vector.broadcast %cst_95 : f32 to vector<32x512xf32>
    %250 = arith.mulf %249, %248 : vector<32x512xf32>
    %251 = math.tanh %250 : vector<32x512xf32>
    %cst_96 = arith.constant 1.000000e+00 : f32
    %252 = vector.broadcast %cst_96 : f32 to vector<32x512xf32>
    %253 = arith.addf %252, %251 : vector<32x512xf32>
    %254 = arith.mulf %245, %253 : vector<32x512xf32>
    %255 = arith.truncf %254 : vector<32x512xf32> to vector<32x512xbf16>
    %c0_97 = arith.constant 0 : index
    %c0_98 = arith.constant 0 : index
    %256 = vector.load %arg11[%c0_97, %c0_98] : memref<512x128xbf16, #tpu.memory_space<vmem>>, vector<512x128xbf16>
    %cst_99 = arith.constant dense<0.000000e+00> : vector<32x128xf32>
    %257 = tpu.matmul %255, %256, %cst_99 {dimension_numbers = #tpu.dot_dimension_numbers<[1], [0], [0], [1], [0, 0, 1, 1], [], []>} : vector<32x512xbf16>, vector<512x128xbf16>, vector<32x128xf32> -> vector<32x128xf32>
    %c0_100 = arith.constant 0 : index
    %c0_101 = arith.constant 0 : index
    %258 = vector.load %arg12[%c0_100, %c0_101] : memref<1x128xf32, #tpu.memory_space<vmem>>, vector<1x128xf32>
    %259 = vector.broadcast %258 : vector<1x128xf32> to vector<32x128xf32>
    %260 = arith.addf %257, %259 : vector<32x128xf32>
    %261 = arith.addf %215, %260 : vector<32x128xf32>
    %262 = vector.shape_cast %261 : vector<32x128xf32> to vector<2x16x128xf32>
    %c0_102 = arith.constant 0 : index
    %c0_103 = arith.constant 0 : index
    %c0_104 = arith.constant 0 : index
    %263 = vector.load %arg13[%c0_102, %c0_103, %c0_104] : memref<2x16x128xf32, #tpu.memory_space<vmem>>, vector<2x16x128xf32>
    tpu.vector_store %arg13[%c0_102, %c0_103, %c0_104], %262 {strides = array<i32>} : memref<2x16x128xf32, #tpu.memory_space<vmem>>, vector<2x16x128xf32>,
    return
  }
  func.func @transform_0(%arg0: i32) -> (i32, i32, i32) {
    %c0_i32 = arith.constant 0 : i32
    %c0_i32_0 = arith.constant 0 : i32
    %c0_i32_1 = arith.constant 0 : i32
    return %arg0, %c0_i32, %c0_i32_0 : i32, i32, i32
  }
  func.func @transform_1(%arg0: i32) -> (i32, i32) {
    %c0_i32 = arith.constant 0 : i32
    %c0_i32_0 = arith.constant 0 : i32
    %c0_i32_1 = arith.constant 0 : i32
    return %c0_i32, %c0_i32_0 : i32, i32
  }
  func.func @transform_2(%arg0: i32) -> (i32, i32) {
    %c0_i32 = arith.constant 0 : i32
    %c0_i32_0 = arith.constant 0 : i32
    %c0_i32_1 = arith.constant 0 : i32
    return %c0_i32, %c0_i32_0 : i32, i32
  }
  func.func @transform_3(%arg0: i32) -> (i32, i32) {
    %c0_i32 = arith.constant 0 : i32
    %c0_i32_0 = arith.constant 0 : i32
    %c0_i32_1 = arith.constant 0 : i32
    return %c0_i32, %c0_i32_0 : i32, i32
  }
  func.func @transform_4(%arg0: i32) -> (i32, i32) {
    %c0_i32 = arith.constant 0 : i32
    %c0_i32_0 = arith.constant 0 : i32
    %c0_i32_1 = arith.constant 0 : i32
    return %c0_i32, %c0_i32_0 : i32, i32
  }
  func.func @transform_5(%arg0: i32) -> (i32, i32) {
    %c0_i32 = arith.constant 0 : i32
    %c0_i32_0 = arith.constant 0 : i32
    %c0_i32_1 = arith.constant 0 : i32
    return %c0_i32, %c0_i32_0 : i32, i32
  }
  func.func @transform_6(%arg0: i32) -> (i32, i32) {
    %c0_i32 = arith.constant 0 : i32
    %c0_i32_0 = arith.constant 0 : i32
    %c0_i32_1 = arith.constant 0 : i32
    return %c0_i32, %c0_i32_0 : i32, i32
  }
  func.func @transform_7(%arg0: i32) -> (i32, i32) {
    %c0_i32 = arith.constant 0 : i32
    %c0_i32_0 = arith.constant 0 : i32
    %c0_i32_1 = arith.constant 0 : i32
    return %c0_i32, %c0_i32_0 : i32, i32
  }
  func.func @transform_8(%arg0: i32) -> (i32, i32) {
    %c0_i32 = arith.constant 0 : i32
    %c0_i32_0 = arith.constant 0 : i32
    %c0_i32_1 = arith.constant 0 : i32
    return %c0_i32, %c0_i32_0 : i32, i32
  }
  func.func @transform_9(%arg0: i32) -> (i32, i32) {
    %c0_i32 = arith.constant 0 : i32
    %c0_i32_0 = arith.constant 0 : i32
    %c0_i32_1 = arith.constant 0 : i32
    return %c0_i32, %c0_i32_0 : i32, i32
  }
  func.func @transform_10(%arg0: i32) -> (i32, i32) {
    %c0_i32 = arith.constant 0 : i32
    %c0_i32_0 = arith.constant 0 : i32
    %c0_i32_1 = arith.constant 0 : i32
    return %c0_i32, %c0_i32_0 : i32, i32
  }
  func.func @transform_11(%arg0: i32) -> (i32, i32) {
    %c0_i32 = arith.constant 0 : i32
    %c0_i32_0 = arith.constant 0 : i32
    %c0_i32_1 = arith.constant 0 : i32
    return %c0_i32, %c0_i32_0 : i32, i32
  }
  func.func @transform_12(%arg0: i32) -> (i32, i32, i32) {
    %c0_i32 = arith.constant 0 : i32
    %c0_i32_0 = arith.constant 0 : i32
    %c0_i32_1 = arith.constant 0 : i32
    return %arg0, %c0_i32, %c0_i32_0 : i32, i32, i32
  }
}

</mosaic_0001>

<llo_original>
// kernel: tpu_custom_call.1
$region0: #{tpu_custom_call.1}
  #allocation0 [shape = 'u32[]', space=smem, size = 0x4, offset = 0x4, fixed_abs, tag = 'smem constant byte address 0x4 - core index']
  #allocation1 [shape = 'u32[144,128]{1,0:T(1,128)}', space=vmem, size = 0x12000, scoped, tag = 'internal scratch']
  %s0 = inlined_call_operand.hbm [shape: f32[4,16,128], index: 0, kind: input, shape index: {}]
  %s1 = inlined_call_operand.vmem [shape: f32[1,128], index: 1, kind: input, shape index: {}]
  %s2 = inlined_call_operand.vmem [shape: f32[1,128], index: 2, kind: input, shape index: {}]
  %s3 = inlined_call_operand.hbm [shape: bf16[128,128], index: 3, kind: input, shape index: {}]
  %s4 = inlined_call_operand.hbm [shape: bf16[128,128], index: 4, kind: input, shape index: {}]
  %s5 = inlined_call_operand.vmem [shape: f32[1,128], index: 5, kind: input, shape index: {}]
  %s6 = inlined_call_operand.vmem [shape: f32[1,128], index: 6, kind: input, shape index: {}]
  %s7 = inlined_call_operand.vmem [shape: f32[1,128], index: 7, kind: input, shape index: {}]
  %s8 = inlined_call_operand.hbm [shape: bf16[128,512], index: 8, kind: input, shape index: {}]
  %s9 = inlined_call_operand.vmem [shape: f32[1,512], index: 9, kind: input, shape index: {}]
  %s10 = inlined_call_operand.hbm [shape: bf16[512,128], index: 10, kind: input, shape index: {}]
  %s11 = inlined_call_operand.vmem [shape: f32[1,128], index: 11, kind: input, shape index: {}]
  %s12 = inlined_call_operand.hbm [shape: f32[4,16,128], index: 12, kind: output, shape index: {}]
  %s13 = sld [smem:[#allocation0]]
  $region101: #{tpu_custom_call.1} parent=0
    _
  %s15 = ssub.s32 1, %s13
  %s16 = scalar_select 0, %s15, %s13
  $region1: #{tpu_custom_call.1} parent=0
    #allocation2 [shape = 'u8[32768]{0}', space=vmem, size = 0x8000, scoped, tag = 'input window, operand 0']
    #allocation3 [shape = 's32[2]{0}', space=sflag, size = 0x8, scoped, tag = 'scoped memory for tpu_custom_call.1']
    #allocation4 [shape = 's32[2]{0}', space=sflag, size = 0x8, scoped, tag = 'scoped memory for tpu_custom_call.1']
    #allocation5 [shape = 'u8[32768]{0}', space=vmem, size = 0x8000, scoped, tag = 'input window, operand 3, single buffered']
    #allocation6 [shape = 's32[1]{0}', space=sflag, size = 0x4, scoped, tag = 'scoped memory for tpu_custom_call.1']
    #allocation7 [shape = 'u8[32768]{0}', space=vmem, size = 0x8000, scoped, tag = 'input window, operand 4, single buffered']
    #allocation8 [shape = 'u8[131072]{0}', space=vmem, size = 0x20000, scoped, tag = 'input window, operand 8, single buffered']
    #allocation9 [shape = 's32[1]{0}', space=sflag, size = 0x4, scoped, tag = 'scoped memory for tpu_custom_call.1']
    #allocation10 [shape = 'u8[131072]{0}', space=vmem, size = 0x20000, scoped, tag = 'input window, operand 10, single buffered']
    #allocation11 [shape = 'u8[32768]{0}', space=vmem, size = 0x8000, scoped, tag = 'output window, operand 0']
    %17 = vsyncpa [#allocation3], 0
    %s18 = scalar_lea.sflag [#allocation3], 1
    %19 = vsyncpa %s18, 0
    %20 = vsyncpa [#allocation6], 0
    %21 = vsyncpa [#allocation9], 0
    %22 = vsyncpa [#allocation4], 0
    %s23 = scalar_lea.sflag [#allocation4], 1
    %24 = vsyncpa %s23, 0
    loop: start=0, step=1, limit=4
    $region2: #{tpu_custom_call.1} parent=1 // loop_pre_header
      _
    $region3: #{tpu_custom_call.1} parent=1 // loop_header
      %s26 = sphi 0, %s30
      %p27 = scmp.ge.s32.totalorder %s26, 4
      %s36 = sphi 0, %s38
      %s39 = sphi 0, %s36
      %s40 = sphi 0, %s39
      %s56 = sphi 0, %s40
      %s60 = sphi 0, %s60
      %s62 = sphi 0, %s60
      %s63 = sphi 0, %s62
      %s77 = sphi 0, %s63
      %s81 = sphi 0, %s81
      %s83 = sphi 0, %s81
      %s84 = sphi 0, %s83
      %s98 = sphi 0, %s84
      %s102 = sphi 0, %s102
      %s104 = sphi 0, %s102
      %s105 = sphi 0, %s104
      %s119 = sphi 0, %s105
      %s123 = sphi 0, %s123
      %s125 = sphi 0, %s123
      %s126 = sphi 0, %s125
      %s140 = sphi 0, %s126
      %s144 = sphi 0, %s144
      %s146 = sphi 0, %s144
      %s147 = sphi 0, %s146
      %s161 = sphi 0, %s147
      %s165 = sphi 0, %s165
      %s167 = sphi 0, %s165
      %s168 = sphi 0, %s167
      %s182 = sphi 0, %s168
      %s186 = sphi 0, %s186
      %s188 = sphi 0, %s186
      %s189 = sphi 0, %s188
      %s203 = sphi 0, %s189
      %s207 = sphi 0, %s207
      %s209 = sphi 0, %s207
      %s210 = sphi 0, %s209
      %s224 = sphi 0, %s210
      %s228 = sphi 0, %s228
      %s230 = sphi 0, %s228
      %s231 = sphi 0, %s230
      %s245 = sphi 0, %s231
      %s249 = sphi 0, %s249
      %s251 = sphi 0, %s249
      %s252 = sphi 0, %s251
      %s266 = sphi 0, %s252
      %s270 = sphi 0, %s270
      %s272 = sphi 0, %s270
      %s273 = sphi 0, %s272
      %s287 = sphi 0, %s273
      %s293 = sphi 0, %s295
      %s296 = sphi 0, %s293
      %s297 = sphi 0, %s296
      %s313 = sphi 0, %s297
    $region4: #{tpu_custom_call.1} parent=1 // loop_header_branch
      %29 = sbr.rel (%p27) target = $region8
    $region5: #{tpu_custom_call.1} parent=1 // loop_body
      %s31 = ssub.s32 %s26, 1
      %s32 = ssub.s32 %s26, 2
      %s33 = sadd.s32 %s26, 1
      %s34 = ssub.s32 %s26, %s33
      %p35 = scmp.eq.s32.totalorder %s34, 0
      %s37 = sadd.s32 %s36, 1
      %s38 = scalar_select %p35, %s36, %s37
      %p41 = pneg %p35
      %p42 = scmp.eq.s32.totalorder %s26, 1
      %p43 = por %p41, %p42
      %p44 = scmp.ne.s32.totalorder %s36, %s39
      %p45 = scmp.eq.s32.totalorder %s26, 0
      %p46 = por %p44, %p45
      %p47 = scmp.ne.s32.totalorder %s36, %s39
      %p48 = scmp.eq.s32.totalorder %s31, 1
      %p49 = por %p47, %p48
      %p50 = scmp.ne.s32.totalorder %s39, %s40
      %p51 = scmp.eq.s32.totalorder %s31, 0
      %p52 = por %p50, %p51
      %p53 = scmp.ne.s32.totalorder %s39, %s40
      %p54 = scmp.eq.s32.totalorder %s32, 1
      %p55 = por %p53, %p54
      %p57 = scmp.ne.s32.totalorder %s40, %s56
      %p58 = scmp.eq.s32.totalorder %s32, 0
      %p59 = por %p57, %p58
      %s61 = sadd.s32 %s60, 1
      %p64 = scmp.eq.s32.totalorder %s26, 1
      %p65 = scmp.ne.s32.totalorder %s60, %s62
      %p66 = scmp.eq.s32.totalorder %s26, 0
      %p67 = por %p65, %p66
      %p68 = scmp.ne.s32.totalorder %s60, %s62
      %p69 = scmp.eq.s32.totalorder %s31, 1
      %p70 = por %p68, %p69
      %p71 = scmp.ne.s32.totalorder %s62, %s63
      %p72 = scmp.eq.s32.totalorder %s31, 0
      %p73 = por %p71, %p72
      %p74 = scmp.ne.s32.totalorder %s62, %s63
      %p75 = scmp.eq.s32.totalorder %s32, 1
      %p76 = por %p74, %p75
      %p78 = scmp.ne.s32.totalorder %s63, %s77
      %p79 = scmp.eq.s32.totalorder %s32, 0
      %p80 = por %p78, %p79
      %s82 = sadd.s32 %s81, 1
      %p85 = scmp.eq.s32.totalorder %s26, 1
      %p86 = scmp.ne.s32.totalorder %s81, %s83
      %p87 = scmp.eq.s32.totalorder %s26, 0
      %p88 = por %p86, %p87
      %p89 = scmp.ne.s32.totalorder %s81, %s83
      %p90 = scmp.eq.s32.totalorder %s31, 1
      %p91 = por %p89, %p90
      %p92 = scmp.ne.s32.totalorder %s83, %s84
      %p93 = scmp.eq.s32.totalorder %s31, 0
      %p94 = por %p92, %p93
      %p95 = scmp.ne.s32.totalorder %s83, %s84
      %p96 = scmp.eq.s32.totalorder %s32, 1
      %p97 = por %p95, %p96
      %p99 = scmp.ne.s32.totalorder %s84, %s98
      %p100 = scmp.eq.s32.totalorder %s32, 0
      %p101 = por %p99, %p100
      %s103 = sadd.s32 %s102, 1
      %p106 = scmp.eq.s32.totalorder %s26, 1
      %p107 = scmp.ne.s32.totalorder %s102, %s104
      %p108 = scmp.eq.s32.totalorder %s26, 0
      %p109 = por %p107, %p108
      %p110 = scmp.ne.s32.totalorder %s102, %s104
      %p111 = scmp.eq.s32.totalorder %s31, 1
      %p112 = por %p110, %p111
      %p113 = scmp.ne.s32.totalorder %s104, %s105
      %p114 = scmp.eq.s32.totalorder %s31, 0
      %p115 = por %p113, %p114
      %p116 = scmp.ne.s32.totalorder %s104, %s105
      %p117 = scmp.eq.s32.totalorder %s32, 1
      %p118 = por %p116, %p117
      %p120 = scmp.ne.s32.totalorder %s105, %s119
      %p121 = scmp.eq.s32.totalorder %s32, 0
      %p122 = por %p120, %p121
      %s124 = sadd.s32 %s123, 1
      %p127 = scmp.eq.s32.totalorder %s26, 1
      %p128 = scmp.ne.s32.totalorder %s123, %s125
      %p129 = scmp.eq.s32.totalorder %s26, 0
      %p130 = por %p128, %p129
      %p131 = scmp.ne.s32.totalorder %s123, %s125
      %p132 = scmp.eq.s32.totalorder %s31, 1
      %p133 = por %p131, %p132
      %p134 = scmp.ne.s32.totalorder %s125, %s126
      %p135 = scmp.eq.s32.totalorder %s31, 0
      %p136 = por %p134, %p135
      %p137 = scmp.ne.s32.totalorder %s125, %s126
      %p138 = scmp.eq.s32.totalorder %s32, 1
      %p139 = por %p137, %p138
      %p141 = scmp.ne.s32.totalorder %s126, %s140
      %p142 = scmp.eq.s32.totalorder %s32, 0
      %p143 = por %p141, %p142
      %s145 = sadd.s32 %s144, 1
      %p148 = scmp.eq.s32.totalorder %s26, 1
      %p149 = scmp.ne.s32.totalorder %s144, %s146
      %p150 = scmp.eq.s32.totalorder %s26, 0
      %p151 = por %p149, %p150
      %p152 = scmp.ne.s32.totalorder %s144, %s146
      %p153 = scmp.eq.s32.totalorder %s31, 1
      %p154 = por %p152, %p153
      %p155 = scmp.ne.s32.totalorder %s146, %s147
      %p156 = scmp.eq.s32.totalorder %s31, 0
      %p157 = por %p155, %p156
      %p158 = scmp.ne.s32.totalorder %s146, %s147
      %p159 = scmp.eq.s32.totalorder %s32, 1
      %p160 = por %p158, %p159
      %p162 = scmp.ne.s32.totalorder %s147, %s161
      %p163 = scmp.eq.s32.totalorder %s32, 0
      %p164 = por %p162, %p163
      %s166 = sadd.s32 %s165, 1
      %p169 = scmp.eq.s32.totalorder %s26, 1
      %p170 = scmp.ne.s32.totalorder %s165, %s167
      %p171 = scmp.eq.s32.totalorder %s26, 0
      %p172 = por %p170, %p171
      %p173 = scmp.ne.s32.totalorder %s165, %s167
      %p174 = scmp.eq.s32.totalorder %s31, 1
      %p175 = por %p173, %p174
      %p176 = scmp.ne.s32.totalorder %s167, %s168
      %p177 = scmp.eq.s32.totalorder %s31, 0
      %p178 = por %p176, %p177
      %p179 = scmp.ne.s32.totalorder %s167, %s168
      %p180 = scmp.eq.s32.totalorder %s32, 1
      %p181 = por %p179, %p180
      %p183 = scmp.ne.s32.totalorder %s168, %s182
      %p184 = scmp.eq.s32.totalorder %s32, 0
      %p185 = por %p183, %p184
      %s187 = sadd.s32 %s186, 1
      %p190 = scmp.eq.s32.totalorder %s26, 1
      %p191 = scmp.ne.s32.totalorder %s186, %s188
      %p192 = scmp.eq.s32.totalorder %s26, 0
      %p193 = por %p191, %p192
      %p194 = scmp.ne.s32.totalorder %s186, %s188
      %p195 = scmp.eq.s32.totalorder %s31, 1
      %p196 = por %p194, %p195
      %p197 = scmp.ne.s32.totalorder %s188, %s189
      %p198 = scmp.eq.s32.totalorder %s31, 0
      %p199 = por %p197, %p198
      %p200 = scmp.ne.s32.totalorder %s188, %s189
      %p201 = scmp.eq.s32.totalorder %s32, 1
      %p202 = por %p200, %p201
      %p204 = scmp.ne.s32.totalorder %s189, %s203
      %p205 = scmp.eq.s32.totalorder %s32, 0
      %p206 = por %p204, %p205
      %s208 = sadd.s32 %s207, 1
      %p211 = scmp.eq.s32.totalorder %s26, 1
      %p212 = scmp.ne.s32.totalorder %s207, %s209
      %p213 = scmp.eq.s32.totalorder %s26, 0
      %p214 = por %p212, %p213
      %p215 = scmp.ne.s32.totalorder %s207, %s209
      %p216 = scmp.eq.s32.totalorder %s31, 1
      %p217 = por %p215, %p216
      %p218 = scmp.ne.s32.totalorder %s209, %s210
      %p219 = scmp.eq.s32.totalorder %s31, 0
      %p220 = por %p218, %p219
      %p221 = scmp.ne.s32.totalorder %s209, %s210
      %p222 = scmp.eq.s32.totalorder %s32, 1
      %p223 = por %p221, %p222
      %p225 = scmp.ne.s32.totalorder %s210, %s224
      %p226 = scmp.eq.s32.totalorder %s32, 0
      %p227 = por %p225, %p226
      %s229 = sadd.s32 %s228, 1
      %p232 = scmp.eq.s32.totalorder %s26, 1
      %p233 = scmp.ne.s32.totalorder %s228, %s230
      %p234 = scmp.eq.s32.totalorder %s26, 0
      %p235 = por %p233, %p234
      %p236 = scmp.ne.s32.totalorder %s228, %s230
      %p237 = scmp.eq.s32.totalorder %s31, 1
      %p238 = por %p236, %p237
      %p239 = scmp.ne.s32.totalorder %s230, %s231
      %p240 = scmp.eq.s32.totalorder %s31, 0
      %p241 = por %p239, %p240
      %p242 = scmp.ne.s32.totalorder %s230, %s231
      %p243 = scmp.eq.s32.totalorder %s32, 1
      %p244 = por %p242, %p243
      %p246 = scmp.ne.s32.totalorder %s231, %s245
      %p247 = scmp.eq.s32.totalorder %s32, 0
      %p248 = por %p246, %p247
      %s250 = sadd.s32 %s249, 1
      %p253 = scmp.eq.s32.totalorder %s26, 1
      %p254 = scmp.ne.s32.totalorder %s249, %s251
      %p255 = scmp.eq.s32.totalorder %s26, 0
      %p256 = por %p254, %p255
      %p257 = scmp.ne.s32.totalorder %s249, %s251
      %p258 = scmp.eq.s32.totalorder %s31, 1
      %p259 = por %p257, %p258
      %p260 = scmp.ne.s32.totalorder %s251, %s252
      %p261 = scmp.eq.s32.totalorder %s31, 0
      %p262 = por %p260, %p261
      %p263 = scmp.ne.s32.totalorder %s251, %s252
      %p264 = scmp.eq.s32.totalorder %s32, 1
      %p265 = por %p263, %p264
      %p267 = scmp.ne.s32.totalorder %s252, %s266
      %p268 = scmp.eq.s32.totalorder %s32, 0
      %p269 = por %p267, %p268
      %s271 = sadd.s32 %s270, 1
      %p274 = scmp.eq.s32.totalorder %s26, 1
      %p275 = scmp.ne.s32.totalorder %s270, %s272
      %p276 = scmp.eq.s32.totalorder %s26, 0
      %p277 = por %p275, %p276
      %p278 = scmp.ne.s32.totalorder %s270, %s272
      %p279 = scmp.eq.s32.totalorder %s31, 1
      %p280 = por %p278, %p279
      %p281 = scmp.ne.s32.totalorder %s272, %s273
      %p282 = scmp.eq.s32.totalorder %s31, 0
      %p283 = por %p281, %p282
      %p284 = scmp.ne.s32.totalorder %s272, %s273
      %p285 = scmp.eq.s32.totalorder %s32, 1
      %p286 = por %p284, %p285
      %p288 = scmp.ne.s32.totalorder %s273, %s287
      %p289 = scmp.eq.s32.totalorder %s32, 0
      %p290 = por %p288, %p289
      %s291 = ssub.s32 %s26, %s33
      %p292 = scmp.eq.s32.totalorder %s291, 0
      %s294 = sadd.s32 %s293, 1
      %s295 = scalar_select %p292, %s293, %s294
      %p298 = pneg %p292
      %p299 = scmp.eq.s32.totalorder %s26, 1
      %p300 = por %p298, %p299
      %p301 = scmp.ne.s32.totalorder %s293, %s296
      %p302 = scmp.eq.s32.totalorder %s26, 0
      %p303 = por %p301, %p302
      %p304 = scmp.ne.s32.totalorder %s293, %s296
      %p305 = scmp.eq.s32.totalorder %s31, 1
      %p306 = por %p304, %p305
      %p307 = scmp.ne.s32.totalorder %s296, %s297
      %p308 = scmp.eq.s32.totalorder %s31, 0
      %p309 = por %p307, %p308
      %p310 = scmp.ne.s32.totalorder %s296, %s297
      %p311 = scmp.eq.s32.totalorder %s32, 1
      %p312 = por %p310, %p311
      %p314 = scmp.ne.s32.totalorder %s297, %s313
      %p315 = scmp.eq.s32.totalorder %s32, 0
      %p316 = por %p314, %p315
      %p317 = scmp.le.s32.totalorder 1, %s26
      %p318 = scmp.lt.s32.totalorder %s26, 3
      %p319 = pnand %p317, %p318
      %p320 = pneg %p319
      // Predicated region
      $region9: #{tpu_custom_call.1} parent=5 // pred_check
        _
      $region10: #{tpu_custom_call.1} parent=5 // pred_check_branch
        %322 = sbr.rel (%p319) target = $region12
      $region11: #{tpu_custom_call.1} parent=5 // pred_region
        %s323 = ssub.s32 %s26, 1
        // Predicated region
        $region13: #{tpu_custom_call.1} parent=11 // pred_check
          %p324 = pneg %p73
        $region14: #{tpu_custom_call.1} parent=11 // pred_check_branch
          %326 = sbr.rel (%p324) target = $region16
        $region15: #{tpu_custom_call.1} parent=11 // pred_region
          _
        $region16: #{tpu_custom_call.1} parent=11 // pred_fallthru
          _
        // Predicated region
        $region17: #{tpu_custom_call.1} parent=11 // pred_check
          %p327 = pneg %p94
        $region18: #{tpu_custom_call.1} parent=11 // pred_check_branch
          %329 = sbr.rel (%p327) target = $region20
        $region19: #{tpu_custom_call.1} parent=11 // pred_region
          _
        $region20: #{tpu_custom_call.1} parent=11 // pred_fallthru
          _
        // Predicated region
        $region21: #{tpu_custom_call.1} parent=11 // pred_check
          %p330 = pneg %p115
        $region22: #{tpu_custom_call.1} parent=11 // pred_check_branch
          %332 = sbr.rel (%p330) target = $region24
        $region23: #{tpu_custom_call.1} parent=11 // pred_region
          %s334 = ssub.s32 1024, 1024
          %335 = vsyncadd [#allocation6], %s334
          %s336 = sshll.u32 [#allocation5], 4
          %s337 = int_to_ptr.vmem [resolvable:$true] %s336
          %342 = dma.hbm_to_vmem [thread:$0]  %s3, 1024, %s337, [#allocation6], 64, 64, 4
        $region24: #{tpu_custom_call.1} parent=11 // pred_fallthru
          _
        // Predicated region
        $region25: #{tpu_custom_call.1} parent=11 // pred_check
          %p343 = pneg %p136
        $region26: #{tpu_custom_call.1} parent=11 // pred_check_branch
          %345 = sbr.rel (%p343) target = $region28
        $region27: #{tpu_custom_call.1} parent=11 // pred_region
          %s347 = ssub.s32 1024, 1024
          %348 = vsyncadd [#allocation6], %s347
          %s349 = sshll.u32 [#allocation7], 4
          %s350 = int_to_ptr.vmem [resolvable:$true] %s349
          %355 = dma.hbm_to_vmem [thread:$0]  %s4, 1024, %s350, [#allocation6], 64, 64, 4
        $region28: #{tpu_custom_call.1} parent=11 // pred_fallthru
          _
        // Predicated region
        $region29: #{tpu_custom_call.1} parent=11 // pred_check
          %p356 = pneg %p157
        $region30: #{tpu_custom_call.1} parent=11 // pred_check_branch
          %358 = sbr.rel (%p356) target = $region32
        $region31: #{tpu_custom_call.1} parent=11 // pred_region
          _
        $region32: #{tpu_custom_call.1} parent=11 // pred_fallthru
          _
        // Predicated region
        $region33: #{tpu_custom_call.1} parent=11 // pred_check
          %p359 = pneg %p178
        $region34: #{tpu_custom_call.1} parent=11 // pred_check_branch
          %361 = sbr.rel (%p359) target = $region36
        $region35: #{tpu_custom_call.1} parent=11 // pred_region
          _
        $region36: #{tpu_custom_call.1} parent=11 // pred_fallthru
          _
        // Predicated region
        $region37: #{tpu_custom_call.1} parent=11 // pred_check
          %p362 = pneg %p199
        $region38: #{tpu_custom_call.1} parent=11 // pred_check_branch
          %364 = sbr.rel (%p362) target = $region40
        $region39: #{tpu_custom_call.1} parent=11 // pred_region
          _
        $region40: #{tpu_custom_call.1} parent=11 // pred_fallthru
          _
        // Predicated region
        $region41: #{tpu_custom_call.1} parent=11 // pred_check
          %p365 = pneg %p220
        $region42: #{tpu_custom_call.1} parent=11 // pred_check_branch
          %367 = sbr.rel (%p365) target = $region44
        $region43: #{tpu_custom_call.1} parent=11 // pred_region
          %s369 = ssub.s32 4096, 4096
          %370 = vsyncadd [#allocation9], %s369
          %s371 = sshll.u32 [#allocation8], 4
          %s372 = int_to_ptr.vmem [resolvable:$true] %s371
          %377 = dma.hbm_to_vmem [thread:$0]  %s8, 4096, %s372, [#allocation9], 256, 256, 16
        $region44: #{tpu_custom_call.1} parent=11 // pred_fallthru
          _
        // Predicated region
        $region45: #{tpu_custom_call.1} parent=11 // pred_check
          %p378 = pneg %p241
        $region46: #{tpu_custom_call.1} parent=11 // pred_check_branch
          %380 = sbr.rel (%p378) target = $region48
        $region47: #{tpu_custom_call.1} parent=11 // pred_region
          _
        $region48: #{tpu_custom_call.1} parent=11 // pred_fallthru
          _
        // Predicated region
        $region49: #{tpu_custom_call.1} parent=11 // pred_check
          %p381 = pneg %p262
        $region50: #{tpu_custom_call.1} parent=11 // pred_check_branch
          %383 = sbr.rel (%p381) target = $region52
        $region51: #{tpu_custom_call.1} parent=11 // pred_region
          %s385 = ssub.s32 4096, 4096
          %386 = vsyncadd [#allocation9], %s385
          %s387 = sshll.u32 [#allocation10], 4
          %s388 = int_to_ptr.vmem [resolvable:$true] %s387
          %393 = dma.hbm_to_vmem [thread:$0]  %s10, 4096, %s388, [#allocation9], 64, 64, 4
        $region52: #{tpu_custom_call.1} parent=11 // pred_fallthru
          _
        // Predicated region
        $region53: #{tpu_custom_call.1} parent=11 // pred_check
          %p394 = pneg %p283
        $region54: #{tpu_custom_call.1} parent=11 // pred_check_branch
          %396 = sbr.rel (%p394) target = $region56
        $region55: #{tpu_custom_call.1} parent=11 // pred_region
          _
        $region56: #{tpu_custom_call.1} parent=11 // pred_fallthru
          _
      $region12: #{tpu_custom_call.1} parent=5 // pred_fallthru
        _
      %p397 = scmp.lt.s32.totalorder %s26, 2
      // Predicated region
      $region57: #{tpu_custom_call.1} parent=5 // pred_check
        %p398 = pneg %p397
      $region58: #{tpu_custom_call.1} parent=5 // pred_check_branch
        %400 = sbr.rel (%p398) target = $region60
      $region59: #{tpu_custom_call.1} parent=5 // pred_region
        // Predicated region
        $region61: #{tpu_custom_call.1} parent=59 // pred_check
          %p401 = pneg %p46
        $region62: #{tpu_custom_call.1} parent=59 // pred_check_branch
          %403 = sbr.rel (%p401) target = $region64
        $region63: #{tpu_custom_call.1} parent=59 // pred_region
          %s404 = sand.u32 %s36, 1
          %s405 = scalar_lea.sflag [#allocation3], %s404
          %s406 = sand.u32 %s36, 1
          %s407 = smul.addr %s406, 32
          %s408 = scalar_lea.vmem [#allocation2], %s407
          %s409 = smul.u32 2, %s26
          %s411 = ssub.s32 512, 512
          %412 = vsyncadd %s405, %s411
          %s413 = smul.addr %s409, 2
          %s414 = smul.addr %s413, 128
          %s415 = scalar_lea.hbm %s0, %s414
          %s416 = sshll.u32 %s408, 4
          %s417 = int_to_ptr.vmem [resolvable:$true] %s416
          %422 = dma.hbm_to_vmem [thread:$0]  %s415, 512, %s417, %s405, 128, 128, 8
        $region64: #{tpu_custom_call.1} parent=59 // pred_fallthru
          _
      $region60: #{tpu_custom_call.1} parent=5 // pred_fallthru
        _
      %p423 = scmp.le.s32.totalorder 1, %s26
      %p424 = scmp.lt.s32.totalorder %s26, 3
      %p425 = pnand %p423, %p424
      %p426 = pneg %p425
      // Predicated region
      $region65: #{tpu_custom_call.1} parent=5 // pred_check
        _
      $region66: #{tpu_custom_call.1} parent=5 // pred_check_branch
        %428 = sbr.rel (%p425) target = $region68
      $region67: #{tpu_custom_call.1} parent=5 // pred_region
        %s429 = ssub.s32 %s26, 1
        %s430 = sand.u32 %s39, 1
        %s431 = scalar_lea.sflag [#allocation3], %s430
        %s432 = sand.u32 %s39, 1
        %s433 = smul.addr %s432, 32
        %s434 = scalar_lea.vmem [#allocation2], %s433
        // Predicated region
        $region69: #{tpu_custom_call.1} parent=67 // pred_check
          %p435 = pneg %p52
        $region70: #{tpu_custom_call.1} parent=67 // pred_check_branch
          %437 = sbr.rel (%p435) target = $region72
        $region71: #{tpu_custom_call.1} parent=67 // pred_region
          %438 = dma.done %s431, 512
        $region72: #{tpu_custom_call.1} parent=67 // pred_fallthru
          _
        // Predicated region
        $region73: #{tpu_custom_call.1} parent=67 // pred_check
          %p439 = pneg %p115
        $region74: #{tpu_custom_call.1} parent=67 // pred_check_branch
          %441 = sbr.rel (%p439) target = $region76
        $region75: #{tpu_custom_call.1} parent=67 // pred_region
          %442 = dma.done [#allocation6], 1024
        $region76: #{tpu_custom_call.1} parent=67 // pred_fallthru
          _
        // Predicated region
        $region77: #{tpu_custom_call.1} parent=67 // pred_check
          %p443 = pneg %p136
        $region78: #{tpu_custom_call.1} parent=67 // pred_check_branch
          %445 = sbr.rel (%p443) target = $region80
        $region79: #{tpu_custom_call.1} parent=67 // pred_region
          %446 = dma.done [#allocation6], 1024
        $region80: #{tpu_custom_call.1} parent=67 // pred_fallthru
          _
        // Predicated region
        $region81: #{tpu_custom_call.1} parent=67 // pred_check
          %p447 = pneg %p220
        $region82: #{tpu_custom_call.1} parent=67 // pred_check_branch
          %449 = sbr.rel (%p447) target = $region84
        $region83: #{tpu_custom_call.1} parent=67 // pred_region
          %450 = dma.done [#allocation9], 4096
        $region84: #{tpu_custom_call.1} parent=67 // pred_fallthru
          _
        // Predicated region
        $region85: #{tpu_custom_call.1} parent=67 // pred_check
          %p451 = pneg %p262
        $region86: #{tpu_custom_call.1} parent=67 // pred_check_branch
          %453 = sbr.rel (%p451) target = $region88
        $region87: #{tpu_custom_call.1} parent=67 // pred_region
          %454 = dma.done [#allocation9], 4096
        $region88: #{tpu_custom_call.1} parent=67 // pred_fallthru
          _
        %s455 = sand.u32 %s39, 1
        %s456 = scalar_lea.sflag [#allocation3], %s455
        %s457 = sand.u32 %s39, 1
        %s458 = smul.addr %s457, 32
        %s459 = scalar_lea.vmem [#allocation2], %s458
        %p460 = pneg %p52
        %p461 = pneg %p49
        %p462 = pneg %p73
        %p463 = pneg %p70
        %p464 = pneg %p94
        %p465 = pneg %p91
        %p466 = pneg %p115
        %p467 = pneg %p112
        %p468 = pneg %p136
        %p469 = pneg %p133
        %p470 = pneg %p157
        %p471 = pneg %p154
        %p472 = pneg %p178
        %p473 = pneg %p175
        %p474 = pneg %p199
        %p475 = pneg %p196
        %p476 = pneg %p220
        %p477 = pneg %p217
        %p478 = pneg %p241
        %p479 = pneg %p238
        %p480 = pneg %p262
        %p481 = pneg %p259
        %p482 = pneg %p283
        %p483 = pneg %p280
        %p484 = pneg %p309
        %p485 = pneg %p306
        %s486 = sand.u32 %s296, 1
        %s487 = scalar_lea.sflag [#allocation4], %s486
        %s488 = sand.u32 %s296, 1
        %s489 = smul.addr %s488, 32
        %s490 = scalar_lea.vmem [#allocation11], %s489
        %s491 = smul.u32 2, %s31
        %s492 = smul.u32 2, %s31
        %v494 = vld [vmem:[%s434] sm:$0xff]
        %v495 = vld [vmem:[%s434 + $0x8] sm:$0xff]
        %v496 = vld [vmem:[%s434 + $0x10] sm:$0xff]
        %v497 = vld [vmem:[%s434 + $0x18] sm:$0xff]
        %v498 = vld [vmem:[%s1] sm:$0x1]
        %v499 = vld [vmem:[%s2] sm:$0x1]
        %500 = vadd.xlane.f32.xlu0 %v494
        %v501 = vpop.xlane.xlu0 %500
        %502 = vadd.xlane.f32.xlu0 %v495
        %v503 = vpop.xlane.xlu0 %502
        %504 = vadd.xlane.f32.xlu0 %v496
        %v505 = vpop.xlane.xlu0 %504
        %506 = vadd.xlane.f32.xlu0 %v497
        %v507 = vpop.xlane.xlu0 %506
        %v508 = vrcp.pop 128.0
        %v509 = vmul.f32 %v501, %v508
        %v510 = vmul.f32 %v503, %v508
        %v511 = vmul.f32 %v505, %v508
        %v512 = vmul.f32 %v507, %v508
        %v513 = vsub.f32 %v494, %v509
        %v514 = vsub.f32 %v495, %v510
        %v515 = vsub.f32 %v496, %v511
        %v516 = vsub.f32 %v497, %v512
        %v517 = vmul.f32 %v513, %v513
        %v518 = vmul.f32 %v514, %v514
        %v519 = vmul.f32 %v515, %v515
        %v520 = vmul.f32 %v516, %v516
        %521 = vadd.xlane.f32.xlu0 %v517
        %v522 = vpop.xlane.xlu0 %521
        %523 = vadd.xlane.f32.xlu0 %v518
        %v524 = vpop.xlane.xlu0 %523
        %525 = vadd.xlane.f32.xlu0 %v519
        %v526 = vpop.xlane.xlu0 %525
        %527 = vadd.xlane.f32.xlu0 %v520
        %v528 = vpop.xlane.xlu0 %527
        %v529 = vmul.f32 %v522, 0.007874016
        %v530 = vmul.f32 %v524, 0.007874016
        %v531 = vmul.f32 %v526, 0.007874016
        %v532 = vmul.f32 %v528, 0.007874016
        %v533 = vrsqrt.pop %v529
        %v534 = vmul.f32 %v529, %v533
        %vm535 = vcmp.eq.f32.partialorder %v529, inf
        %v536 = vsel %vm535, %v529, %v534
        %vm537 = vcmp.eq.f32.partialorder %v529, 0.0
        %v538 = vand.u32 %v529, 2147483648
        %v539 = vsel %vm537, %v538, %v536
        %v540 = vrsqrt.pop %v530
        %v541 = vmul.f32 %v530, %v540
        %vm542 = vcmp.eq.f32.partialorder %v530, inf
        %v543 = vsel %vm542, %v530, %v541
        %vm544 = vcmp.eq.f32.partialorder %v530, 0.0
        %v545 = vand.u32 %v530, 2147483648
        %v546 = vsel %vm544, %v545, %v543
        %v547 = vrsqrt.pop %v531
        %v548 = vmul.f32 %v531, %v547
        %vm549 = vcmp.eq.f32.partialorder %v531, inf
        %v550 = vsel %vm549, %v531, %v548
        %vm551 = vcmp.eq.f32.partialorder %v531, 0.0
        %v552 = vand.u32 %v531, 2147483648
        %v553 = vsel %vm551, %v552, %v550
        %v554 = vrsqrt.pop %v532
        %v555 = vmul.f32 %v532, %v554
        %vm556 = vcmp.eq.f32.partialorder %v532, inf
        %v557 = vsel %vm556, %v532, %v555
        %vm558 = vcmp.eq.f32.partialorder %v532, 0.0
        %v559 = vand.u32 %v532, 2147483648
        %v560 = vsel %vm558, %v559, %v557
        %v561 = vadd.f32 %v539, 1e-05
        %v562 = vadd.f32 %v546, 1e-05
        %v563 = vadd.f32 %v553, 1e-05
        %v564 = vadd.f32 %v560, 1e-05
        %v565 = vrcp.pop %v561
        %v566 = vmul.f32 %v513, %v565
        %v567 = vrcp.pop %v562
        %v568 = vmul.f32 %v514, %v567
        %v569 = vrcp.pop %v563
        %v570 = vmul.f32 %v515, %v569
        %v571 = vrcp.pop %v564
        %v572 = vmul.f32 %v516, %v571
        %v574 = vlaneseq
        %v575 = vshrl.u32 %v574, 7
        %v576 = vsub.s32 0, %v575
        %v577 = vrot.slane %v498, %v576
        %v579 = vmul.f32 %v577, %v566
        %v580 = vmul.f32 %v577, %v568
        %v581 = vmul.f32 %v577, %v570
        %v582 = vmul.f32 %v577, %v572
        %v584 = vlaneseq
        %v585 = vshrl.u32 %v584, 7
        %v586 = vsub.s32 0, %v585
        %v587 = vrot.slane %v499, %v586
        %v589 = vadd.f32 %v579, %v587
        %v590 = vadd.f32 %v580, %v587
        %v591 = vadd.f32 %v581, %v587
        %v592 = vadd.f32 %v582, %v587
        %v593 = vpack.c.bf16 %v590, %v589
        %v594 = vpack.c.bf16 %v592, %v591
        %v595 = vld [vmem:[#allocation5] sm:$0xf]
        %v596 = vld [vmem:[#allocation5 + $0x4] sm:$0xf]
        %v597 = vld [vmem:[#allocation5 + $0x8] sm:$0xf]
        %v598 = vld [vmem:[#allocation5 + $0xc] sm:$0xf]
        %v599 = vld [vmem:[#allocation5 + $0x10] sm:$0xf]
        %v600 = vld [vmem:[#allocation5 + $0x14] sm:$0xf]
        %v601 = vld [vmem:[#allocation5 + $0x18] sm:$0xf]
        %v602 = vld [vmem:[#allocation5 + $0x1c] sm:$0xf]
        %v603 = vld [vmem:[#allocation5 + $0x20] sm:$0xf]
        %v604 = vld [vmem:[#allocation5 + $0x24] sm:$0xf]
        %v605 = vld [vmem:[#allocation5 + $0x28] sm:$0xf]
        %v606 = vld [vmem:[#allocation5 + $0x2c] sm:$0xf]
        %v607 = vld [vmem:[#allocation5 + $0x30] sm:$0xf]
        %v608 = vld [vmem:[#allocation5 + $0x34] sm:$0xf]
        %v609 = vld [vmem:[#allocation5 + $0x38] sm:$0xf]
        %v610 = vld [vmem:[#allocation5 + $0x3c] sm:$0xf]
        %v627 = vunpack.c.l.b16 %v595
        %v628 = vunpack.c.l.b16 %v596
        %v629 = vunpack.c.l.b16 %v597
        %v630 = vunpack.c.l.b16 %v598
        %v631 = vunpack.c.l.b16 %v599
        %v632 = vunpack.c.l.b16 %v600
        %v633 = vunpack.c.l.b16 %v601
        %v634 = vunpack.c.l.b16 %v602
        %v635 = vunpack.c.l.b16 %v603
        %v636 = vunpack.c.l.b16 %v604
        %v637 = vunpack.c.l.b16 %v605
        %v638 = vunpack.c.l.b16 %v606
        %v639 = vunpack.c.l.b16 %v607
        %v640 = vunpack.c.l.b16 %v608
        %v641 = vunpack.c.l.b16 %v609
        %v642 = vunpack.c.l.b16 %v610
        %v643 = vpack.c.b16 %v628, %v627
        %v644 = vpack.c.b16 %v630, %v629
        %v645 = vpack.c.b16 %v632, %v631
        %v646 = vpack.c.b16 %v634, %v633
        %v647 = vpack.c.b16 %v636, %v635
        %v648 = vpack.c.b16 %v638, %v637
        %v649 = vpack.c.b16 %v640, %v639
        %v650 = vpack.c.b16 %v642, %v641
        %659 = vmatprep.subr.bf16.mxu0 0
        %660 = vmatpush1.bf16.msra.mxu0 %v643
        %661 = vmatprep.subr.bf16.mxu0 0
        %662 = vmatpush1.bf16.msra.mxu0 %v644
        %663 = vmatprep.subr.bf16.mxu0 0
        %664 = vmatpush1.bf16.msra.mxu0 %v645
        %665 = vmatprep.subr.bf16.mxu0 0
        %666 = vmatpush1.bf16.msra.mxu0 %v646
        %667 = vmatprep.subr.bf16.mxu0 0
        %668 = vmatpush1.bf16.msra.mxu0 %v647
        %669 = vmatprep.subr.bf16.mxu0 0
        %670 = vmatpush1.bf16.msra.mxu0 %v648
        %671 = vmatprep.subr.bf16.mxu0 0
        %672 = vmatpush1.bf16.msra.mxu0 %v649
        %673 = vmatprep.subr.bf16.mxu0 0
        %674 = vmatpush1.bf16.msra.mxu0 %v650
        %675 = vmatprep.subr.bf16.mxu0 0
        %676 = vmatpush1.bf16.msra.mxu0 0
        %677 = vmatprep.subr.bf16.mxu0 0
        %678 = vmatpush1.bf16.msra.mxu0 0
        %679 = vmatprep.subr.bf16.mxu0 0
        %680 = vmatpush1.bf16.msra.mxu0 0
        %681 = vmatprep.subr.bf16.mxu0 0
        %682 = vmatpush1.bf16.msra.mxu0 0
        %683 = vmatprep.subr.bf16.mxu0 0
        %684 = vmatpush1.bf16.msra.mxu0 0
        %685 = vmatprep.subr.bf16.mxu0 0
        %686 = vmatpush1.bf16.msra.mxu0 0
        %687 = vmatprep.subr.bf16.mxu0 0
        %688 = vmatpush1.bf16.msra.mxu0 0
        %689 = vmatprep.subr.bf16.mxu0 0
        %690 = vmatpush1.bf16.msra.mxu0 0
        %691 = vmatprep.mubr.bf16.mxu0 0
        %692 = vmatmul.mubr.bf16.gmra.mrb[0].mxu0 %v593
        %v693 = vpop.f32.mrb[0].mxu0
        %v694 = vadd.f32 0.0, %v693
        %v695 = vpop.f32.mrb[0].mxu0
        %v696 = vpop.f32.mrb[0].mxu0
        %v697 = vadd.f32 0.0, %v696
        %v698 = vpop.f32.mrb[0].mxu0
        %699 = vmatprep.mubr.bf16.mxu0 0
        %700 = vmatmul.mubr.bf16.gmra.mrb[0].mxu0 %v594
        %v701 = vpop.f32.mrb[0].mxu0
        %v702 = vadd.f32 0.0, %v701
        %v703 = vpop.f32.mrb[0].mxu0
        %v704 = vpop.f32.mrb[0].mxu0
        %v705 = vadd.f32 0.0, %v704
        %v706 = vpop.f32.mrb[0].mxu0
        %707 = vdwg.mxu0
        %v708 = vlaneseq
        %v709 = vshrl.u32 %v708, 7
        %v710 = vadd.s32 %v709, 8
        %v711 = vlaneseq
        %v712 = vand.u32 %v711, 127
        %vm713 = vcmp.le.s32.totalorder %v712, %v709
        %vm714 = vcmp.le.s32.totalorder %v712, %v710
        %v715 = vsel %vm713, 0.0, -1e+30
        %v716 = vsel %vm714, 0.0, -1e+30
        %v717 = vpack.c.bf16 %v697, %v694
        %vm718 = vcmask 261120
        %v720 = vsel %vm718, %v717, 0
        %722 = vmatprep.subr.bf16.mxu0 0
        %723 = vmatpush1.bf16.xpose.msra.mxu0 %v720
        %724 = vmatprep.subr.bf16.mxu0 0
        %725 = vmatpush1.bf16.xpose.msra.mxu0 0
        %726 = vmatprep.subr.bf16.mxu0 0
        %727 = vmatpush1.bf16.xpose.msra.mxu0 0
        %728 = vmatprep.subr.bf16.mxu0 0
        %729 = vmatpush1.bf16.xpose.msra.mxu0 0
        %730 = vmatprep.subr.bf16.mxu0 0
        %731 = vmatpush1.bf16.xpose.msra.mxu0 0
        %732 = vmatprep.subr.bf16.mxu0 0
        %733 = vmatpush1.bf16.xpose.msra.mxu0 0
        %734 = vmatprep.subr.bf16.mxu0 0
        %735 = vmatpush1.bf16.xpose.msra.mxu0 0
        %736 = vmatprep.subr.bf16.mxu0 0
        %737 = vmatpush1.bf16.xpose.msra.mxu0 0
        %738 = vmatprep.subr.bf16.mxu0 0
        %739 = vmatpush1.bf16.xpose.msra.mxu0 0
        %740 = vmatprep.subr.bf16.mxu0 0
        %741 = vmatpush1.bf16.xpose.msra.mxu0 0
        %742 = vmatprep.subr.bf16.mxu0 0
        %743 = vmatpush1.bf16.xpose.msra.mxu0 0
        %744 = vmatprep.subr.bf16.mxu0 0
        %745 = vmatpush1.bf16.xpose.msra.mxu0 0
        %746 = vmatprep.subr.bf16.mxu0 0
        %747 = vmatpush1.bf16.xpose.msra.mxu0 0
        %748 = vmatprep.subr.bf16.mxu0 0
        %749 = vmatpush1.bf16.xpose.msra.mxu0 0
        %750 = vmatprep.subr.bf16.mxu0 0
        %751 = vmatpush1.bf16.xpose.msra.mxu0 0
        %752 = vmatprep.subr.bf16.mxu0 0
        %753 = vmatpush1.bf16.xpose.msra.mxu0 0
        %754 = vmatprep.mubr.bf16.mxu0 0
        %755 = vmatmul.mubr.bf16.gmra.mrb[0].mxu0 %v720
        %v756 = vpop.f32.mrb[0].mxu0
        %v757 = vadd.f32 0.0, %v756
        %v758 = vpop.f32.mrb[0].mxu0
        %v759 = vpop.f32.mrb[0].mxu0
        %v760 = vadd.f32 0.0, %v759
        %v761 = vpop.f32.mrb[0].mxu0
        %762 = vdwg.mxu0
        %v763 = vmul.f32 %v757, 0.17677669
        %v764 = vmul.f32 %v760, 0.17677669
        %v765 = vadd.f32 %v763, %v715
        %v766 = vadd.f32 %v764, %v716
        %vm767 = vcmask 130048
        %v768 = vsel %vm767, %v765, -inf
        %769 = vmax.xlane.f32.xlu0 %v768
        %v770 = vpop.xlane.xlu0 %769
        %v771 = vsel %vm767, %v766, -inf
        %772 = vmax.xlane.f32.xlu0 %v771
        %v773 = vpop.xlane.xlu0 %772
        %v774 = vsub.f32 %v765, %v770
        %v775 = vsub.f32 %v766, %v773
        %v776 = vmul.f32 %v774, 1.442695
        %v777 = vpow.pop %v776
        %v778 = vmul.f32 %v775, 1.442695
        %v779 = vpow.pop %v778
        %v780 = vsel %vm767, %v777, 0.0
        %781 = vadd.xlane.f32.xlu0 %v780
        %v782 = vpop.xlane.xlu0 %781
        %v783 = vsel %vm767, %v779, 0.0
        %784 = vadd.xlane.f32.xlu0 %v783
        %v785 = vpop.xlane.xlu0 %784
        %v786 = vrcp.pop %v782
        %v787 = vrcp.pop %v785
        %v788 = vmul.f32 %v777, %v786
        %v789 = vmul.f32 %v779, %v787
        %v790 = vpack.c.bf16 %v789, %v788
        %v792 = vsel %vm767, %v790, 0
        %794 = vmatprep.subr.bf16.mxu0 0
        %795 = vmatpush1.bf16.msra.mxu0 %v717
        %796 = vmatprep.subr.bf16.mxu0 0
        %797 = vmatpush1.bf16.msra.mxu0 0
        %798 = vmatprep.subr.bf16.mxu0 0
        %799 = vmatpush1.bf16.msra.mxu0 0
        %800 = vmatprep.subr.bf16.mxu0 0
        %801 = vmatpush1.bf16.msra.mxu0 0
        %802 = vmatprep.subr.bf16.mxu0 0
        %803 = vmatpush1.bf16.msra.mxu0 0
        %804 = vmatprep.subr.bf16.mxu0 0
        %805 = vmatpush1.bf16.msra.mxu0 0
        %806 = vmatprep.subr.bf16.mxu0 0
        %807 = vmatpush1.bf16.msra.mxu0 0
        %808 = vmatprep.subr.bf16.mxu0 0
        %809 = vmatpush1.bf16.msra.mxu0 0
        %810 = vmatprep.subr.bf16.mxu0 0
        %811 = vmatpush1.bf16.msra.mxu0 0
        %812 = vmatprep.subr.bf16.mxu0 0
        %813 = vmatpush1.bf16.msra.mxu0 0
        %814 = vmatprep.subr.bf16.mxu0 0
        %815 = vmatpush1.bf16.msra.mxu0 0
        %816 = vmatprep.subr.bf16.mxu0 0
        %817 = vmatpush1.bf16.msra.mxu0 0
        %818 = vmatprep.subr.bf16.mxu0 0
        %819 = vmatpush1.bf16.msra.mxu0 0
        %820 = vmatprep.subr.bf16.mxu0 0
        %821 = vmatpush1.bf16.msra.mxu0 0
        %822 = vmatprep.subr.bf16.mxu0 0
        %823 = vmatpush1.bf16.msra.mxu0 0
        %824 = vmatprep.subr.bf16.mxu0 0
        %825 = vmatpush1.bf16.msra.mxu0 0
        %826 = vmatprep.mubr.bf16.mxu0 0
        %827 = vmatmul.mubr.bf16.gmra.mrb[0].mxu0 %v792
        %v828 = vpop.f32.mrb[0].mxu0
        %v829 = vadd.f32 0.0, %v828
        %v830 = vpop.f32.mrb[0].mxu0
        %v831 = vpop.f32.mrb[0].mxu0
        %v832 = vadd.f32 0.0, %v831
        %v833 = vpop.f32.mrb[0].mxu0
        %834 = vdwg.mxu0
        %v835 = vpack.c.bf16 %v832, %v829
        %v836 = vld [vmem:[#allocation7] sm:$0xf]
        %v837 = vld [vmem:[#allocation7 + $0x4] sm:$0xf]
        %v838 = vld [vmem:[#allocation7 + $0x8] sm:$0xf]
        %v839 = vld [vmem:[#allocation7 + $0xc] sm:$0xf]
        %841 = vrot.lane.b32.xlu0 %v717, 96
        %v842 = vpop.permute.xlu0 %841
        %v844 = vsel %vm718, %v842, 0
        %846 = vmatprep.subr.bf16.mxu0 0
        %847 = vmatpush1.bf16.xpose.msra.mxu0 %v844
        %848 = vmatprep.subr.bf16.mxu0 0
        %849 = vmatpush1.bf16.xpose.msra.mxu0 0
        %850 = vmatprep.subr.bf16.mxu0 0
        %851 = vmatpush1.bf16.xpose.msra.mxu0 0
        %852 = vmatprep.subr.bf16.mxu0 0
        %853 = vmatpush1.bf16.xpose.msra.mxu0 0
        %854 = vmatprep.subr.bf16.mxu0 0
        %855 = vmatpush1.bf16.xpose.msra.mxu0 0
        %856 = vmatprep.subr.bf16.mxu0 0
        %857 = vmatpush1.bf16.xpose.msra.mxu0 0
        %858 = vmatprep.subr.bf16.mxu0 0
        %859 = vmatpush1.bf16.xpose.msra.mxu0 0
        %860 = vmatprep.subr.bf16.mxu0 0
        %861 = vmatpush1.bf16.xpose.msra.mxu0 0
        %862 = vmatprep.subr.bf16.mxu0 0
        %863 = vmatpush1.bf16.xpose.msra.mxu0 0
        %864 = vmatprep.subr.bf16.mxu0 0
        %865 = vmatpush1.bf16.xpose.msra.mxu0 0
        %866 = vmatprep.subr.bf16.mxu0 0
        %867 = vmatpush1.bf16.xpose.msra.mxu0 0
        %868 = vmatprep.subr.bf16.mxu0 0
        %869 = vmatpush1.bf16.xpose.msra.mxu0 0
        %870 = vmatprep.subr.bf16.mxu0 0
        %871 = vmatpush1.bf16.xpose.msra.mxu0 0
        %872 = vmatprep.subr.bf16.mxu0 0
        %873 = vmatpush1.bf16.xpose.msra.mxu0 0
        %874 = vmatprep.subr.bf16.mxu0 0
        %875 = vmatpush1.bf16.xpose.msra.mxu0 0
        %876 = vmatprep.subr.bf16.mxu0 0
        %877 = vmatpush1.bf16.xpose.msra.mxu0 0
        %878 = vmatprep.mubr.bf16.mxu0 0
        %879 = vmatmul.mubr.bf16.gmra.mrb[0].mxu0 %v844
        %v880 = vpop.f32.mrb[0].mxu0
        %v881 = vadd.f32 0.0, %v880
        %v882 = vpop.f32.mrb[0].mxu0
        %v883 = vpop.f32.mrb[0].mxu0
        %v884 = vadd.f32 0.0, %v883
        %v885 = vpop.f32.mrb[0].mxu0
        %886 = vdwg.mxu0
        %v887 = vmul.f32 %v881, 0.17677669
        %v888 = vmul.f32 %v884, 0.17677669
        %v889 = vadd.f32 %v887, %v715
        %v890 = vadd.f32 %v888, %v716
        %v891 = vsel %vm767, %v889, -inf
        %892 = vmax.xlane.f32.xlu0 %v891
        %v893 = vpop.xlane.xlu0 %892
        %v894 = vsel %vm767, %v890, -inf
        %895 = vmax.xlane.f32.xlu0 %v894
        %v896 = vpop.xlane.xlu0 %895
        %v897 = vsub.f32 %v889, %v893
        %v898 = vsub.f32 %v890, %v896
        %v899 = vmul.f32 %v897, 1.442695
        %v900 = vpow.pop %v899
        %v901 = vmul.f32 %v898, 1.442695
        %v902 = vpow.pop %v901
        %v903 = vsel %vm767, %v900, 0.0
        %904 = vadd.xlane.f32.xlu0 %v903
        %v905 = vpop.xlane.xlu0 %904
        %v906 = vsel %vm767, %v902, 0.0
        %907 = vadd.xlane.f32.xlu0 %v906
        %v908 = vpop.xlane.xlu0 %907
        %v909 = vrcp.pop %v905
        %v910 = vrcp.pop %v908
        %v911 = vmul.f32 %v900, %v909
        %v912 = vmul.f32 %v902, %v910
        %v913 = vpack.c.bf16 %v912, %v911
        %v916 = vsel %vm767, %v913, 0
        %918 = vmatprep.subr.bf16.mxu0 0
        %919 = vmatpush1.bf16.msra.mxu0 %v842
        %920 = vmatprep.subr.bf16.mxu0 0
        %921 = vmatpush1.bf16.msra.mxu0 0
        %922 = vmatprep.subr.bf16.mxu0 0
        %923 = vmatpush1.bf16.msra.mxu0 0
        %924 = vmatprep.subr.bf16.mxu0 0
        %925 = vmatpush1.bf16.msra.mxu0 0
        %926 = vmatprep.subr.bf16.mxu0 0
        %927 = vmatpush1.bf16.msra.mxu0 0
        %928 = vmatprep.subr.bf16.mxu0 0
        %929 = vmatpush1.bf16.msra.mxu0 0
        %930 = vmatprep.subr.bf16.mxu0 0
        %931 = vmatpush1.bf16.msra.mxu0 0
        %932 = vmatprep.subr.bf16.mxu0 0
        %933 = vmatpush1.bf16.msra.mxu0 0
        %934 = vmatprep.subr.bf16.mxu0 0
        %935 = vmatpush1.bf16.msra.mxu0 0
        %936 = vmatprep.subr.bf16.mxu0 0
        %937 = vmatpush1.bf16.msra.mxu0 0
        %938 = vmatprep.subr.bf16.mxu0 0
        %939 = vmatpush1.bf16.msra.mxu0 0
        %940 = vmatprep.subr.bf16.mxu0 0
        %941 = vmatpush1.bf16.msra.mxu0 0
        %942 = vmatprep.subr.bf16.mxu0 0
        %943 = vmatpush1.bf16.msra.mxu0 0
        %944 = vmatprep.subr.bf16.mxu0 0
        %945 = vmatpush1.bf16.msra.mxu0 0
        %946 = vmatprep.subr.bf16.mxu0 0
        %947 = vmatpush1.bf16.msra.mxu0 0
        %948 = vmatprep.subr.bf16.mxu0 0
        %949 = vmatpush1.bf16.msra.mxu0 0
        %950 = vmatprep.mubr.bf16.mxu0 0
        %951 = vmatmul.mubr.bf16.gmra.mrb[0].mxu0 %v916
        %v952 = vpop.f32.mrb[0].mxu0
        %v953 = vadd.f32 0.0, %v952
        %v954 = vpop.f32.mrb[0].mxu0
        %v955 = vpop.f32.mrb[0].mxu0
        %v956 = vadd.f32 0.0, %v955
        %v957 = vpop.f32.mrb[0].mxu0
        %958 = vdwg.mxu0
        %v959 = vpack.c.bf16 %v956, %v953
        %v960 = vld [vmem:[#allocation7 + $0x10] sm:$0xf]
        %v961 = vld [vmem:[#allocation7 + $0x14] sm:$0xf]
        %v962 = vld [vmem:[#allocation7 + $0x18] sm:$0xf]
        %v963 = vld [vmem:[#allocation7 + $0x1c] sm:$0xf]
        %v968 = vunpack.c.l.b16 %v960
        %v969 = vunpack.c.l.b16 %v961
        %v970 = vunpack.c.l.b16 %v962
        %v971 = vunpack.c.l.b16 %v963
        %v972 = vpack.c.b16 %v969, %v968
        %v973 = vpack.c.b16 %v971, %v970
        %v977 = vsel %vm718, %v959, 0
        %979 = vmatprep.subr.bf16.mxu0 0
        %980 = vmatpush1.bf16.msra.mxu0 %v972
        %981 = vmatprep.subr.bf16.mxu0 0
        %982 = vmatpush1.bf16.msra.mxu0 %v973
        %983 = vmatprep.subr.bf16.mxu0 0
        %984 = vmatpush1.bf16.msra.mxu0 0
        %985 = vmatprep.subr.bf16.mxu0 0
        %986 = vmatpush1.bf16.msra.mxu0 0
        %987 = vmatprep.subr.bf16.mxu0 0
        %988 = vmatpush1.bf16.msra.mxu0 0
        %989 = vmatprep.subr.bf16.mxu0 0
        %990 = vmatpush1.bf16.msra.mxu0 0
        %991 = vmatprep.subr.bf16.mxu0 0
        %992 = vmatpush1.bf16.msra.mxu0 0
        %993 = vmatprep.subr.bf16.mxu0 0
        %994 = vmatpush1.bf16.msra.mxu0 0
        %995 = vmatprep.subr.bf16.mxu0 0
        %996 = vmatpush1.bf16.msra.mxu0 0
        %997 = vmatprep.subr.bf16.mxu0 0
        %998 = vmatpush1.bf16.msra.mxu0 0
        %999 = vmatprep.subr.bf16.mxu0 0
        %1000 = vmatpush1.bf16.msra.mxu0 0
        %1001 = vmatprep.subr.bf16.mxu0 0
        %1002 = vmatpush1.bf16.msra.mxu0 0
        %1003 = vmatprep.subr.bf16.mxu0 0
        %1004 = vmatpush1.bf16.msra.mxu0 0
        %1005 = vmatprep.subr.bf16.mxu0 0
        %1006 = vmatpush1.bf16.msra.mxu0 0
        %1007 = vmatprep.subr.bf16.mxu0 0
        %1008 = vmatpush1.bf16.msra.mxu0 0
        %1009 = vmatprep.subr.bf16.mxu0 0
        %1010 = vmatpush1.bf16.msra.mxu0 0
        %1011 = vmatprep.mubr.bf16.mxu0 0
        %1012 = vmatmul.mubr.bf16.gmra.mrb[0].mxu0 %v977
        %v1013 = vpop.f32.mrb[0].mxu0
        %v1014 = vadd.f32 0.0, %v1013
        %v1015 = vpop.f32.mrb[0].mxu0
        %v1016 = vpop.f32.mrb[0].mxu0
        %v1017 = vadd.f32 0.0, %v1016
        %v1018 = vpop.f32.mrb[0].mxu0
        %1019 = vdwg.mxu0
        %v1024 = vunpack.c.l.b16 %v836
        %v1025 = vunpack.c.l.b16 %v837
        %v1026 = vunpack.c.l.b16 %v838
        %v1027 = vunpack.c.l.b16 %v839
        %v1028 = vpack.c.b16 %v1025, %v1024
        %v1029 = vpack.c.b16 %v1027, %v1026
        %v1033 = vsel %vm718, %v835, 0
        %1035 = vmatprep.subr.bf16.mxu0 0
        %1036 = vmatpush1.bf16.msra.mxu0 %v1028
        %1037 = vmatprep.subr.bf16.mxu0 0
        %1038 = vmatpush1.bf16.msra.mxu0 %v1029
        %1039 = vmatprep.subr.bf16.mxu0 0
        %1040 = vmatpush1.bf16.msra.mxu0 0
        %1041 = vmatprep.subr.bf16.mxu0 0
        %1042 = vmatpush1.bf16.msra.mxu0 0
        %1043 = vmatprep.subr.bf16.mxu0 0
        %1044 = vmatpush1.bf16.msra.mxu0 0
        %1045 = vmatprep.subr.bf16.mxu0 0
        %1046 = vmatpush1.bf16.msra.mxu0 0
        %1047 = vmatprep.subr.bf16.mxu0 0
        %1048 = vmatpush1.bf16.msra.mxu0 0
        %1049 = vmatprep.subr.bf16.mxu0 0
        %1050 = vmatpush1.bf16.msra.mxu0 0
        %1051 = vmatprep.subr.bf16.mxu0 0
        %1052 = vmatpush1.bf16.msra.mxu0 0
        %1053 = vmatprep.subr.bf16.mxu0 0
        %1054 = vmatpush1.bf16.msra.mxu0 0
        %1055 = vmatprep.subr.bf16.mxu0 0
        %1056 = vmatpush1.bf16.msra.mxu0 0
        %1057 = vmatprep.subr.bf16.mxu0 0
        %1058 = vmatpush1.bf16.msra.mxu0 0
        %1059 = vmatprep.subr.bf16.mxu0 0
        %1060 = vmatpush1.bf16.msra.mxu0 0
        %1061 = vmatprep.subr.bf16.mxu0 0
        %1062 = vmatpush1.bf16.msra.mxu0 0
        %1063 = vmatprep.subr.bf16.mxu0 0
        %1064 = vmatpush1.bf16.msra.mxu0 0
        %1065 = vmatprep.subr.bf16.mxu0 0
        %1066 = vmatpush1.bf16.msra.mxu0 0
        %1067 = vmatprep.mubr.bf16.mxu0 0
        %1068 = vmatmul.mubr.bf16.gmra.mrb[0].mxu0 %v1033
        %v1069 = vpop.f32.mrb[0].mxu0
        %v1070 = vadd.f32 %v1014, %v1069
        %v1071 = vpop.f32.mrb[0].mxu0
        %v1072 = vpop.f32.mrb[0].mxu0
        %v1073 = vadd.f32 %v1017, %v1072
        %v1074 = vpop.f32.mrb[0].mxu0
        %1075 = vdwg.mxu0
        %1076 = vrot.lane.b32.xlu0 %v717, 64
        %v1077 = vpop.permute.xlu0 %1076
        %v1079 = vsel %vm718, %v1077, 0
        %1081 = vmatprep.subr.bf16.mxu0 0
        %1082 = vmatpush1.bf16.xpose.msra.mxu0 %v1079
        %1083 = vmatprep.subr.bf16.mxu0 0
        %1084 = vmatpush1.bf16.xpose.msra.mxu0 0
        %1085 = vmatprep.subr.bf16.mxu0 0
        %1086 = vmatpush1.bf16.xpose.msra.mxu0 0
        %1087 = vmatprep.subr.bf16.mxu0 0
        %1088 = vmatpush1.bf16.xpose.msra.mxu0 0
        %1089 = vmatprep.subr.bf16.mxu0 0
        %1090 = vmatpush1.bf16.xpose.msra.mxu0 0
        %1091 = vmatprep.subr.bf16.mxu0 0
        %1092 = vmatpush1.bf16.xpose.msra.mxu0 0
        %1093 = vmatprep.subr.bf16.mxu0 0
        %1094 = vmatpush1.bf16.xpose.msra.mxu0 0
        %1095 = vmatprep.subr.bf16.mxu0 0
        %1096 = vmatpush1.bf16.xpose.msra.mxu0 0
        %1097 = vmatprep.subr.bf16.mxu0 0
        %1098 = vmatpush1.bf16.xpose.msra.mxu0 0
        %1099 = vmatprep.subr.bf16.mxu0 0
        %1100 = vmatpush1.bf16.xpose.msra.mxu0 0
        %1101 = vmatprep.subr.bf16.mxu0 0
        %1102 = vmatpush1.bf16.xpose.msra.mxu0 0
        %1103 = vmatprep.subr.bf16.mxu0 0
        %1104 = vmatpush1.bf16.xpose.msra.mxu0 0
        %1105 = vmatprep.subr.bf16.mxu0 0
        %1106 = vmatpush1.bf16.xpose.msra.mxu0 0
        %1107 = vmatprep.subr.bf16.mxu0 0
        %1108 = vmatpush1.bf16.xpose.msra.mxu0 0
        %1109 = vmatprep.subr.bf16.mxu0 0
        %1110 = vmatpush1.bf16.xpose.msra.mxu0 0
        %1111 = vmatprep.subr.bf16.mxu0 0
        %1112 = vmatpush1.bf16.xpose.msra.mxu0 0
        %1113 = vmatprep.mubr.bf16.mxu0 0
        %1114 = vmatmul.mubr.bf16.gmra.mrb[0].mxu0 %v1079
        %v1115 = vpop.f32.mrb[0].mxu0
        %v1116 = vadd.f32 0.0, %v1115
        %v1117 = vpop.f32.mrb[0].mxu0
        %v1118 = vpop.f32.mrb[0].mxu0
        %v1119 = vadd.f32 0.0, %v1118
        %v1120 = vpop.f32.mrb[0].mxu0
        %1121 = vdwg.mxu0
        %v1122 = vmul.f32 %v1116, 0.17677669
        %v1123 = vmul.f32 %v1119, 0.17677669
        %v1124 = vadd.f32 %v1122, %v715
        %v1125 = vadd.f32 %v1123, %v716
        %v1126 = vsel %vm767, %v1124, -inf
        %1127 = vmax.xlane.f32.xlu0 %v1126
        %v1128 = vpop.xlane.xlu0 %1127
        %v1129 = vsel %vm767, %v1125, -inf
        %1130 = vmax.xlane.f32.xlu0 %v1129
        %v1131 = vpop.xlane.xlu0 %1130
        %v1132 = vsub.f32 %v1124, %v1128
        %v1133 = vsub.f32 %v1125, %v1131
        %v1134 = vmul.f32 %v1132, 1.442695
        %v1135 = vpow.pop %v1134
        %v1136 = vmul.f32 %v1133, 1.442695
        %v1137 = vpow.pop %v1136
        %v1138 = vsel %vm767, %v1135, 0.0
        %1139 = vadd.xlane.f32.xlu0 %v1138
        %v1140 = vpop.xlane.xlu0 %1139
        %v1141 = vsel %vm767, %v1137, 0.0
        %1142 = vadd.xlane.f32.xlu0 %v1141
        %v1143 = vpop.xlane.xlu0 %1142
        %v1144 = vrcp.pop %v1140
        %v1145 = vrcp.pop %v1143
        %v1146 = vmul.f32 %v1135, %v1144
        %v1147 = vmul.f32 %v1137, %v1145
        %v1148 = vpack.c.bf16 %v1147, %v1146
        %v1151 = vsel %vm767, %v1148, 0
        %1153 = vmatprep.subr.bf16.mxu0 0
        %1154 = vmatpush1.bf16.msra.mxu0 %v1077
        %1155 = vmatprep.subr.bf16.mxu0 0
        %1156 = vmatpush1.bf16.msra.mxu0 0
        %1157 = vmatprep.subr.bf16.mxu0 0
        %1158 = vmatpush1.bf16.msra.mxu0 0
        %1159 = vmatprep.subr.bf16.mxu0 0
        %1160 = vmatpush1.bf16.msra.mxu0 0
        %1161 = vmatprep.subr.bf16.mxu0 0
        %1162 = vmatpush1.bf16.msra.mxu0 0
        %1163 = vmatprep.subr.bf16.mxu0 0
        %1164 = vmatpush1.bf16.msra.mxu0 0
        %1165 = vmatprep.subr.bf16.mxu0 0
        %1166 = vmatpush1.bf16.msra.mxu0 0
        %1167 = vmatprep.subr.bf16.mxu0 0
        %1168 = vmatpush1.bf16.msra.mxu0 0
        %1169 = vmatprep.subr.bf16.mxu0 0
        %1170 = vmatpush1.bf16.msra.mxu0 0
        %1171 = vmatprep.subr.bf16.mxu0 0
        %1172 = vmatpush1.bf16.msra.mxu0 0
        %1173 = vmatprep.subr.bf16.mxu0 0
        %1174 = vmatpush1.bf16.msra.mxu0 0
        %1175 = vmatprep.subr.bf16.mxu0 0
        %1176 = vmatpush1.bf16.msra.mxu0 0
        %1177 = vmatprep.subr.bf16.mxu0 0
        %1178 = vmatpush1.bf16.msra.mxu0 0
        %1179 = vmatprep.subr.bf16.mxu0 0
        %1180 = vmatpush1.bf16.msra.mxu0 0
        %1181 = vmatprep.subr.bf16.mxu0 0
        %1182 = vmatpush1.bf16.msra.mxu0 0
        %1183 = vmatprep.subr.bf16.mxu0 0
        %1184 = vmatpush1.bf16.msra.mxu0 0
        %1185 = vmatprep.mubr.bf16.mxu0 0
        %1186 = vmatmul.mubr.bf16.gmra.mrb[0].mxu0 %v1151
        %v1187 = vpop.f32.mrb[0].mxu0
        %v1188 = vadd.f32 0.0, %v1187
        %v1189 = vpop.f32.mrb[0].mxu0
        %v1190 = vpop.f32.mrb[0].mxu0
        %v1191 = vadd.f32 0.0, %v1190
        %v1192 = vpop.f32.mrb[0].mxu0
        %1193 = vdwg.mxu0
        %v1194 = vpack.c.bf16 %v1191, %v1188
        %v1195 = vld [vmem:[#allocation7 + $0x20] sm:$0xf]
        %v1196 = vld [vmem:[#allocation7 + $0x24] sm:$0xf]
        %v1197 = vld [vmem:[#allocation7 + $0x28] sm:$0xf]
        %v1198 = vld [vmem:[#allocation7 + $0x2c] sm:$0xf]
        %v1203 = vunpack.c.l.b16 %v1195
        %v1204 = vunpack.c.l.b16 %v1196
        %v1205 = vunpack.c.l.b16 %v1197
        %v1206 = vunpack.c.l.b16 %v1198
        %v1207 = vpack.c.b16 %v1204, %v1203
        %v1208 = vpack.c.b16 %v1206, %v1205
        %v1212 = vsel %vm718, %v1194, 0
        %1214 = vmatprep.subr.bf16.mxu0 0
        %1215 = vmatpush1.bf16.msra.mxu0 %v1207
        %1216 = vmatprep.subr.bf16.mxu0 0
        %1217 = vmatpush1.bf16.msra.mxu0 %v1208
        %1218 = vmatprep.subr.bf16.mxu0 0
        %1219 = vmatpush1.bf16.msra.mxu0 0
        %1220 = vmatprep.subr.bf16.mxu0 0
        %1221 = vmatpush1.bf16.msra.mxu0 0
        %1222 = vmatprep.subr.bf16.mxu0 0
        %1223 = vmatpush1.bf16.msra.mxu0 0
        %1224 = vmatprep.subr.bf16.mxu0 0
        %1225 = vmatpush1.bf16.msra.mxu0 0
        %1226 = vmatprep.subr.bf16.mxu0 0
        %1227 = vmatpush1.bf16.msra.mxu0 0
        %1228 = vmatprep.subr.bf16.mxu0 0
        %1229 = vmatpush1.bf16.msra.mxu0 0
        %1230 = vmatprep.subr.bf16.mxu0 0
        %1231 = vmatpush1.bf16.msra.mxu0 0
        %1232 = vmatprep.subr.bf16.mxu0 0
        %1233 = vmatpush1.bf16.msra.mxu0 0
        %1234 = vmatprep.subr.bf16.mxu0 0
        %1235 = vmatpush1.bf16.msra.mxu0 0
        %1236 = vmatprep.subr.bf16.mxu0 0
        %1237 = vmatpush1.bf16.msra.mxu0 0
        %1238 = vmatprep.subr.bf16.mxu0 0
        %1239 = vmatpush1.bf16.msra.mxu0 0
        %1240 = vmatprep.subr.bf16.mxu0 0
        %1241 = vmatpush1.bf16.msra.mxu0 0
        %1242 = vmatprep.subr.bf16.mxu0 0
        %1243 = vmatpush1.bf16.msra.mxu0 0
        %1244 = vmatprep.subr.bf16.mxu0 0
        %1245 = vmatpush1.bf16.msra.mxu0 0
        %1246 = vmatprep.mubr.bf16.mxu0 0
        %1247 = vmatmul.mubr.bf16.gmra.mrb[0].mxu0 %v1212
        %v1248 = vpop.f32.mrb[0].mxu0
        %v1249 = vadd.f32 0.0, %v1248
        %v1250 = vpop.f32.mrb[0].mxu0
        %v1251 = vpop.f32.mrb[0].mxu0
        %v1252 = vadd.f32 0.0, %v1251
        %v1253 = vpop.f32.mrb[0].mxu0
        %1254 = vdwg.mxu0
        %v1255 = vadd.f32 %v1070, %v1249
        %v1256 = vadd.f32 %v1073, %v1252
        %1257 = vrot.lane.b32.xlu0 %v717, 32
        %v1258 = vpop.permute.xlu0 %1257
        %v1260 = vsel %vm718, %v1258, 0
        %1262 = vmatprep.subr.bf16.mxu0 0
        %1263 = vmatpush1.bf16.xpose.msra.mxu0 %v1260
        %1264 = vmatprep.subr.bf16.mxu0 0
        %1265 = vmatpush1.bf16.xpose.msra.mxu0 0
        %1266 = vmatprep.subr.bf16.mxu0 0
        %1267 = vmatpush1.bf16.xpose.msra.mxu0 0
        %1268 = vmatprep.subr.bf16.mxu0 0
        %1269 = vmatpush1.bf16.xpose.msra.mxu0 0
        %1270 = vmatprep.subr.bf16.mxu0 0
        %1271 = vmatpush1.bf16.xpose.msra.mxu0 0
        %1272 = vmatprep.subr.bf16.mxu0 0
        %1273 = vmatpush1.bf16.xpose.msra.mxu0 0
        %1274 = vmatprep.subr.bf16.mxu0 0
        %1275 = vmatpush1.bf16.xpose.msra.mxu0 0
        %1276 = vmatprep.subr.bf16.mxu0 0
        %1277 = vmatpush1.bf16.xpose.msra.mxu0 0
        %1278 = vmatprep.subr.bf16.mxu0 0
        %1279 = vmatpush1.bf16.xpose.msra.mxu0 0
        %1280 = vmatprep.subr.bf16.mxu0 0
        %1281 = vmatpush1.bf16.xpose.msra.mxu0 0
        %1282 = vmatprep.subr.bf16.mxu0 0
        %1283 = vmatpush1.bf16.xpose.msra.mxu0 0
        %1284 = vmatprep.subr.bf16.mxu0 0
        %1285 = vmatpush1.bf16.xpose.msra.mxu0 0
        %1286 = vmatprep.subr.bf16.mxu0 0
        %1287 = vmatpush1.bf16.xpose.msra.mxu0 0
        %1288 = vmatprep.subr.bf16.mxu0 0
        %1289 = vmatpush1.bf16.xpose.msra.mxu0 0
        %1290 = vmatprep.subr.bf16.mxu0 0
        %1291 = vmatpush1.bf16.xpose.msra.mxu0 0
        %1292 = vmatprep.subr.bf16.mxu0 0
        %1293 = vmatpush1.bf16.xpose.msra.mxu0 0
        %1294 = vmatprep.mubr.bf16.mxu0 0
        %1295 = vmatmul.mubr.bf16.gmra.mrb[0].mxu0 %v1260
        %v1296 = vpop.f32.mrb[0].mxu0
        %v1297 = vadd.f32 0.0, %v1296
        %v1298 = vpop.f32.mrb[0].mxu0
        %v1299 = vpop.f32.mrb[0].mxu0
        %v1300 = vadd.f32 0.0, %v1299
        %v1301 = vpop.f32.mrb[0].mxu0
        %1302 = vdwg.mxu0
        %v1303 = vmul.f32 %v1297, 0.17677669
        %v1304 = vmul.f32 %v1300, 0.17677669
        %v1305 = vadd.f32 %v1303, %v715
        %v1306 = vadd.f32 %v1304, %v716
        %v1307 = vsel %vm767, %v1305, -inf
        %1308 = vmax.xlane.f32.xlu0 %v1307
        %v1309 = vpop.xlane.xlu0 %1308
        %v1310 = vsel %vm767, %v1306, -inf
        %1311 = vmax.xlane.f32.xlu0 %v1310
        %v1312 = vpop.xlane.xlu0 %1311
        %v1313 = vsub.f32 %v1305, %v1309
        %v1314 = vsub.f32 %v1306, %v1312
        %v1315 = vmul.f32 %v1313, 1.442695
        %v1316 = vpow.pop %v1315
        %v1317 = vmul.f32 %v1314, 1.442695
        %v1318 = vpow.pop %v1317
        %v1319 = vsel %vm767, %v1316, 0.0
        %1320 = vadd.xlane.f32.xlu0 %v1319
        %v1321 = vpop.xlane.xlu0 %1320
        %v1322 = vsel %vm767, %v1318, 0.0
        %1323 = vadd.xlane.f32.xlu0 %v1322
        %v1324 = vpop.xlane.xlu0 %1323
        %v1325 = vrcp.pop %v1321
        %v1326 = vrcp.pop %v1324
        %v1327 = vmul.f32 %v1316, %v1325
        %v1328 = vmul.f32 %v1318, %v1326
        %v1329 = vpack.c.bf16 %v1328, %v1327
        %v1332 = vsel %vm767, %v1329, 0
        %1334 = vmatprep.subr.bf16.mxu0 0
        %1335 = vmatpush1.bf16.msra.mxu0 %v1258
        %1336 = vmatprep.subr.bf16.mxu0 0
        %1337 = vmatpush1.bf16.msra.mxu0 0
        %1338 = vmatprep.subr.bf16.mxu0 0
        %1339 = vmatpush1.bf16.msra.mxu0 0
        %1340 = vmatprep.subr.bf16.mxu0 0
        %1341 = vmatpush1.bf16.msra.mxu0 0
        %1342 = vmatprep.subr.bf16.mxu0 0
        %1343 = vmatpush1.bf16.msra.mxu0 0
        %1344 = vmatprep.subr.bf16.mxu0 0
        %1345 = vmatpush1.bf16.msra.mxu0 0
        %1346 = vmatprep.subr.bf16.mxu0 0
        %1347 = vmatpush1.bf16.msra.mxu0 0
        %1348 = vmatprep.subr.bf16.mxu0 0
        %1349 = vmatpush1.bf16.msra.mxu0 0
        %1350 = vmatprep.subr.bf16.mxu0 0
        %1351 = vmatpush1.bf16.msra.mxu0 0
        %1352 = vmatprep.subr.bf16.mxu0 0
        %1353 = vmatpush1.bf16.msra.mxu0 0
        %1354 = vmatprep.subr.bf16.mxu0 0
        %1355 = vmatpush1.bf16.msra.mxu0 0
        %1356 = vmatprep.subr.bf16.mxu0 0
        %1357 = vmatpush1.bf16.msra.mxu0 0
        %1358 = vmatprep.subr.bf16.mxu0 0
        %1359 = vmatpush1.bf16.msra.mxu0 0
        %1360 = vmatprep.subr.bf16.mxu0 0
        %1361 = vmatpush1.bf16.msra.mxu0 0
        %1362 = vmatprep.subr.bf16.mxu0 0
        %1363 = vmatpush1.bf16.msra.mxu0 0
        %1364 = vmatprep.subr.bf16.mxu0 0
        %1365 = vmatpush1.bf16.msra.mxu0 0
        %1366 = vmatprep.mubr.bf16.mxu0 0
        %1367 = vmatmul.mubr.bf16.gmra.mrb[0].mxu0 %v1332
        %v1368 = vpop.f32.mrb[0].mxu0
        %v1369 = vadd.f32 0.0, %v1368
        %v1370 = vpop.f32.mrb[0].mxu0
        %v1371 = vpop.f32.mrb[0].mxu0
        %v1372 = vadd.f32 0.0, %v1371
        %v1373 = vpop.f32.mrb[0].mxu0
        %1374 = vdwg.mxu0
        %v1375 = vpack.c.bf16 %v1372, %v1369
        %v1376 = vld [vmem:[#allocation7 + $0x30] sm:$0xf]
        %v1377 = vld [vmem:[#allocation7 + $0x34] sm:$0xf]
        %v1378 = vld [vmem:[#allocation7 + $0x38] sm:$0xf]
        %v1379 = vld [vmem:[#allocation7 + $0x3c] sm:$0xf]
        %v1384 = vunpack.c.l.b16 %v1376
        %v1385 = vunpack.c.l.b16 %v1377
        %v1386 = vunpack.c.l.b16 %v1378
        %v1387 = vunpack.c.l.b16 %v1379
        %v1388 = vpack.c.b16 %v1385, %v1384
        %v1389 = vpack.c.b16 %v1387, %v1386
        %v1393 = vsel %vm718, %v1375, 0
        %1395 = vmatprep.subr.bf16.mxu0 0
        %1396 = vmatpush1.bf16.msra.mxu0 %v1388
        %1397 = vmatprep.subr.bf16.mxu0 0
        %1398 = vmatpush1.bf16.msra.mxu0 %v1389
        %1399 = vmatprep.subr.bf16.mxu0 0
        %1400 = vmatpush1.bf16.msra.mxu0 0
        %1401 = vmatprep.subr.bf16.mxu0 0
        %1402 = vmatpush1.bf16.msra.mxu0 0
        %1403 = vmatprep.subr.bf16.mxu0 0
        %1404 = vmatpush1.bf16.msra.mxu0 0
        %1405 = vmatprep.subr.bf16.mxu0 0
        %1406 = vmatpush1.bf16.msra.mxu0 0
        %1407 = vmatprep.subr.bf16.mxu0 0
        %1408 = vmatpush1.bf16.msra.mxu0 0
        %1409 = vmatprep.subr.bf16.mxu0 0
        %1410 = vmatpush1.bf16.msra.mxu0 0
        %1411 = vmatprep.subr.bf16.mxu0 0
        %1412 = vmatpush1.bf16.msra.mxu0 0
        %1413 = vmatprep.subr.bf16.mxu0 0
        %1414 = vmatpush1.bf16.msra.mxu0 0
        %1415 = vmatprep.subr.bf16.mxu0 0
        %1416 = vmatpush1.bf16.msra.mxu0 0
        %1417 = vmatprep.subr.bf16.mxu0 0
        %1418 = vmatpush1.bf16.msra.mxu0 0
        %1419 = vmatprep.subr.bf16.mxu0 0
        %1420 = vmatpush1.bf16.msra.mxu0 0
        %1421 = vmatprep.subr.bf16.mxu0 0
        %1422 = vmatpush1.bf16.msra.mxu0 0
        %1423 = vmatprep.subr.bf16.mxu0 0
        %1424 = vmatpush1.bf16.msra.mxu0 0
        %1425 = vmatprep.subr.bf16.mxu0 0
        %1426 = vmatpush1.bf16.msra.mxu0 0
        %1427 = vmatprep.mubr.bf16.mxu0 0
        %1428 = vmatmul.mubr.bf16.gmra.mrb[0].mxu0 %v1393
        %v1429 = vpop.f32.mrb[0].mxu0
        %v1430 = vadd.f32 0.0, %v1429
        %v1431 = vpop.f32.mrb[0].mxu0
        %v1432 = vpop.f32.mrb[0].mxu0
        %v1433 = vadd.f32 0.0, %v1432
        %v1434 = vpop.f32.mrb[0].mxu0
        %1435 = vdwg.mxu0
        %v1436 = vadd.f32 %v1255, %v1430
        %v1437 = vadd.f32 %v1256, %v1433
        %v1438 = vpack.c.bf16 %v705, %v702
        %v1440 = vsel %vm718, %v1438, 0
        %1442 = vmatprep.subr.bf16.mxu0 0
        %1443 = vmatpush1.bf16.xpose.msra.mxu0 %v1440
        %1444 = vmatprep.subr.bf16.mxu0 0
        %1445 = vmatpush1.bf16.xpose.msra.mxu0 0
        %1446 = vmatprep.subr.bf16.mxu0 0
        %1447 = vmatpush1.bf16.xpose.msra.mxu0 0
        %1448 = vmatprep.subr.bf16.mxu0 0
        %1449 = vmatpush1.bf16.xpose.msra.mxu0 0
        %1450 = vmatprep.subr.bf16.mxu0 0
        %1451 = vmatpush1.bf16.xpose.msra.mxu0 0
        %1452 = vmatprep.subr.bf16.mxu0 0
        %1453 = vmatpush1.bf16.xpose.msra.mxu0 0
        %1454 = vmatprep.subr.bf16.mxu0 0
        %1455 = vmatpush1.bf16.xpose.msra.mxu0 0
        %1456 = vmatprep.subr.bf16.mxu0 0
        %1457 = vmatpush1.bf16.xpose.msra.mxu0 0
        %1458 = vmatprep.subr.bf16.mxu0 0
        %1459 = vmatpush1.bf16.xpose.msra.mxu0 0
        %1460 = vmatprep.subr.bf16.mxu0 0
        %1461 = vmatpush1.bf16.xpose.msra.mxu0 0
        %1462 = vmatprep.subr.bf16.mxu0 0
        %1463 = vmatpush1.bf16.xpose.msra.mxu0 0
        %1464 = vmatprep.subr.bf16.mxu0 0
        %1465 = vmatpush1.bf16.xpose.msra.mxu0 0
        %1466 = vmatprep.subr.bf16.mxu0 0
        %1467 = vmatpush1.bf16.xpose.msra.mxu0 0
        %1468 = vmatprep.subr.bf16.mxu0 0
        %1469 = vmatpush1.bf16.xpose.msra.mxu0 0
        %1470 = vmatprep.subr.bf16.mxu0 0
        %1471 = vmatpush1.bf16.xpose.msra.mxu0 0
        %1472 = vmatprep.subr.bf16.mxu0 0
        %1473 = vmatpush1.bf16.xpose.msra.mxu0 0
        %1474 = vmatprep.mubr.bf16.mxu0 0
        %1475 = vmatmul.mubr.bf16.gmra.mrb[0].mxu0 %v1440
        %v1476 = vpop.f32.mrb[0].mxu0
        %v1477 = vadd.f32 0.0, %v1476
        %v1478 = vpop.f32.mrb[0].mxu0
        %v1479 = vpop.f32.mrb[0].mxu0
        %v1480 = vadd.f32 0.0, %v1479
        %v1481 = vpop.f32.mrb[0].mxu0
        %1482 = vdwg.mxu0
        %v1483 = vmul.f32 %v1477, 0.17677669
        %v1484 = vmul.f32 %v1480, 0.17677669
        %v1485 = vadd.f32 %v1483, %v715
        %v1486 = vadd.f32 %v1484, %v716
        %v1487 = vsel %vm767, %v1485, -inf
        %1488 = vmax.xlane.f32.xlu0 %v1487
        %v1489 = vpop.xlane.xlu0 %1488
        %v1490 = vsel %vm767, %v1486, -inf
        %1491 = vmax.xlane.f32.xlu0 %v1490
        %v1492 = vpop.xlane.xlu0 %1491
        %v1493 = vsub.f32 %v1485, %v1489
        %v1494 = vsub.f32 %v1486, %v1492
        %v1495 = vmul.f32 %v1493, 1.442695
        %v1496 = vpow.pop %v1495
        %v1497 = vmul.f32 %v1494, 1.442695
        %v1498 = vpow.pop %v1497
        %v1499 = vsel %vm767, %v1496, 0.0
        %1500 = vadd.xlane.f32.xlu0 %v1499
        %v1501 = vpop.xlane.xlu0 %1500
        %v1502 = vsel %vm767, %v1498, 0.0
        %1503 = vadd.xlane.f32.xlu0 %v1502
        %v1504 = vpop.xlane.xlu0 %1503
        %v1505 = vrcp.pop %v1501
        %v1506 = vrcp.pop %v1504
        %v1507 = vmul.f32 %v1496, %v1505
        %v1508 = vmul.f32 %v1498, %v1506
        %v1509 = vpack.c.bf16 %v1508, %v1507
        %v1511 = vsel %vm767, %v1509, 0
        %1513 = vmatprep.subr.bf16.mxu0 0
        %1514 = vmatpush1.bf16.msra.mxu0 %v1438
        %1515 = vmatprep.subr.bf16.mxu0 0
        %1516 = vmatpush1.bf16.msra.mxu0 0
        %1517 = vmatprep.subr.bf16.mxu0 0
        %1518 = vmatpush1.bf16.msra.mxu0 0
        %1519 = vmatprep.subr.bf16.mxu0 0
        %1520 = vmatpush1.bf16.msra.mxu0 0
        %1521 = vmatprep.subr.bf16.mxu0 0
        %1522 = vmatpush1.bf16.msra.mxu0 0
        %1523 = vmatprep.subr.bf16.mxu0 0
        %1524 = vmatpush1.bf16.msra.mxu0 0
        %1525 = vmatprep.subr.bf16.mxu0 0
        %1526 = vmatpush1.bf16.msra.mxu0 0
        %1527 = vmatprep.subr.bf16.mxu0 0
        %1528 = vmatpush1.bf16.msra.mxu0 0
        %1529 = vmatprep.subr.bf16.mxu0 0
        %1530 = vmatpush1.bf16.msra.mxu0 0
        %1531 = vmatprep.subr.bf16.mxu0 0
        %1532 = vmatpush1.bf16.msra.mxu0 0
        %1533 = vmatprep.subr.bf16.mxu0 0
        %1534 = vmatpush1.bf16.msra.mxu0 0
        %1535 = vmatprep.subr.bf16.mxu0 0
        %1536 = vmatpush1.bf16.msra.mxu0 0
        %1537 = vmatprep.subr.bf16.mxu0 0
        %1538 = vmatpush1.bf16.msra.mxu0 0
        %1539 = vmatprep.subr.bf16.mxu0 0
        %1540 = vmatpush1.bf16.msra.mxu0 0
        %1541 = vmatprep.subr.bf16.mxu0 0
        %1542 = vmatpush1.bf16.msra.mxu0 0
        %1543 = vmatprep.subr.bf16.mxu0 0
        %1544 = vmatpush1.bf16.msra.mxu0 0
        %1545 = vmatprep.mubr.bf16.mxu0 0
        %1546 = vmatmul.mubr.bf16.gmra.mrb[0].mxu0 %v1511
        %v1547 = vpop.f32.mrb[0].mxu0
        %v1548 = vadd.f32 0.0, %v1547
        %v1549 = vpop.f32.mrb[0].mxu0
        %v1550 = vpop.f32.mrb[0].mxu0
        %v1551 = vadd.f32 0.0, %v1550
        %v1552 = vpop.f32.mrb[0].mxu0
        %1553 = vdwg.mxu0
        %v1554 = vpack.c.bf16 %v1551, %v1548
        %1556 = vrot.lane.b32.xlu0 %v1438, 96
        %v1557 = vpop.permute.xlu0 %1556
        %v1559 = vsel %vm718, %v1557, 0
        %1561 = vmatprep.subr.bf16.mxu0 0
        %1562 = vmatpush1.bf16.xpose.msra.mxu0 %v1559
        %1563 = vmatprep.subr.bf16.mxu0 0
        %1564 = vmatpush1.bf16.xpose.msra.mxu0 0
        %1565 = vmatprep.subr.bf16.mxu0 0
        %1566 = vmatpush1.bf16.xpose.msra.mxu0 0
        %1567 = vmatprep.subr.bf16.mxu0 0
        %1568 = vmatpush1.bf16.xpose.msra.mxu0 0
        %1569 = vmatprep.subr.bf16.mxu0 0
        %1570 = vmatpush1.bf16.xpose.msra.mxu0 0
        %1571 = vmatprep.subr.bf16.mxu0 0
        %1572 = vmatpush1.bf16.xpose.msra.mxu0 0
        %1573 = vmatprep.subr.bf16.mxu0 0
        %1574 = vmatpush1.bf16.xpose.msra.mxu0 0
        %1575 = vmatprep.subr.bf16.mxu0 0
        %1576 = vmatpush1.bf16.xpose.msra.mxu0 0
        %1577 = vmatprep.subr.bf16.mxu0 0
        %1578 = vmatpush1.bf16.xpose.msra.mxu0 0
        %1579 = vmatprep.subr.bf16.mxu0 0
        %1580 = vmatpush1.bf16.xpose.msra.mxu0 0
        %1581 = vmatprep.subr.bf16.mxu0 0
        %1582 = vmatpush1.bf16.xpose.msra.mxu0 0
        %1583 = vmatprep.subr.bf16.mxu0 0
        %1584 = vmatpush1.bf16.xpose.msra.mxu0 0
        %1585 = vmatprep.subr.bf16.mxu0 0
        %1586 = vmatpush1.bf16.xpose.msra.mxu0 0
        %1587 = vmatprep.subr.bf16.mxu0 0
        %1588 = vmatpush1.bf16.xpose.msra.mxu0 0
        %1589 = vmatprep.subr.bf16.mxu0 0
        %1590 = vmatpush1.bf16.xpose.msra.mxu0 0
        %1591 = vmatprep.subr.bf16.mxu0 0
        %1592 = vmatpush1.bf16.xpose.msra.mxu0 0
        %1593 = vmatprep.mubr.bf16.mxu0 0
        %1594 = vmatmul.mubr.bf16.gmra.mrb[0].mxu0 %v1559
        %v1595 = vpop.f32.mrb[0].mxu0
        %v1596 = vadd.f32 0.0, %v1595
        %v1597 = vpop.f32.mrb[0].mxu0
        %v1598 = vpop.f32.mrb[0].mxu0
        %v1599 = vadd.f32 0.0, %v1598
        %v1600 = vpop.f32.mrb[0].mxu0
        %1601 = vdwg.mxu0
        %v1602 = vmul.f32 %v1596, 0.17677669
        %v1603 = vmul.f32 %v1599, 0.17677669
        %v1604 = vadd.f32 %v1602, %v715
        %v1605 = vadd.f32 %v1603, %v716
        %v1606 = vsel %vm767, %v1604, -inf
        %1607 = vmax.xlane.f32.xlu0 %v1606
        %v1608 = vpop.xlane.xlu0 %1607
        %v1609 = vsel %vm767, %v1605, -inf
        %1610 = vmax.xlane.f32.xlu0 %v1609
        %v1611 = vpop.xlane.xlu0 %1610
        %v1612 = vsub.f32 %v1604, %v1608
        %v1613 = vsub.f32 %v1605, %v1611
        %v1614 = vmul.f32 %v1612, 1.442695
        %v1615 = vpow.pop %v1614
        %v1616 = vmul.f32 %v1613, 1.442695
        %v1617 = vpow.pop %v1616
        %v1618 = vsel %vm767, %v1615, 0.0
        %1619 = vadd.xlane.f32.xlu0 %v1618
        %v1620 = vpop.xlane.xlu0 %1619
        %v1621 = vsel %vm767, %v1617, 0.0
        %1622 = vadd.xlane.f32.xlu0 %v1621
        %v1623 = vpop.xlane.xlu0 %1622
        %v1624 = vrcp.pop %v1620
        %v1625 = vrcp.pop %v1623
        %v1626 = vmul.f32 %v1615, %v1624
        %v1627 = vmul.f32 %v1617, %v1625
        %v1628 = vpack.c.bf16 %v1627, %v1626
        %v1631 = vsel %vm767, %v1628, 0
        %1633 = vmatprep.subr.bf16.mxu0 0
        %1634 = vmatpush1.bf16.msra.mxu0 %v1557
        %1635 = vmatprep.subr.bf16.mxu0 0
        %1636 = vmatpush1.bf16.msra.mxu0 0
        %1637 = vmatprep.subr.bf16.mxu0 0
        %1638 = vmatpush1.bf16.msra.mxu0 0
        %1639 = vmatprep.subr.bf16.mxu0 0
        %1640 = vmatpush1.bf16.msra.mxu0 0
        %1641 = vmatprep.subr.bf16.mxu0 0
        %1642 = vmatpush1.bf16.msra.mxu0 0
        %1643 = vmatprep.subr.bf16.mxu0 0
        %1644 = vmatpush1.bf16.msra.mxu0 0
        %1645 = vmatprep.subr.bf16.mxu0 0
        %1646 = vmatpush1.bf16.msra.mxu0 0
        %1647 = vmatprep.subr.bf16.mxu0 0
        %1648 = vmatpush1.bf16.msra.mxu0 0
        %1649 = vmatprep.subr.bf16.mxu0 0
        %1650 = vmatpush1.bf16.msra.mxu0 0
        %1651 = vmatprep.subr.bf16.mxu0 0
        %1652 = vmatpush1.bf16.msra.mxu0 0
        %1653 = vmatprep.subr.bf16.mxu0 0
        %1654 = vmatpush1.bf16.msra.mxu0 0
        %1655 = vmatprep.subr.bf16.mxu0 0
        %1656 = vmatpush1.bf16.msra.mxu0 0
        %1657 = vmatprep.subr.bf16.mxu0 0
        %1658 = vmatpush1.bf16.msra.mxu0 0
        %1659 = vmatprep.subr.bf16.mxu0 0
        %1660 = vmatpush1.bf16.msra.mxu0 0
        %1661 = vmatprep.subr.bf16.mxu0 0
        %1662 = vmatpush1.bf16.msra.mxu0 0
        %1663 = vmatprep.subr.bf16.mxu0 0
        %1664 = vmatpush1.bf16.msra.mxu0 0
        %1665 = vmatprep.mubr.bf16.mxu0 0
        %1666 = vmatmul.mubr.bf16.gmra.mrb[0].mxu0 %v1631
        %v1667 = vpop.f32.mrb[0].mxu0
        %v1668 = vadd.f32 0.0, %v1667
        %v1669 = vpop.f32.mrb[0].mxu0
        %v1670 = vpop.f32.mrb[0].mxu0
        %v1671 = vadd.f32 0.0, %v1670
        %v1672 = vpop.f32.mrb[0].mxu0
        %1673 = vdwg.mxu0
        %v1674 = vpack.c.bf16 %v1671, %v1668
        %v1676 = vsel %vm718, %v1674, 0
        %1678 = vmatprep.subr.bf16.mxu0 0
        %1679 = vmatpush1.bf16.msra.mxu0 %v972
        %1680 = vmatprep.subr.bf16.mxu0 0
        %1681 = vmatpush1.bf16.msra.mxu0 %v973
        %1682 = vmatprep.subr.bf16.mxu0 0
        %1683 = vmatpush1.bf16.msra.mxu0 0
        %1684 = vmatprep.subr.bf16.mxu0 0
        %1685 = vmatpush1.bf16.msra.mxu0 0
        %1686 = vmatprep.subr.bf16.mxu0 0
        %1687 = vmatpush1.bf16.msra.mxu0 0
        %1688 = vmatprep.subr.bf16.mxu0 0
        %1689 = vmatpush1.bf16.msra.mxu0 0
        %1690 = vmatprep.subr.bf16.mxu0 0
        %1691 = vmatpush1.bf16.msra.mxu0 0
        %1692 = vmatprep.subr.bf16.mxu0 0
        %1693 = vmatpush1.bf16.msra.mxu0 0
        %1694 = vmatprep.subr.bf16.mxu0 0
        %1695 = vmatpush1.bf16.msra.mxu0 0
        %1696 = vmatprep.subr.bf16.mxu0 0
        %1697 = vmatpush1.bf16.msra.mxu0 0
        %1698 = vmatprep.subr.bf16.mxu0 0
        %1699 = vmatpush1.bf16.msra.mxu0 0
        %1700 = vmatprep.subr.bf16.mxu0 0
        %1701 = vmatpush1.bf16.msra.mxu0 0
        %1702 = vmatprep.subr.bf16.mxu0 0
        %1703 = vmatpush1.bf16.msra.mxu0 0
        %1704 = vmatprep.subr.bf16.mxu0 0
        %1705 = vmatpush1.bf16.msra.mxu0 0
        %1706 = vmatprep.subr.bf16.mxu0 0
        %1707 = vmatpush1.bf16.msra.mxu0 0
        %1708 = vmatprep.subr.bf16.mxu0 0
        %1709 = vmatpush1.bf16.msra.mxu0 0
        %1710 = vmatprep.mubr.bf16.mxu0 0
        %1711 = vmatmul.mubr.bf16.gmra.mrb[0].mxu0 %v1676
        %v1712 = vpop.f32.mrb[0].mxu0
        %v1713 = vadd.f32 0.0, %v1712
        %v1714 = vpop.f32.mrb[0].mxu0
        %v1715 = vpop.f32.mrb[0].mxu0
        %v1716 = vadd.f32 0.0, %v1715
        %v1717 = vpop.f32.mrb[0].mxu0
        %1718 = vdwg.mxu0
        %v1720 = vsel %vm718, %v1554, 0
        %1722 = vmatprep.subr.bf16.mxu0 0
        %1723 = vmatpush1.bf16.msra.mxu0 %v1028
        %1724 = vmatprep.subr.bf16.mxu0 0
        %1725 = vmatpush1.bf16.msra.mxu0 %v1029
        %1726 = vmatprep.subr.bf16.mxu0 0
        %1727 = vmatpush1.bf16.msra.mxu0 0
        %1728 = vmatprep.subr.bf16.mxu0 0
        %1729 = vmatpush1.bf16.msra.mxu0 0
        %1730 = vmatprep.subr.bf16.mxu0 0
        %1731 = vmatpush1.bf16.msra.mxu0 0
        %1732 = vmatprep.subr.bf16.mxu0 0
        %1733 = vmatpush1.bf16.msra.mxu0 0
        %1734 = vmatprep.subr.bf16.mxu0 0
        %1735 = vmatpush1.bf16.msra.mxu0 0
        %1736 = vmatprep.subr.bf16.mxu0 0
        %1737 = vmatpush1.bf16.msra.mxu0 0
        %1738 = vmatprep.subr.bf16.mxu0 0
        %1739 = vmatpush1.bf16.msra.mxu0 0
        %1740 = vmatprep.subr.bf16.mxu0 0
        %1741 = vmatpush1.bf16.msra.mxu0 0
        %1742 = vmatprep.subr.bf16.mxu0 0
        %1743 = vmatpush1.bf16.msra.mxu0 0
        %1744 = vmatprep.subr.bf16.mxu0 0
        %1745 = vmatpush1.bf16.msra.mxu0 0
        %1746 = vmatprep.subr.bf16.mxu0 0
        %1747 = vmatpush1.bf16.msra.mxu0 0
        %1748 = vmatprep.subr.bf16.mxu0 0
        %1749 = vmatpush1.bf16.msra.mxu0 0
        %1750 = vmatprep.subr.bf16.mxu0 0
        %1751 = vmatpush1.bf16.msra.mxu0 0
        %1752 = vmatprep.subr.bf16.mxu0 0
        %1753 = vmatpush1.bf16.msra.mxu0 0
        %1754 = vmatprep.mubr.bf16.mxu0 0
        %1755 = vmatmul.mubr.bf16.gmra.mrb[0].mxu0 %v1720
        %v1756 = vpop.f32.mrb[0].mxu0
        %v1757 = vadd.f32 %v1713, %v1756
        %v1758 = vpop.f32.mrb[0].mxu0
        %v1759 = vpop.f32.mrb[0].mxu0
        %v1760 = vadd.f32 %v1716, %v1759
        %v1761 = vpop.f32.mrb[0].mxu0
        %1762 = vdwg.mxu0
        %1763 = vrot.lane.b32.xlu0 %v1438, 64
        %v1764 = vpop.permute.xlu0 %1763
        %v1766 = vsel %vm718, %v1764, 0
        %1768 = vmatprep.subr.bf16.mxu0 0
        %1769 = vmatpush1.bf16.xpose.msra.mxu0 %v1766
        %1770 = vmatprep.subr.bf16.mxu0 0
        %1771 = vmatpush1.bf16.xpose.msra.mxu0 0
        %1772 = vmatprep.subr.bf16.mxu0 0
        %1773 = vmatpush1.bf16.xpose.msra.mxu0 0
        %1774 = vmatprep.subr.bf16.mxu0 0
        %1775 = vmatpush1.bf16.xpose.msra.mxu0 0
        %1776 = vmatprep.subr.bf16.mxu0 0
        %1777 = vmatpush1.bf16.xpose.msra.mxu0 0
        %1778 = vmatprep.subr.bf16.mxu0 0
        %1779 = vmatpush1.bf16.xpose.msra.mxu0 0
        %1780 = vmatprep.subr.bf16.mxu0 0
        %1781 = vmatpush1.bf16.xpose.msra.mxu0 0
        %1782 = vmatprep.subr.bf16.mxu0 0
        %1783 = vmatpush1.bf16.xpose.msra.mxu0 0
        %1784 = vmatprep.subr.bf16.mxu0 0
        %1785 = vmatpush1.bf16.xpose.msra.mxu0 0
        %1786 = vmatprep.subr.bf16.mxu0 0
        %1787 = vmatpush1.bf16.xpose.msra.mxu0 0
        %1788 = vmatprep.subr.bf16.mxu0 0
        %1789 = vmatpush1.bf16.xpose.msra.mxu0 0
        %1790 = vmatprep.subr.bf16.mxu0 0
        %1791 = vmatpush1.bf16.xpose.msra.mxu0 0
        %1792 = vmatprep.subr.bf16.mxu0 0
        %1793 = vmatpush1.bf16.xpose.msra.mxu0 0
        %1794 = vmatprep.subr.bf16.mxu0 0
        %1795 = vmatpush1.bf16.xpose.msra.mxu0 0
        %1796 = vmatprep.subr.bf16.mxu0 0
        %1797 = vmatpush1.bf16.xpose.msra.mxu0 0
        %1798 = vmatprep.subr.bf16.mxu0 0
        %1799 = vmatpush1.bf16.xpose.msra.mxu0 0
        %1800 = vmatprep.mubr.bf16.mxu0 0
        %1801 = vmatmul.mubr.bf16.gmra.mrb[0].mxu0 %v1766
        %v1802 = vpop.f32.mrb[0].mxu0
        %v1803 = vadd.f32 0.0, %v1802
        %v1804 = vpop.f32.mrb[0].mxu0
        %v1805 = vpop.f32.mrb[0].mxu0
        %v1806 = vadd.f32 0.0, %v1805
        %v1807 = vpop.f32.mrb[0].mxu0
        %1808 = vdwg.mxu0
        %v1809 = vmul.f32 %v1803, 0.17677669
        %v1810 = vmul.f32 %v1806, 0.17677669
        %v1811 = vadd.f32 %v1809, %v715
        %v1812 = vadd.f32 %v1810, %v716
        %v1813 = vsel %vm767, %v1811, -inf
        %1814 = vmax.xlane.f32.xlu0 %v1813
        %v1815 = vpop.xlane.xlu0 %1814
        %v1816 = vsel %vm767, %v1812, -inf
        %1817 = vmax.xlane.f32.xlu0 %v1816
        %v1818 = vpop.xlane.xlu0 %1817
        %v1819 = vsub.f32 %v1811, %v1815
        %v1820 = vsub.f32 %v1812, %v1818
        %v1821 = vmul.f32 %v1819, 1.442695
        %v1822 = vpow.pop %v1821
        %v1823 = vmul.f32 %v1820, 1.442695
        %v1824 = vpow.pop %v1823
        %v1825 = vsel %vm767, %v1822, 0.0
        %1826 = vadd.xlane.f32.xlu0 %v1825
        %v1827 = vpop.xlane.xlu0 %1826
        %v1828 = vsel %vm767, %v1824, 0.0
        %1829 = vadd.xlane.f32.xlu0 %v1828
        %v1830 = vpop.xlane.xlu0 %1829
        %v1831 = vrcp.pop %v1827
        %v1832 = vrcp.pop %v1830
        %v1833 = vmul.f32 %v1822, %v1831
        %v1834 = vmul.f32 %v1824, %v1832
        %v1835 = vpack.c.bf16 %v1834, %v1833
        %v1838 = vsel %vm767, %v1835, 0
        %1840 = vmatprep.subr.bf16.mxu0 0
        %1841 = vmatpush1.bf16.msra.mxu0 %v1764
        %1842 = vmatprep.subr.bf16.mxu0 0
        %1843 = vmatpush1.bf16.msra.mxu0 0
        %1844 = vmatprep.subr.bf16.mxu0 0
        %1845 = vmatpush1.bf16.msra.mxu0 0
        %1846 = vmatprep.subr.bf16.mxu0 0
        %1847 = vmatpush1.bf16.msra.mxu0 0
        %1848 = vmatprep.subr.bf16.mxu0 0
        %1849 = vmatpush1.bf16.msra.mxu0 0
        %1850 = vmatprep.subr.bf16.mxu0 0
        %1851 = vmatpush1.bf16.msra.mxu0 0
        %1852 = vmatprep.subr.bf16.mxu0 0
        %1853 = vmatpush1.bf16.msra.mxu0 0
        %1854 = vmatprep.subr.bf16.mxu0 0
        %1855 = vmatpush1.bf16.msra.mxu0 0
        %1856 = vmatprep.subr.bf16.mxu0 0
        %1857 = vmatpush1.bf16.msra.mxu0 0
        %1858 = vmatprep.subr.bf16.mxu0 0
        %1859 = vmatpush1.bf16.msra.mxu0 0
        %1860 = vmatprep.subr.bf16.mxu0 0
        %1861 = vmatpush1.bf16.msra.mxu0 0
        %1862 = vmatprep.subr.bf16.mxu0 0
        %1863 = vmatpush1.bf16.msra.mxu0 0
        %1864 = vmatprep.subr.bf16.mxu0 0
        %1865 = vmatpush1.bf16.msra.mxu0 0
        %1866 = vmatprep.subr.bf16.mxu0 0
        %1867 = vmatpush1.bf16.msra.mxu0 0
        %1868 = vmatprep.subr.bf16.mxu0 0
        %1869 = vmatpush1.bf16.msra.mxu0 0
        %1870 = vmatprep.subr.bf16.mxu0 0
        %1871 = vmatpush1.bf16.msra.mxu0 0
        %1872 = vmatprep.mubr.bf16.mxu0 0
        %1873 = vmatmul.mubr.bf16.gmra.mrb[0].mxu0 %v1838
        %v1874 = vpop.f32.mrb[0].mxu0
        %v1875 = vadd.f32 0.0, %v1874
        %v1876 = vpop.f32.mrb[0].mxu0
        %v1877 = vpop.f32.mrb[0].mxu0
        %v1878 = vadd.f32 0.0, %v1877
        %v1879 = vpop.f32.mrb[0].mxu0
        %1880 = vdwg.mxu0
        %v1881 = vpack.c.bf16 %v1878, %v1875
        %v1883 = vsel %vm718, %v1881, 0
        %1885 = vmatprep.subr.bf16.mxu0 0
        %1886 = vmatpush1.bf16.msra.mxu0 %v1207
        %1887 = vmatprep.subr.bf16.mxu0 0
        %1888 = vmatpush1.bf16.msra.mxu0 %v1208
        %1889 = vmatprep.subr.bf16.mxu0 0
        %1890 = vmatpush1.bf16.msra.mxu0 0
        %1891 = vmatprep.subr.bf16.mxu0 0
        %1892 = vmatpush1.bf16.msra.mxu0 0
        %1893 = vmatprep.subr.bf16.mxu0 0
        %1894 = vmatpush1.bf16.msra.mxu0 0
        %1895 = vmatprep.subr.bf16.mxu0 0
        %1896 = vmatpush1.bf16.msra.mxu0 0
        %1897 = vmatprep.subr.bf16.mxu0 0
        %1898 = vmatpush1.bf16.msra.mxu0 0
        %1899 = vmatprep.subr.bf16.mxu0 0
        %1900 = vmatpush1.bf16.msra.mxu0 0
        %1901 = vmatprep.subr.bf16.mxu0 0
        %1902 = vmatpush1.bf16.msra.mxu0 0
        %1903 = vmatprep.subr.bf16.mxu0 0
        %1904 = vmatpush1.bf16.msra.mxu0 0
        %1905 = vmatprep.subr.bf16.mxu0 0
        %1906 = vmatpush1.bf16.msra.mxu0 0
        %1907 = vmatprep.subr.bf16.mxu0 0
        %1908 = vmatpush1.bf16.msra.mxu0 0
        %1909 = vmatprep.subr.bf16.mxu0 0
        %1910 = vmatpush1.bf16.msra.mxu0 0
        %1911 = vmatprep.subr.bf16.mxu0 0
        %1912 = vmatpush1.bf16.msra.mxu0 0
        %1913 = vmatprep.subr.bf16.mxu0 0
        %1914 = vmatpush1.bf16.msra.mxu0 0
        %1915 = vmatprep.subr.bf16.mxu0 0
        %1916 = vmatpush1.bf16.msra.mxu0 0
        %1917 = vmatprep.mubr.bf16.mxu0 0
        %1918 = vmatmul.mubr.bf16.gmra.mrb[0].mxu0 %v1883
        %v1919 = vpop.f32.mrb[0].mxu0
        %v1920 = vadd.f32 0.0, %v1919
        %v1921 = vpop.f32.mrb[0].mxu0
        %v1922 = vpop.f32.mrb[0].mxu0
        %v1923 = vadd.f32 0.0, %v1922
        %v1924 = vpop.f32.mrb[0].mxu0
        %1925 = vdwg.mxu0
        %v1926 = vadd.f32 %v1757, %v1920
        %v1927 = vadd.f32 %v1760, %v1923
        %1928 = vrot.lane.b32.xlu0 %v1438, 32
        %v1929 = vpop.permute.xlu0 %1928
        %v1931 = vsel %vm718, %v1929, 0
        %1933 = vmatprep.subr.bf16.mxu0 0
        %1934 = vmatpush1.bf16.xpose.msra.mxu0 %v1931
        %1935 = vmatprep.subr.bf16.mxu0 0
        %1936 = vmatpush1.bf16.xpose.msra.mxu0 0
        %1937 = vmatprep.subr.bf16.mxu0 0
        %1938 = vmatpush1.bf16.xpose.msra.mxu0 0
        %1939 = vmatprep.subr.bf16.mxu0 0
        %1940 = vmatpush1.bf16.xpose.msra.mxu0 0
        %1941 = vmatprep.subr.bf16.mxu0 0
        %1942 = vmatpush1.bf16.xpose.msra.mxu0 0
        %1943 = vmatprep.subr.bf16.mxu0 0
        %1944 = vmatpush1.bf16.xpose.msra.mxu0 0
        %1945 = vmatprep.subr.bf16.mxu0 0
        %1946 = vmatpush1.bf16.xpose.msra.mxu0 0
        %1947 = vmatprep.subr.bf16.mxu0 0
        %1948 = vmatpush1.bf16.xpose.msra.mxu0 0
        %1949 = vmatprep.subr.bf16.mxu0 0
        %1950 = vmatpush1.bf16.xpose.msra.mxu0 0
        %1951 = vmatprep.subr.bf16.mxu0 0
        %1952 = vmatpush1.bf16.xpose.msra.mxu0 0
        %1953 = vmatprep.subr.bf16.mxu0 0
        %1954 = vmatpush1.bf16.xpose.msra.mxu0 0
        %1955 = vmatprep.subr.bf16.mxu0 0
        %1956 = vmatpush1.bf16.xpose.msra.mxu0 0
        %1957 = vmatprep.subr.bf16.mxu0 0
        %1958 = vmatpush1.bf16.xpose.msra.mxu0 0
        %1959 = vmatprep.subr.bf16.mxu0 0
        %1960 = vmatpush1.bf16.xpose.msra.mxu0 0
        %1961 = vmatprep.subr.bf16.mxu0 0
        %1962 = vmatpush1.bf16.xpose.msra.mxu0 0
        %1963 = vmatprep.subr.bf16.mxu0 0
        %1964 = vmatpush1.bf16.xpose.msra.mxu0 0
        %1965 = vmatprep.mubr.bf16.mxu0 0
        %1966 = vmatmul.mubr.bf16.gmra.mrb[0].mxu0 %v1931
        %v1967 = vpop.f32.mrb[0].mxu0
        %v1968 = vadd.f32 0.0, %v1967
        %v1969 = vpop.f32.mrb[0].mxu0
        %v1970 = vpop.f32.mrb[0].mxu0
        %v1971 = vadd.f32 0.0, %v1970
        %v1972 = vpop.f32.mrb[0].mxu0
        %1973 = vdwg.mxu0
        %v1974 = vmul.f32 %v1968, 0.17677669
        %v1975 = vmul.f32 %v1971, 0.17677669
        %v1976 = vadd.f32 %v1974, %v715
        %v1977 = vadd.f32 %v1975, %v716
        %v1978 = vsel %vm767, %v1976, -inf
        %1979 = vmax.xlane.f32.xlu0 %v1978
        %v1980 = vpop.xlane.xlu0 %1979
        %v1981 = vsel %vm767, %v1977, -inf
        %1982 = vmax.xlane.f32.xlu0 %v1981
        %v1983 = vpop.xlane.xlu0 %1982
        %v1984 = vsub.f32 %v1976, %v1980
        %v1985 = vsub.f32 %v1977, %v1983
        %v1986 = vmul.f32 %v1984, 1.442695
        %v1987 = vpow.pop %v1986
        %v1988 = vmul.f32 %v1985, 1.442695
        %v1989 = vpow.pop %v1988
        %v1990 = vsel %vm767, %v1987, 0.0
        %1991 = vadd.xlane.f32.xlu0 %v1990
        %v1992 = vpop.xlane.xlu0 %1991
        %v1993 = vsel %vm767, %v1989, 0.0
        %1994 = vadd.xlane.f32.xlu0 %v1993
        %v1995 = vpop.xlane.xlu0 %1994
        %v1996 = vrcp.pop %v1992
        %v1997 = vrcp.pop %v1995
        %v1998 = vmul.f32 %v1987, %v1996
        %v1999 = vmul.f32 %v1989, %v1997
        %v2000 = vpack.c.bf16 %v1999, %v1998
        %v2003 = vsel %vm767, %v2000, 0
        %2005 = vmatprep.subr.bf16.mxu0 0
        %2006 = vmatpush1.bf16.msra.mxu0 %v1929
        %2007 = vmatprep.subr.bf16.mxu0 0
        %2008 = vmatpush1.bf16.msra.mxu0 0
        %2009 = vmatprep.subr.bf16.mxu0 0
        %2010 = vmatpush1.bf16.msra.mxu0 0
        %2011 = vmatprep.subr.bf16.mxu0 0
        %2012 = vmatpush1.bf16.msra.mxu0 0
        %2013 = vmatprep.subr.bf16.mxu0 0
        %2014 = vmatpush1.bf16.msra.mxu0 0
        %2015 = vmatprep.subr.bf16.mxu0 0
        %2016 = vmatpush1.bf16.msra.mxu0 0
        %2017 = vmatprep.subr.bf16.mxu0 0
        %2018 = vmatpush1.bf16.msra.mxu0 0
        %2019 = vmatprep.subr.bf16.mxu0 0
        %2020 = vmatpush1.bf16.msra.mxu0 0
        %2021 = vmatprep.subr.bf16.mxu0 0
        %2022 = vmatpush1.bf16.msra.mxu0 0
        %2023 = vmatprep.subr.bf16.mxu0 0
        %2024 = vmatpush1.bf16.msra.mxu0 0
        %2025 = vmatprep.subr.bf16.mxu0 0
        %2026 = vmatpush1.bf16.msra.mxu0 0
        %2027 = vmatprep.subr.bf16.mxu0 0
        %2028 = vmatpush1.bf16.msra.mxu0 0
        %2029 = vmatprep.subr.bf16.mxu0 0
        %2030 = vmatpush1.bf16.msra.mxu0 0
        %2031 = vmatprep.subr.bf16.mxu0 0
        %2032 = vmatpush1.bf16.msra.mxu0 0
        %2033 = vmatprep.subr.bf16.mxu0 0
        %2034 = vmatpush1.bf16.msra.mxu0 0
        %2035 = vmatprep.subr.bf16.mxu0 0
        %2036 = vmatpush1.bf16.msra.mxu0 0
        %2037 = vmatprep.mubr.bf16.mxu0 0
        %2038 = vmatmul.mubr.bf16.gmra.mrb[0].mxu0 %v2003
        %v2039 = vpop.f32.mrb[0].mxu0
        %v2040 = vadd.f32 0.0, %v2039
        %v2041 = vpop.f32.mrb[0].mxu0
        %v2042 = vpop.f32.mrb[0].mxu0
        %v2043 = vadd.f32 0.0, %v2042
        %v2044 = vpop.f32.mrb[0].mxu0
        %2045 = vdwg.mxu0
        %v2046 = vpack.c.bf16 %v2043, %v2040
        %v2048 = vsel %vm718, %v2046, 0
        %2050 = vmatprep.subr.bf16.mxu0 0
        %2051 = vmatpush1.bf16.msra.mxu0 %v1388
        %2052 = vmatprep.subr.bf16.mxu0 0
        %2053 = vmatpush1.bf16.msra.mxu0 %v1389
        %2054 = vmatprep.subr.bf16.mxu0 0
        %2055 = vmatpush1.bf16.msra.mxu0 0
        %2056 = vmatprep.subr.bf16.mxu0 0
        %2057 = vmatpush1.bf16.msra.mxu0 0
        %2058 = vmatprep.subr.bf16.mxu0 0
        %2059 = vmatpush1.bf16.msra.mxu0 0
        %2060 = vmatprep.subr.bf16.mxu0 0
        %2061 = vmatpush1.bf16.msra.mxu0 0
        %2062 = vmatprep.subr.bf16.mxu0 0
        %2063 = vmatpush1.bf16.msra.mxu0 0
        %2064 = vmatprep.subr.bf16.mxu0 0
        %2065 = vmatpush1.bf16.msra.mxu0 0
        %2066 = vmatprep.subr.bf16.mxu0 0
        %2067 = vmatpush1.bf16.msra.mxu0 0
        %2068 = vmatprep.subr.bf16.mxu0 0
        %2069 = vmatpush1.bf16.msra.mxu0 0
        %2070 = vmatprep.subr.bf16.mxu0 0
        %2071 = vmatpush1.bf16.msra.mxu0 0
        %2072 = vmatprep.subr.bf16.mxu0 0
        %2073 = vmatpush1.bf16.msra.mxu0 0
        %2074 = vmatprep.subr.bf16.mxu0 0
        %2075 = vmatpush1.bf16.msra.mxu0 0
        %2076 = vmatprep.subr.bf16.mxu0 0
        %2077 = vmatpush1.bf16.msra.mxu0 0
        %2078 = vmatprep.subr.bf16.mxu0 0
        %2079 = vmatpush1.bf16.msra.mxu0 0
        %2080 = vmatprep.subr.bf16.mxu0 0
        %2081 = vmatpush1.bf16.msra.mxu0 0
        %2082 = vmatprep.mubr.bf16.mxu0 0
        %2083 = vmatmul.mubr.bf16.gmra.mrb[0].mxu0 %v2048
        %v2084 = vpop.f32.mrb[0].mxu0
        %v2085 = vadd.f32 0.0, %v2084
        %v2086 = vpop.f32.mrb[0].mxu0
        %v2087 = vpop.f32.mrb[0].mxu0
        %v2088 = vadd.f32 0.0, %v2087
        %v2089 = vpop.f32.mrb[0].mxu0
        %2090 = vdwg.mxu0
        %v2091 = vadd.f32 %v1926, %v2085
        %v2092 = vadd.f32 %v1927, %v2088
        %v2093 = vadd.f32 %v494, %v1436
        %v2094 = vadd.f32 %v495, %v1437
        %v2095 = vadd.f32 %v496, %v2091
        %v2096 = vadd.f32 %v497, %v2092
        %v2097 = vld [vmem:[%s5] sm:$0x1]
        %v2099 = vlaneseq
        %v2100 = vshrl.u32 %v2099, 7
        %v2101 = vsub.s32 0, %v2100
        %v2102 = vrot.slane %v2097, %v2101
        %v2104 = vadd.f32 %v2093, %v2102
        %v2105 = vadd.f32 %v2094, %v2102
        %v2106 = vadd.f32 %v2095, %v2102
        %v2107 = vadd.f32 %v2096, %v2102
        %v2108 = vld [vmem:[%s6] sm:$0x1]
        %v2109 = vld [vmem:[%s7] sm:$0x1]
        %2110 = vadd.xlane.f32.xlu0 %v2104
        %v2111 = vpop.xlane.xlu0 %2110
        %2112 = vadd.xlane.f32.xlu0 %v2105
        %v2113 = vpop.xlane.xlu0 %2112
        %2114 = vadd.xlane.f32.xlu0 %v2106
        %v2115 = vpop.xlane.xlu0 %2114
        %2116 = vadd.xlane.f32.xlu0 %v2107
        %v2117 = vpop.xlane.xlu0 %2116
        %v2118 = vmul.f32 %v2111, %v508
        %v2119 = vmul.f32 %v2113, %v508
        %v2120 = vmul.f32 %v2115, %v508
        %v2121 = vmul.f32 %v2117, %v508
        %v2122 = vsub.f32 %v2104, %v2118
        %v2123 = vsub.f32 %v2105, %v2119
        %v2124 = vsub.f32 %v2106, %v2120
        %v2125 = vsub.f32 %v2107, %v2121
        %v2126 = vmul.f32 %v2122, %v2122
        %v2127 = vmul.f32 %v2123, %v2123
        %v2128 = vmul.f32 %v2124, %v2124
        %v2129 = vmul.f32 %v2125, %v2125
        %2130 = vadd.xlane.f32.xlu0 %v2126
        %v2131 = vpop.xlane.xlu0 %2130
        %2132 = vadd.xlane.f32.xlu0 %v2127
        %v2133 = vpop.xlane.xlu0 %2132
        %2134 = vadd.xlane.f32.xlu0 %v2128
        %v2135 = vpop.xlane.xlu0 %2134
        %2136 = vadd.xlane.f32.xlu0 %v2129
        %v2137 = vpop.xlane.xlu0 %2136
        %v2138 = vmul.f32 %v2131, 0.007874016
        %v2139 = vmul.f32 %v2133, 0.007874016
        %v2140 = vmul.f32 %v2135, 0.007874016
        %v2141 = vmul.f32 %v2137, 0.007874016
        %v2142 = vrsqrt.pop %v2138
        %v2143 = vmul.f32 %v2138, %v2142
        %vm2144 = vcmp.eq.f32.partialorder %v2138, inf
        %v2145 = vsel %vm2144, %v2138, %v2143
        %vm2146 = vcmp.eq.f32.partialorder %v2138, 0.0
        %v2147 = vand.u32 %v2138, 2147483648
        %v2148 = vsel %vm2146, %v2147, %v2145
        %v2149 = vrsqrt.pop %v2139
        %v2150 = vmul.f32 %v2139, %v2149
        %vm2151 = vcmp.eq.f32.partialorder %v2139, inf
        %v2152 = vsel %vm2151, %v2139, %v2150
        %vm2153 = vcmp.eq.f32.partialorder %v2139, 0.0
        %v2154 = vand.u32 %v2139, 2147483648
        %v2155 = vsel %vm2153, %v2154, %v2152
        %v2156 = vrsqrt.pop %v2140
        %v2157 = vmul.f32 %v2140, %v2156
        %vm2158 = vcmp.eq.f32.partialorder %v2140, inf
        %v2159 = vsel %vm2158, %v2140, %v2157
        %vm2160 = vcmp.eq.f32.partialorder %v2140, 0.0
        %v2161 = vand.u32 %v2140, 2147483648
        %v2162 = vsel %vm2160, %v2161, %v2159
        %v2163 = vrsqrt.pop %v2141
        %v2164 = vmul.f32 %v2141, %v2163
        %vm2165 = vcmp.eq.f32.partialorder %v2141, inf
        %v2166 = vsel %vm2165, %v2141, %v2164
        %vm2167 = vcmp.eq.f32.partialorder %v2141, 0.0
        %v2168 = vand.u32 %v2141, 2147483648
        %v2169 = vsel %vm2167, %v2168, %v2166
        %v2170 = vadd.f32 %v2148, 1e-05
        %v2171 = vadd.f32 %v2155, 1e-05
        %v2172 = vadd.f32 %v2162, 1e-05
        %v2173 = vadd.f32 %v2169, 1e-05
        %v2174 = vrcp.pop %v2170
        %v2175 = vmul.f32 %v2122, %v2174
        %v2176 = vrcp.pop %v2171
        %v2177 = vmul.f32 %v2123, %v2176
        %v2178 = vrcp.pop %v2172
        %v2179 = vmul.f32 %v2124, %v2178
        %v2180 = vrcp.pop %v2173
        %v2181 = vmul.f32 %v2125, %v2180
        %v2183 = vlaneseq
        %v2184 = vshrl.u32 %v2183, 7
        %v2185 = vsub.s32 0, %v2184
        %v2186 = vrot.slane %v2108, %v2185
        %v2188 = vmul.f32 %v2186, %v2175
        %v2189 = vmul.f32 %v2186, %v2177
        %v2190 = vmul.f32 %v2186, %v2179
        %v2191 = vmul.f32 %v2186, %v2181
        %v2193 = vlaneseq
        %v2194 = vshrl.u32 %v2193, 7
        %v2195 = vsub.s32 0, %v2194
        %v2196 = vrot.slane %v2109, %v2195
        %v2198 = vadd.f32 %v2188, %v2196
        %v2199 = vadd.f32 %v2189, %v2196
        %v2200 = vadd.f32 %v2190, %v2196
        %v2201 = vadd.f32 %v2191, %v2196
        %v2202 = vpack.c.bf16 %v2199, %v2198
        %v2203 = vpack.c.bf16 %v2201, %v2200
        %v2204 = vld [vmem:[#allocation8] sm:$0xff]
        %v2205 = vld [vmem:[#allocation8 + $0x8] sm:$0xff]
        %v2206 = vld [vmem:[#allocation8 + $0x10] sm:$0xff]
        %v2207 = vld [vmem:[#allocation8 + $0x18] sm:$0xff]
        %v2208 = vld [vmem:[#allocation8 + $0x20] sm:$0xff]
        %v2209 = vld [vmem:[#allocation8 + $0x28] sm:$0xff]
        %v2210 = vld [vmem:[#allocation8 + $0x30] sm:$0xff]
        %v2211 = vld [vmem:[#allocation8 + $0x38] sm:$0xff]
        %v2212 = vld [vmem:[#allocation8 + $0x40] sm:$0xff]
        %v2213 = vld [vmem:[#allocation8 + $0x48] sm:$0xff]
        %v2214 = vld [vmem:[#allocation8 + $0x50] sm:$0xff]
        %v2215 = vld [vmem:[#allocation8 + $0x58] sm:$0xff]
        %v2216 = vld [vmem:[#allocation8 + $0x60] sm:$0xff]
        %v2217 = vld [vmem:[#allocation8 + $0x68] sm:$0xff]
        %v2218 = vld [vmem:[#allocation8 + $0x70] sm:$0xff]
        %v2219 = vld [vmem:[#allocation8 + $0x78] sm:$0xff]
        %v2220 = vld [vmem:[#allocation8 + $0x80] sm:$0xff]
        %v2221 = vld [vmem:[#allocation8 + $0x88] sm:$0xff]
        %v2222 = vld [vmem:[#allocation8 + $0x90] sm:$0xff]
        %v2223 = vld [vmem:[#allocation8 + $0x98] sm:$0xff]
        %v2224 = vld [vmem:[#allocation8 + $0xa0] sm:$0xff]
        %v2225 = vld [vmem:[#allocation8 + $0xa8] sm:$0xff]
        %v2226 = vld [vmem:[#allocation8 + $0xb0] sm:$0xff]
        %v2227 = vld [vmem:[#allocation8 + $0xb8] sm:$0xff]
        %v2228 = vld [vmem:[#allocation8 + $0xc0] sm:$0xff]
        %v2229 = vld [vmem:[#allocation8 + $0xc8] sm:$0xff]
        %v2230 = vld [vmem:[#allocation8 + $0xd0] sm:$0xff]
        %v2231 = vld [vmem:[#allocation8 + $0xd8] sm:$0xff]
        %v2232 = vld [vmem:[#allocation8 + $0xe0] sm:$0xff]
        %v2233 = vld [vmem:[#allocation8 + $0xe8] sm:$0xff]
        %v2234 = vld [vmem:[#allocation8 + $0xf0] sm:$0xff]
        %v2235 = vld [vmem:[#allocation8 + $0xf8] sm:$0xff]
        %v2236 = vld [vmem:[%s9] sm:$0xf]
        %v2238 = vlaneseq
        %v2239 = vshrl.u32 %v2238, 7
        %v2240 = vsub.s32 0, %v2239
        %v2241 = vrot.slane %v2236, %v2240
        %v2242 = vlaneseq
        %v2243 = vshrl.u32 %v2242, 7
        %v2244 = vsub.s32 1, %v2243
        %v2245 = vrot.slane %v2236, %v2244
        %v2246 = vlaneseq
        %v2247 = vshrl.u32 %v2246, 7
        %v2248 = vsub.s32 2, %v2247
        %v2249 = vrot.slane %v2236, %v2248
        %v2250 = vlaneseq
        %v2251 = vshrl.u32 %v2250, 7
        %v2252 = vsub.s32 3, %v2251
        %v2253 = vrot.slane %v2236, %v2252
        %v2290 = vunpack.c.l.b16 %v2204
        %v2291 = vunpack.c.h.b16 %v2204
        %v2292 = vunpack.c.l.b16 %v2205
        %v2293 = vunpack.c.h.b16 %v2205
        %v2294 = vunpack.c.l.b16 %v2206
        %v2295 = vunpack.c.h.b16 %v2206
        %v2296 = vunpack.c.l.b16 %v2207
        %v2297 = vunpack.c.h.b16 %v2207
        %v2298 = vunpack.c.l.b16 %v2208
        %v2299 = vunpack.c.h.b16 %v2208
        %v2300 = vunpack.c.l.b16 %v2209
        %v2301 = vunpack.c.h.b16 %v2209
        %v2302 = vunpack.c.l.b16 %v2210
        %v2303 = vunpack.c.h.b16 %v2210
        %v2304 = vunpack.c.l.b16 %v2211
        %v2305 = vunpack.c.h.b16 %v2211
        %v2306 = vunpack.c.l.b16 %v2212
        %v2307 = vunpack.c.h.b16 %v2212
        %v2308 = vunpack.c.l.b16 %v2213
        %v2309 = vunpack.c.h.b16 %v2213
        %v2310 = vunpack.c.l.b16 %v2214
        %v2311 = vunpack.c.h.b16 %v2214
        %v2312 = vunpack.c.l.b16 %v2215
        %v2313 = vunpack.c.h.b16 %v2215
        %v2314 = vunpack.c.l.b16 %v2216
        %v2315 = vunpack.c.h.b16 %v2216
        %v2316 = vunpack.c.l.b16 %v2217
        %v2317 = vunpack.c.h.b16 %v2217
        %v2318 = vunpack.c.l.b16 %v2218
        %v2319 = vunpack.c.h.b16 %v2218
        %v2320 = vunpack.c.l.b16 %v2219
        %v2321 = vunpack.c.h.b16 %v2219
        %v2322 = vunpack.c.l.b16 %v2220
        %v2323 = vunpack.c.h.b16 %v2220
        %v2324 = vunpack.c.l.b16 %v2221
        %v2325 = vunpack.c.h.b16 %v2221
        %v2326 = vunpack.c.l.b16 %v2222
        %v2327 = vunpack.c.h.b16 %v2222
        %v2328 = vunpack.c.l.b16 %v2223
        %v2329 = vunpack.c.h.b16 %v2223
        %v2330 = vunpack.c.l.b16 %v2224
        %v2331 = vunpack.c.h.b16 %v2224
        %v2332 = vunpack.c.l.b16 %v2225
        %v2333 = vunpack.c.h.b16 %v2225
        %v2334 = vunpack.c.l.b16 %v2226
        %v2335 = vunpack.c.h.b16 %v2226
        %v2336 = vunpack.c.l.b16 %v2227
        %v2337 = vunpack.c.h.b16 %v2227
        %v2338 = vunpack.c.l.b16 %v2228
        %v2339 = vunpack.c.h.b16 %v2228
        %v2340 = vunpack.c.l.b16 %v2229
        %v2341 = vunpack.c.h.b16 %v2229
        %v2342 = vunpack.c.l.b16 %v2230
        %v2343 = vunpack.c.h.b16 %v2230
        %v2344 = vunpack.c.l.b16 %v2231
        %v2345 = vunpack.c.h.b16 %v2231
        %v2346 = vunpack.c.l.b16 %v2232
        %v2347 = vunpack.c.h.b16 %v2232
        %v2348 = vunpack.c.l.b16 %v2233
        %v2349 = vunpack.c.h.b16 %v2233
        %v2350 = vunpack.c.l.b16 %v2234
        %v2351 = vunpack.c.h.b16 %v2234
        %v2352 = vunpack.c.l.b16 %v2235
        %v2353 = vunpack.c.h.b16 %v2235
        %v2354 = vpack.c.b16 %v2294, %v2290
        %v2355 = vpack.c.b16 %v2295, %v2291
        %v2356 = vpack.c.b16 %v2296, %v2292
        %v2357 = vpack.c.b16 %v2297, %v2293
        %v2358 = vpack.c.b16 %v2302, %v2298
        %v2359 = vpack.c.b16 %v2303, %v2299
        %v2360 = vpack.c.b16 %v2304, %v2300
        %v2361 = vpack.c.b16 %v2305, %v2301
        %v2362 = vpack.c.b16 %v2310, %v2306
        %v2363 = vpack.c.b16 %v2311, %v2307
        %v2364 = vpack.c.b16 %v2312, %v2308
        %v2365 = vpack.c.b16 %v2313, %v2309
        %v2366 = vpack.c.b16 %v2318, %v2314
        %v2367 = vpack.c.b16 %v2319, %v2315
        %v2368 = vpack.c.b16 %v2320, %v2316
        %v2369 = vpack.c.b16 %v2321, %v2317
        %v2370 = vpack.c.b16 %v2326, %v2322
        %v2371 = vpack.c.b16 %v2327, %v2323
        %v2372 = vpack.c.b16 %v2328, %v2324
        %v2373 = vpack.c.b16 %v2329, %v2325
        %v2374 = vpack.c.b16 %v2334, %v2330
        %v2375 = vpack.c.b16 %v2335, %v2331
        %v2376 = vpack.c.b16 %v2336, %v2332
        %v2377 = vpack.c.b16 %v2337, %v2333
        %v2378 = vpack.c.b16 %v2342, %v2338
        %v2379 = vpack.c.b16 %v2343, %v2339
        %v2380 = vpack.c.b16 %v2344, %v2340
        %v2381 = vpack.c.b16 %v2345, %v2341
        %v2382 = vpack.c.b16 %v2350, %v2346
        %v2383 = vpack.c.b16 %v2351, %v2347
        %v2384 = vpack.c.b16 %v2352, %v2348
        %v2385 = vpack.c.b16 %v2353, %v2349
        %2418 = vmatprep.subr.bf16.mxu0 %v2355
        %2419 = vmatpush1.bf16.msra.mxu0 %v2354
        %2420 = vmatprep.subr.bf16.mxu0 %v2359
        %2421 = vmatpush1.bf16.msra.mxu0 %v2358
        %2422 = vmatprep.subr.bf16.mxu0 %v2363
        %2423 = vmatpush1.bf16.msra.mxu0 %v2362
        %2424 = vmatprep.subr.bf16.mxu0 %v2367
        %2425 = vmatpush1.bf16.msra.mxu0 %v2366
        %2426 = vmatprep.subr.bf16.mxu0 %v2371
        %2427 = vmatpush1.bf16.msra.mxu0 %v2370
        %2428 = vmatprep.subr.bf16.mxu0 %v2375
        %2429 = vmatpush1.bf16.msra.mxu0 %v2374
        %2430 = vmatprep.subr.bf16.mxu0 %v2379
        %2431 = vmatpush1.bf16.msra.mxu0 %v2378
        %2432 = vmatprep.subr.bf16.mxu0 %v2383
        %2433 = vmatpush1.bf16.msra.mxu0 %v2382
        %2434 = vmatprep.subr.bf16.mxu0 0
        %2435 = vmatpush1.bf16.msra.mxu0 0
        %2436 = vmatprep.subr.bf16.mxu0 0
        %2437 = vmatpush1.bf16.msra.mxu0 0
        %2438 = vmatprep.subr.bf16.mxu0 0
        %2439 = vmatpush1.bf16.msra.mxu0 0
        %2440 = vmatprep.subr.bf16.mxu0 0
        %2441 = vmatpush1.bf16.msra.mxu0 0
        %2442 = vmatprep.subr.bf16.mxu0 0
        %2443 = vmatpush1.bf16.msra.mxu0 0
        %2444 = vmatprep.subr.bf16.mxu0 0
        %2445 = vmatpush1.bf16.msra.mxu0 0
        %2446 = vmatprep.subr.bf16.mxu0 0
        %2447 = vmatpush1.bf16.msra.mxu0 0
        %2448 = vmatprep.subr.bf16.mxu0 0
        %2449 = vmatpush1.bf16.msra.mxu0 0
        %2450 = vmatprep.mubr.bf16.mxu0 0
        %2451 = vmatmul.mubr.bf16.gmra.mrb[0].mxu0 %v2202
        %v2452 = vpop.f32.mrb[0].mxu0
        %v2453 = vadd.f32 %v2241, %v2452
        %v2454 = vpop.f32.mrb[0].mxu0
        %v2455 = vadd.f32 %v2245, %v2454
        %v2456 = vpop.f32.mrb[0].mxu0
        %v2457 = vadd.f32 %v2241, %v2456
        %v2458 = vpop.f32.mrb[0].mxu0
        %v2459 = vadd.f32 %v2245, %v2458
        %2460 = vmatprep.mubr.bf16.mxu0 0
        %2461 = vmatmul.mubr.bf16.gmra.mrb[0].mxu0 %v2203
        %v2462 = vpop.f32.mrb[0].mxu0
        %v2463 = vadd.f32 %v2241, %v2462
        %v2464 = vpop.f32.mrb[0].mxu0
        %v2465 = vadd.f32 %v2245, %v2464
        %v2466 = vpop.f32.mrb[0].mxu0
        %v2467 = vadd.f32 %v2241, %v2466
        %v2468 = vpop.f32.mrb[0].mxu0
        %v2469 = vadd.f32 %v2245, %v2468
        %2470 = vdwg.mxu0
        %2471 = vmatprep.subr.bf16.mxu0 %v2357
        %2472 = vmatpush1.bf16.msra.mxu0 %v2356
        %2473 = vmatprep.subr.bf16.mxu0 %v2361
        %2474 = vmatpush1.bf16.msra.mxu0 %v2360
        %2475 = vmatprep.subr.bf16.mxu0 %v2365
        %2476 = vmatpush1.bf16.msra.mxu0 %v2364
        %2477 = vmatprep.subr.bf16.mxu0 %v2369
        %2478 = vmatpush1.bf16.msra.mxu0 %v2368
        %2479 = vmatprep.subr.bf16.mxu0 %v2373
        %2480 = vmatpush1.bf16.msra.mxu0 %v2372
        %2481 = vmatprep.subr.bf16.mxu0 %v2377
        %2482 = vmatpush1.bf16.msra.mxu0 %v2376
        %2483 = vmatprep.subr.bf16.mxu0 %v2381
        %2484 = vmatpush1.bf16.msra.mxu0 %v2380
        %2485 = vmatprep.subr.bf16.mxu0 %v2385
        %2486 = vmatpush1.bf16.msra.mxu0 %v2384
        %2487 = vmatprep.subr.bf16.mxu0 0
        %2488 = vmatpush1.bf16.msra.mxu0 0
        %2489 = vmatprep.subr.bf16.mxu0 0
        %2490 = vmatpush1.bf16.msra.mxu0 0
        %2491 = vmatprep.subr.bf16.mxu0 0
        %2492 = vmatpush1.bf16.msra.mxu0 0
        %2493 = vmatprep.subr.bf16.mxu0 0
        %2494 = vmatpush1.bf16.msra.mxu0 0
        %2495 = vmatprep.subr.bf16.mxu0 0
        %2496 = vmatpush1.bf16.msra.mxu0 0
        %2497 = vmatprep.subr.bf16.mxu0 0
        %2498 = vmatpush1.bf16.msra.mxu0 0
        %2499 = vmatprep.subr.bf16.mxu0 0
        %2500 = vmatpush1.bf16.msra.mxu0 0
        %2501 = vmatprep.subr.bf16.mxu0 0
        %2502 = vmatpush1.bf16.msra.mxu0 0
        %2503 = vmatprep.mubr.bf16.mxu0 0
        %2504 = vmatmul.mubr.bf16.gmra.mrb[0].mxu0 %v2202
        %v2505 = vpop.f32.mrb[0].mxu0
        %v2506 = vadd.f32 %v2249, %v2505
        %v2507 = vpop.f32.mrb[0].mxu0
        %v2508 = vadd.f32 %v2253, %v2507
        %v2509 = vpop.f32.mrb[0].mxu0
        %v2510 = vadd.f32 %v2249, %v2509
        %v2511 = vpop.f32.mrb[0].mxu0
        %v2512 = vadd.f32 %v2253, %v2511
        %2513 = vmatprep.mubr.bf16.mxu0 0
        %2514 = vmatmul.mubr.bf16.gmra.mrb[0].mxu0 %v2203
        %v2515 = vpop.f32.mrb[0].mxu0
        %v2516 = vadd.f32 %v2249, %v2515
        %v2517 = vpop.f32.mrb[0].mxu0
        %v2518 = vadd.f32 %v2253, %v2517
        %v2519 = vpop.f32.mrb[0].mxu0
        %v2520 = vadd.f32 %v2249, %v2519
        %v2521 = vpop.f32.mrb[0].mxu0
        %v2522 = vadd.f32 %v2253, %v2521
        %2523 = vdwg.mxu0
        %v2524 = vmul.f32 %v2453, 0.5
        %v2525 = vmul.f32 %v2455, 0.5
        %v2526 = vmul.f32 %v2506, 0.5
        %v2527 = vmul.f32 %v2508, 0.5
        %v2528 = vmul.f32 %v2457, 0.5
        %v2529 = vmul.f32 %v2459, 0.5
        %v2530 = vmul.f32 %v2510, 0.5
        %v2531 = vmul.f32 %v2512, 0.5
        %v2532 = vmul.f32 %v2463, 0.5
        %v2533 = vmul.f32 %v2465, 0.5
        %v2534 = vmul.f32 %v2516, 0.5
        %v2535 = vmul.f32 %v2518, 0.5
        %v2536 = vmul.f32 %v2467, 0.5
        %v2537 = vmul.f32 %v2469, 0.5
        %v2538 = vmul.f32 %v2520, 0.5
        %v2539 = vmul.f32 %v2522, 0.5
        %v2540 = vmul.f32 %v2453, %v2453
        %v2541 = vmul.f32 %v2455, %v2455
        %v2542 = vmul.f32 %v2506, %v2506
        %v2543 = vmul.f32 %v2508, %v2508
        %v2544 = vmul.f32 %v2457, %v2457
        %v2545 = vmul.f32 %v2459, %v2459
        %v2546 = vmul.f32 %v2510, %v2510
        %v2547 = vmul.f32 %v2512, %v2512
        %v2548 = vmul.f32 %v2463, %v2463
        %v2549 = vmul.f32 %v2465, %v2465
        %v2550 = vmul.f32 %v2516, %v2516
        %v2551 = vmul.f32 %v2518, %v2518
        %v2552 = vmul.f32 %v2467, %v2467
        %v2553 = vmul.f32 %v2469, %v2469
        %v2554 = vmul.f32 %v2520, %v2520
        %v2555 = vmul.f32 %v2522, %v2522
        %v2556 = vmul.f32 %v2540, %v2453
        %v2557 = vmul.f32 %v2541, %v2455
        %v2558 = vmul.f32 %v2542, %v2506
        %v2559 = vmul.f32 %v2543, %v2508
        %v2560 = vmul.f32 %v2544, %v2457
        %v2561 = vmul.f32 %v2545, %v2459
        %v2562 = vmul.f32 %v2546, %v2510
        %v2563 = vmul.f32 %v2547, %v2512
        %v2564 = vmul.f32 %v2548, %v2463
        %v2565 = vmul.f32 %v2549, %v2465
        %v2566 = vmul.f32 %v2550, %v2516
        %v2567 = vmul.f32 %v2551, %v2518
        %v2568 = vmul.f32 %v2552, %v2467
        %v2569 = vmul.f32 %v2553, %v2469
        %v2570 = vmul.f32 %v2554, %v2520
        %v2571 = vmul.f32 %v2555, %v2522
        %v2572 = vadd.f32 %v2453, %v2556
        %v2573 = vadd.f32 %v2455, %v2557
        %v2574 = vadd.f32 %v2506, %v2558
        %v2575 = vadd.f32 %v2508, %v2559
        %v2576 = vadd.f32 %v2457, %v2560
        %v2577 = vadd.f32 %v2459, %v2561
        %v2578 = vadd.f32 %v2510, %v2562
        %v2579 = vadd.f32 %v2512, %v2563
        %v2580 = vadd.f32 %v2463, %v2564
        %v2581 = vadd.f32 %v2465, %v2565
        %v2582 = vadd.f32 %v2516, %v2566
        %v2583 = vadd.f32 %v2518, %v2567
        %v2584 = vadd.f32 %v2467, %v2568
        %v2585 = vadd.f32 %v2469, %v2569
        %v2586 = vadd.f32 %v2520, %v2570
        %v2587 = vadd.f32 %v2522, %v2571
        %v2588 = vmul.f32 %v2572, 0.7978846
        %v2589 = vmul.f32 %v2573, 0.7978846
        %v2590 = vmul.f32 %v2574, 0.7978846
        %v2591 = vmul.f32 %v2575, 0.7978846
        %v2592 = vmul.f32 %v2576, 0.7978846
        %v2593 = vmul.f32 %v2577, 0.7978846
        %v2594 = vmul.f32 %v2578, 0.7978846
        %v2595 = vmul.f32 %v2579, 0.7978846
        %v2596 = vmul.f32 %v2580, 0.7978846
        %v2597 = vmul.f32 %v2581, 0.7978846
        %v2598 = vmul.f32 %v2582, 0.7978846
        %v2599 = vmul.f32 %v2583, 0.7978846
        %v2600 = vmul.f32 %v2584, 0.7978846
        %v2601 = vmul.f32 %v2585, 0.7978846
        %v2602 = vmul.f32 %v2586, 0.7978846
        %v2603 = vmul.f32 %v2587, 0.7978846
        %v2604 = vtanh.pop %v2588
        %v2605 = vtanh.pop %v2589
        %v2606 = vtanh.pop %v2590
        %v2607 = vtanh.pop %v2591
        %v2608 = vtanh.pop %v2592
        %v2609 = vtanh.pop %v2593
        %v2610 = vtanh.pop %v2594
        %v2611 = vtanh.pop %v2595
        %v2612 = vtanh.pop %v2596
        %v2613 = vtanh.pop %v2597
        %v2614 = vtanh.pop %v2598
        %v2615 = vtanh.pop %v2599
        %v2616 = vtanh.pop %v2600
        %v2617 = vtanh.pop %v2601
        %v2618 = vtanh.pop %v2602
        %v2619 = vtanh.pop %v2603
        %v2620 = vadd.f32 %v2604, 1.0
        %v2621 = vadd.f32 %v2605, 1.0
        %v2622 = vadd.f32 %v2606, 1.0
        %v2623 = vadd.f32 %v2607, 1.0
        %v2624 = vadd.f32 %v2608, 1.0
        %v2625 = vadd.f32 %v2609, 1.0
        %v2626 = vadd.f32 %v2610, 1.0
        %v2627 = vadd.f32 %v2611, 1.0
        %v2628 = vadd.f32 %v2612, 1.0
        %v2629 = vadd.f32 %v2613, 1.0
        %v2630 = vadd.f32 %v2614, 1.0
        %v2631 = vadd.f32 %v2615, 1.0
        %v2632 = vadd.f32 %v2616, 1.0
        %v2633 = vadd.f32 %v2617, 1.0
        %v2634 = vadd.f32 %v2618, 1.0
        %v2635 = vadd.f32 %v2619, 1.0
        %v2636 = vmul.f32 %v2524, %v2620
        %v2637 = vmul.f32 %v2525, %v2621
        %v2638 = vmul.f32 %v2526, %v2622
        %v2639 = vmul.f32 %v2527, %v2623
        %v2640 = vmul.f32 %v2528, %v2624
        %v2641 = vmul.f32 %v2529, %v2625
        %v2642 = vmul.f32 %v2530, %v2626
        %v2643 = vmul.f32 %v2531, %v2627
        %v2644 = vmul.f32 %v2532, %v2628
        %v2645 = vmul.f32 %v2533, %v2629
        %v2646 = vmul.f32 %v2534, %v2630
        %v2647 = vmul.f32 %v2535, %v2631
        %v2648 = vmul.f32 %v2536, %v2632
        %v2649 = vmul.f32 %v2537, %v2633
        %v2650 = vmul.f32 %v2538, %v2634
        %v2651 = vmul.f32 %v2539, %v2635
        %v2652 = vpack.c.bf16 %v2640, %v2636
        %v2653 = vpack.c.bf16 %v2641, %v2637
        %v2654 = vpack.c.bf16 %v2642, %v2638
        %v2655 = vpack.c.bf16 %v2643, %v2639
        %v2656 = vpack.c.bf16 %v2648, %v2644
        %v2657 = vpack.c.bf16 %v2649, %v2645
        %v2658 = vpack.c.bf16 %v2650, %v2646
        %v2659 = vpack.c.bf16 %v2651, %v2647
        %v2660 = vld [vmem:[#allocation10] sm:$0xf]
        %v2661 = vld [vmem:[#allocation10 + $0x4] sm:$0xf]
        %v2662 = vld [vmem:[#allocation10 + $0x8] sm:$0xf]
        %v2663 = vld [vmem:[#allocation10 + $0xc] sm:$0xf]
        %v2664 = vld [vmem:[#allocation10 + $0x10] sm:$0xf]
        %v2665 = vld [vmem:[#allocation10 + $0x14] sm:$0xf]
        %v2666 = vld [vmem:[#allocation10 + $0x18] sm:$0xf]
        %v2667 = vld [vmem:[#allocation10 + $0x1c] sm:$0xf]
        %v2668 = vld [vmem:[#allocation10 + $0x20] sm:$0xf]
        %v2669 = vld [vmem:[#allocation10 + $0x24] sm:$0xf]
        %v2670 = vld [vmem:[#allocation10 + $0x28] sm:$0xf]
        %v2671 = vld [vmem:[#allocation10 + $0x2c] sm:$0xf]
        %v2672 = vld [vmem:[#allocation10 + $0x30] sm:$0xf]
        %v2673 = vld [vmem:[#allocation10 + $0x34] sm:$0xf]
        %v2674 = vld [vmem:[#allocation10 + $0x38] sm:$0xf]
        %v2675 = vld [vmem:[#allocation10 + $0x3c] sm:$0xf]
        %v2676 = vld [vmem:[#allocation10 + $0x40] sm:$0xf]
        %v2677 = vld [vmem:[#allocation10 + $0x44] sm:$0xf]
        %v2678 = vld [vmem:[#allocation10 + $0x48] sm:$0xf]
        %v2679 = vld [vmem:[#allocation10 + $0x4c] sm:$0xf]
        %v2680 = vld [vmem:[#allocation10 + $0x50] sm:$0xf]
        %v2681 = vld [vmem:[#allocation10 + $0x54] sm:$0xf]
        %v2682 = vld [vmem:[#allocation10 + $0x58] sm:$0xf]
        %v2683 = vld [vmem:[#allocation10 + $0x5c] sm:$0xf]
        %v2684 = vld [vmem:[#allocation10 + $0x60] sm:$0xf]
        %v2685 = vld [vmem:[#allocation10 + $0x64] sm:$0xf]
        %v2686 = vld [vmem:[#allocation10 + $0x68] sm:$0xf]
        %v2687 = vld [vmem:[#allocation10 + $0x6c] sm:$0xf]
        %v2688 = vld [vmem:[#allocation10 + $0x70] sm:$0xf]
        %v2689 = vld [vmem:[#allocation10 + $0x74] sm:$0xf]
        %v2690 = vld [vmem:[#allocation10 + $0x78] sm:$0xf]
        %v2691 = vld [vmem:[#allocation10 + $0x7c] sm:$0xf]
        %v2692 = vld [vmem:[#allocation10 + $0x80] sm:$0xf]
        %v2693 = vld [vmem:[#allocation10 + $0x84] sm:$0xf]
        %v2694 = vld [vmem:[#allocation10 + $0x88] sm:$0xf]
        %v2695 = vld [vmem:[#allocation10 + $0x8c] sm:$0xf]
        %v2696 = vld [vmem:[#allocation10 + $0x90] sm:$0xf]
        %v2697 = vld [vmem:[#allocation10 + $0x94] sm:$0xf]
        %v2698 = vld [vmem:[#allocation10 + $0x98] sm:$0xf]
        %v2699 = vld [vmem:[#allocation10 + $0x9c] sm:$0xf]
        %v2700 = vld [vmem:[#allocation10 + $0xa0] sm:$0xf]
        %v2701 = vld [vmem:[#allocation10 + $0xa4] sm:$0xf]
        %v2702 = vld [vmem:[#allocation10 + $0xa8] sm:$0xf]
        %v2703 = vld [vmem:[#allocation10 + $0xac] sm:$0xf]
        %v2704 = vld [vmem:[#allocation10 + $0xb0] sm:$0xf]
        %v2705 = vld [vmem:[#allocation10 + $0xb4] sm:$0xf]
        %v2706 = vld [vmem:[#allocation10 + $0xb8] sm:$0xf]
        %v2707 = vld [vmem:[#allocation10 + $0xbc] sm:$0xf]
        %v2708 = vld [vmem:[#allocation10 + $0xc0] sm:$0xf]
        %v2709 = vld [vmem:[#allocation10 + $0xc4] sm:$0xf]
        %v2710 = vld [vmem:[#allocation10 + $0xc8] sm:$0xf]
        %v2711 = vld [vmem:[#allocation10 + $0xcc] sm:$0xf]
        %v2712 = vld [vmem:[#allocation10 + $0xd0] sm:$0xf]
        %v2713 = vld [vmem:[#allocation10 + $0xd4] sm:$0xf]
        %v2714 = vld [vmem:[#allocation10 + $0xd8] sm:$0xf]
        %v2715 = vld [vmem:[#allocation10 + $0xdc] sm:$0xf]
        %v2716 = vld [vmem:[#allocation10 + $0xe0] sm:$0xf]
        %v2717 = vld [vmem:[#allocation10 + $0xe4] sm:$0xf]
        %v2718 = vld [vmem:[#allocation10 + $0xe8] sm:$0xf]
        %v2719 = vld [vmem:[#allocation10 + $0xec] sm:$0xf]
        %v2720 = vld [vmem:[#allocation10 + $0xf0] sm:$0xf]
        %v2721 = vld [vmem:[#allocation10 + $0xf4] sm:$0xf]
        %v2722 = vld [vmem:[#allocation10 + $0xf8] sm:$0xf]
        %v2723 = vld [vmem:[#allocation10 + $0xfc] sm:$0xf]
        %v2724 = vld [vmem:[%s11] sm:$0x1]
        %v2726 = vlaneseq
        %v2727 = vshrl.u32 %v2726, 7
        %v2728 = vsub.s32 0, %v2727
        %v2729 = vrot.slane %v2724, %v2728
        %v2795 = vunpack.c.l.b16 %v2660
        %v2796 = vunpack.c.l.b16 %v2661
        %v2797 = vunpack.c.l.b16 %v2662
        %v2798 = vunpack.c.l.b16 %v2663
        %v2799 = vunpack.c.l.b16 %v2664
        %v2800 = vunpack.c.l.b16 %v2665
        %v2801 = vunpack.c.l.b16 %v2666
        %v2802 = vunpack.c.l.b16 %v2667
        %v2803 = vunpack.c.l.b16 %v2668
        %v2804 = vunpack.c.l.b16 %v2669
        %v2805 = vunpack.c.l.b16 %v2670
        %v2806 = vunpack.c.l.b16 %v2671
        %v2807 = vunpack.c.l.b16 %v2672
        %v2808 = vunpack.c.l.b16 %v2673
        %v2809 = vunpack.c.l.b16 %v2674
        %v2810 = vunpack.c.l.b16 %v2675
        %v2811 = vunpack.c.l.b16 %v2676
        %v2812 = vunpack.c.l.b16 %v2677
        %v2813 = vunpack.c.l.b16 %v2678
        %v2814 = vunpack.c.l.b16 %v2679
        %v2815 = vunpack.c.l.b16 %v2680
        %v2816 = vunpack.c.l.b16 %v2681
        %v2817 = vunpack.c.l.b16 %v2682
        %v2818 = vunpack.c.l.b16 %v2683
        %v2819 = vunpack.c.l.b16 %v2684
        %v2820 = vunpack.c.l.b16 %v2685
        %v2821 = vunpack.c.l.b16 %v2686
        %v2822 = vunpack.c.l.b16 %v2687
        %v2823 = vunpack.c.l.b16 %v2688
        %v2824 = vunpack.c.l.b16 %v2689
        %v2825 = vunpack.c.l.b16 %v2690
        %v2826 = vunpack.c.l.b16 %v2691
        %v2827 = vunpack.c.l.b16 %v2692
        %v2828 = vunpack.c.l.b16 %v2693
        %v2829 = vunpack.c.l.b16 %v2694
        %v2830 = vunpack.c.l.b16 %v2695
        %v2831 = vunpack.c.l.b16 %v2696
        %v2832 = vunpack.c.l.b16 %v2697
        %v2833 = vunpack.c.l.b16 %v2698
        %v2834 = vunpack.c.l.b16 %v2699
        %v2835 = vunpack.c.l.b16 %v2700
        %v2836 = vunpack.c.l.b16 %v2701
        %v2837 = vunpack.c.l.b16 %v2702
        %v2838 = vunpack.c.l.b16 %v2703
        %v2839 = vunpack.c.l.b16 %v2704
        %v2840 = vunpack.c.l.b16 %v2705
        %v2841 = vunpack.c.l.b16 %v2706
        %v2842 = vunpack.c.l.b16 %v2707
        %v2843 = vunpack.c.l.b16 %v2708
        %v2844 = vunpack.c.l.b16 %v2709
        %v2845 = vunpack.c.l.b16 %v2710
        %v2846 = vunpack.c.l.b16 %v2711
        %v2847 = vunpack.c.l.b16 %v2712
        %v2848 = vunpack.c.l.b16 %v2713
        %v2849 = vunpack.c.l.b16 %v2714
        %v2850 = vunpack.c.l.b16 %v2715
        %v2851 = vunpack.c.l.b16 %v2716
        %v2852 = vunpack.c.l.b16 %v2717
        %v2853 = vunpack.c.l.b16 %v2718
        %v2854 = vunpack.c.l.b16 %v2719
        %v2855 = vunpack.c.l.b16 %v2720
        %v2856 = vunpack.c.l.b16 %v2721
        %v2857 = vunpack.c.l.b16 %v2722
        %v2858 = vunpack.c.l.b16 %v2723
        %v2859 = vpack.c.b16 %v2796, %v2795
        %v2860 = vpack.c.b16 %v2798, %v2797
        %v2861 = vpack.c.b16 %v2800, %v2799
        %v2862 = vpack.c.b16 %v2802, %v2801
        %v2863 = vpack.c.b16 %v2804, %v2803
        %v2864 = vpack.c.b16 %v2806, %v2805
        %v2865 = vpack.c.b16 %v2808, %v2807
        %v2866 = vpack.c.b16 %v2810, %v2809
        %v2867 = vpack.c.b16 %v2812, %v2811
        %v2868 = vpack.c.b16 %v2814, %v2813
        %v2869 = vpack.c.b16 %v2816, %v2815
        %v2870 = vpack.c.b16 %v2818, %v2817
        %v2871 = vpack.c.b16 %v2820, %v2819
        %v2872 = vpack.c.b16 %v2822, %v2821
        %v2873 = vpack.c.b16 %v2824, %v2823
        %v2874 = vpack.c.b16 %v2826, %v2825
        %v2875 = vpack.c.b16 %v2828, %v2827
        %v2876 = vpack.c.b16 %v2830, %v2829
        %v2877 = vpack.c.b16 %v2832, %v2831
        %v2878 = vpack.c.b16 %v2834, %v2833
        %v2879 = vpack.c.b16 %v2836, %v2835
        %v2880 = vpack.c.b16 %v2838, %v2837
        %v2881 = vpack.c.b16 %v2840, %v2839
        %v2882 = vpack.c.b16 %v2842, %v2841
        %v2883 = vpack.c.b16 %v2844, %v2843
        %v2884 = vpack.c.b16 %v2846, %v2845
        %v2885 = vpack.c.b16 %v2848, %v2847
        %v2886 = vpack.c.b16 %v2850, %v2849
        %v2887 = vpack.c.b16 %v2852, %v2851
        %v2888 = vpack.c.b16 %v2854, %v2853
        %v2889 = vpack.c.b16 %v2856, %v2855
        %v2890 = vpack.c.b16 %v2858, %v2857
        %2923 = vmatprep.subr.bf16.mxu0 0
        %2924 = vmatpush1.bf16.msra.mxu0 %v2859
        %2925 = vmatprep.subr.bf16.mxu0 0
        %2926 = vmatpush1.bf16.msra.mxu0 %v2860
        %2927 = vmatprep.subr.bf16.mxu0 0
        %2928 = vmatpush1.bf16.msra.mxu0 %v2861
        %2929 = vmatprep.subr.bf16.mxu0 0
        %2930 = vmatpush1.bf16.msra.mxu0 %v2862
        %2931 = vmatprep.subr.bf16.mxu0 0
        %2932 = vmatpush1.bf16.msra.mxu0 %v2863
        %2933 = vmatprep.subr.bf16.mxu0 0
        %2934 = vmatpush1.bf16.msra.mxu0 %v2864
        %2935 = vmatprep.subr.bf16.mxu0 0
        %2936 = vmatpush1.bf16.msra.mxu0 %v2865
        %2937 = vmatprep.subr.bf16.mxu0 0
        %2938 = vmatpush1.bf16.msra.mxu0 %v2866
        %2939 = vmatprep.subr.bf16.mxu0 0
        %2940 = vmatpush1.bf16.msra.mxu0 %v2867
        %2941 = vmatprep.subr.bf16.mxu0 0
        %2942 = vmatpush1.bf16.msra.mxu0 %v2868
        %2943 = vmatprep.subr.bf16.mxu0 0
        %2944 = vmatpush1.bf16.msra.mxu0 %v2869
        %2945 = vmatprep.subr.bf16.mxu0 0
        %2946 = vmatpush1.bf16.msra.mxu0 %v2870
        %2947 = vmatprep.subr.bf16.mxu0 0
        %2948 = vmatpush1.bf16.msra.mxu0 %v2871
        %2949 = vmatprep.subr.bf16.mxu0 0
        %2950 = vmatpush1.bf16.msra.mxu0 %v2872
        %2951 = vmatprep.subr.bf16.mxu0 0
        %2952 = vmatpush1.bf16.msra.mxu0 %v2873
        %2953 = vmatprep.subr.bf16.mxu0 0
        %2954 = vmatpush1.bf16.msra.mxu0 %v2874
        %2955 = vmatprep.mubr.bf16.mxu0 %v2653
        %2956 = vmatmul.mubr.bf16.gmra.mrb[0].mxu0 %v2652
        %v2957 = vpop.f32.mrb[0].mxu0
        %v2958 = vadd.f32 %v2729, %v2957
        %v2959 = vpop.f32.mrb[0].mxu0
        %v2960 = vpop.f32.mrb[0].mxu0
        %v2961 = vadd.f32 %v2729, %v2960
        %v2962 = vpop.f32.mrb[0].mxu0
        %2963 = vmatprep.mubr.bf16.mxu0 %v2657
        %2964 = vmatmul.mubr.bf16.gmra.mrb[0].mxu0 %v2656
        %v2965 = vpop.f32.mrb[0].mxu0
        %v2966 = vadd.f32 %v2729, %v2965
        %v2967 = vpop.f32.mrb[0].mxu0
        %v2968 = vpop.f32.mrb[0].mxu0
        %v2969 = vadd.f32 %v2729, %v2968
        %v2970 = vpop.f32.mrb[0].mxu0
        %2971 = vdwg.mxu0
        %2972 = vmatprep.subr.bf16.mxu0 0
        %2973 = vmatpush1.bf16.msra.mxu0 %v2875
        %2974 = vmatprep.subr.bf16.mxu0 0
        %2975 = vmatpush1.bf16.msra.mxu0 %v2876
        %2976 = vmatprep.subr.bf16.mxu0 0
        %2977 = vmatpush1.bf16.msra.mxu0 %v2877
        %2978 = vmatprep.subr.bf16.mxu0 0
        %2979 = vmatpush1.bf16.msra.mxu0 %v2878
        %2980 = vmatprep.subr.bf16.mxu0 0
        %2981 = vmatpush1.bf16.msra.mxu0 %v2879
        %2982 = vmatprep.subr.bf16.mxu0 0
        %2983 = vmatpush1.bf16.msra.mxu0 %v2880
        %2984 = vmatprep.subr.bf16.mxu0 0
        %2985 = vmatpush1.bf16.msra.mxu0 %v2881
        %2986 = vmatprep.subr.bf16.mxu0 0
        %2987 = vmatpush1.bf16.msra.mxu0 %v2882
        %2988 = vmatprep.subr.bf16.mxu0 0
        %2989 = vmatpush1.bf16.msra.mxu0 %v2883
        %2990 = vmatprep.subr.bf16.mxu0 0
        %2991 = vmatpush1.bf16.msra.mxu0 %v2884
        %2992 = vmatprep.subr.bf16.mxu0 0
        %2993 = vmatpush1.bf16.msra.mxu0 %v2885
        %2994 = vmatprep.subr.bf16.mxu0 0
        %2995 = vmatpush1.bf16.msra.mxu0 %v2886
        %2996 = vmatprep.subr.bf16.mxu0 0
        %2997 = vmatpush1.bf16.msra.mxu0 %v2887
        %2998 = vmatprep.subr.bf16.mxu0 0
        %2999 = vmatpush1.bf16.msra.mxu0 %v2888
        %3000 = vmatprep.subr.bf16.mxu0 0
        %3001 = vmatpush1.bf16.msra.mxu0 %v2889
        %3002 = vmatprep.subr.bf16.mxu0 0
        %3003 = vmatpush1.bf16.msra.mxu0 %v2890
        %3004 = vmatprep.mubr.bf16.mxu0 %v2655
        %3005 = vmatmul.mubr.bf16.gmra.mrb[0].mxu0 %v2654
        %v3006 = vpop.f32.mrb[0].mxu0
        %v3007 = vadd.f32 %v2958, %v3006
        %v3008 = vpop.f32.mrb[0].mxu0
        %v3009 = vpop.f32.mrb[0].mxu0
        %v3010 = vadd.f32 %v2961, %v3009
        %v3011 = vpop.f32.mrb[0].mxu0
        %3012 = vmatprep.mubr.bf16.mxu0 %v2659
        %3013 = vmatmul.mubr.bf16.gmra.mrb[0].mxu0 %v2658
        %v3014 = vpop.f32.mrb[0].mxu0
        %v3015 = vadd.f32 %v2966, %v3014
        %v3016 = vpop.f32.mrb[0].mxu0
        %v3017 = vpop.f32.mrb[0].mxu0
        %v3018 = vadd.f32 %v2969, %v3017
        %v3019 = vpop.f32.mrb[0].mxu0
        %3020 = vdwg.mxu0
        %v3021 = vadd.f32 %v2104, %v3007
        %v3022 = vadd.f32 %v2105, %v3010
        %v3023 = vadd.f32 %v2106, %v3015
        %v3024 = vadd.f32 %v2107, %v3018
        %3025 = vst [vmem:[%s490] sm:$0xff] %v3021
        %3026 = vst [vmem:[%s490 + $0x8] sm:$0xff] %v3022
        %3027 = vst [vmem:[%s490 + $0x10] sm:$0xff] %v3023
        %3028 = vst [vmem:[%s490 + $0x18] sm:$0xff] %v3024
        %s3029 = sand.u32 %s296, 1
        %s3030 = scalar_lea.sflag [#allocation4], %s3029
        %s3031 = sand.u32 %s296, 1
        %s3032 = smul.addr %s3031, 32
        %s3033 = scalar_lea.vmem [#allocation11], %s3032
        // Predicated region
        $region89: #{tpu_custom_call.1} parent=67 // pred_check
          %p3034 = pneg %p306
        $region90: #{tpu_custom_call.1} parent=67 // pred_check_branch
          %3036 = sbr.rel (%p3034) target = $region92
        $region91: #{tpu_custom_call.1} parent=67 // pred_region
          %s3037 = smul.u32 2, %s31
          %s3039 = ssub.s32 512, 512
          %3040 = vsyncadd %s3030, %s3039
          %s3041 = smul.addr %s3037, 2
          %s3042 = smul.addr %s3041, 128
          %s3043 = scalar_lea.hbm %s12, %s3042
          %s3044 = sshll.u32 %s3033, 4
          %s3045 = int_to_ptr.vmem [resolvable:$true] %s3044
          %3050 = dma.vmem_to_hbm [thread:$0]  %s3045, 512, %s3043, %s3030, 128, 128, 8
        $region92: #{tpu_custom_call.1} parent=67 // pred_fallthru
          _
      $region68: #{tpu_custom_call.1} parent=5 // pred_fallthru
        _
      %p3051 = scmp.le.s32.totalorder 2, %s26
      // Predicated region
      $region93: #{tpu_custom_call.1} parent=5 // pred_check
        %p3052 = pneg %p3051
      $region94: #{tpu_custom_call.1} parent=5 // pred_check_branch
        %3054 = sbr.rel (%p3052) target = $region96
      $region95: #{tpu_custom_call.1} parent=5 // pred_region
        %s3055 = ssub.s32 %s26, 2
        // Predicated region
        $region97: #{tpu_custom_call.1} parent=95 // pred_check
          %p3056 = pneg %p312
        $region98: #{tpu_custom_call.1} parent=95 // pred_check_branch
          %3058 = sbr.rel (%p3056) target = $region100
        $region99: #{tpu_custom_call.1} parent=95 // pred_region
          %s3059 = sand.u32 %s297, 1
          %s3060 = scalar_lea.sflag [#allocation4], %s3059
          %s3061 = sand.u32 %s297, 1
          %s3062 = smul.addr %s3061, 32
          %s3063 = scalar_lea.vmem [#allocation11], %s3062
          %3064 = dma.done %s3060, 512
        $region100: #{tpu_custom_call.1} parent=95 // pred_fallthru
          _
      $region96: #{tpu_custom_call.1} parent=5 // pred_fallthru
        _
    $region6: #{tpu_custom_call.1} parent=1 // loop_footer
      %s30 = sadd.s32 1, %s26
    $region7: #{tpu_custom_call.1} parent=1 // loop_footer_branch
      %25 = sbr.rel target = $region3
    $region8: #{tpu_custom_call.1} parent=1 // loop_exit
      _
    %3065 = vsyncpa [#allocation3], 1
    %s3066 = scalar_lea.sflag [#allocation3], 1
    %3067 = vsyncpa %s3066, 1
    %3068 = vsyncpa [#allocation6], 1
    %3069 = vsyncpa [#allocation9], 1
    %3070 = vsyncpa [#allocation4], 1
    %s3071 = scalar_lea.sflag [#allocation4], 1
    %3072 = vsyncpa %s3071, 1

</llo_original>
